<compile_context>
chip_gen: v7x
topology: tpu7x:2x2x1
jax: 0.10.0
libtpu: 0.0.40
codegen_flags: <defaults>
</compile_context>

<pallas_src>
import functools

import numpy as np
import jax
import jax.numpy as jnp
from jax.experimental import pallas as pl
from jax.experimental.pallas import tpu as pltpu


def _embedding_kernel(x_ref, w_ref, fmap_ref, len_ref, *, padding_idx, permuting):
    ids = x_ref[...]                      # (bN, L) int32 token ids (VMEM)
    w = w_ref[...]                        # (V, C)  embedding table (VMEM-resident)
    bN, L = ids.shape
    V, C = w.shape

    # length tracking: count non-pad tokens per row (lane-axis reduction).
    len_ref[...] = jnp.sum((ids != padding_idx).astype(jnp.int32),
                           axis=1, keepdims=True)                    # (bN, 1)

    # Exact embedding lookup as one-hot x table on the MXU.
    wt = w.T                                                          # (C, V), hoisted once per step
    iota_vl = jax.lax.broadcasted_iota(jnp.int32, (V, L), 0)          # vocab ids down sublanes

    for b in range(bN):                                               # small static unroll
        row = ids[b:b + 1, :]                                         # (1, L)
        onehot = (row == iota_vl).astype(w.dtype)                     # (V, L) exact 0/1
        emb_cl = jnp.dot(wt, onehot,
                         preferred_element_type=jnp.float32,
                         precision=jax.lax.Precision.HIGHEST)         # (C, L)
        if permuting:
            fmap_ref[b] = emb_cl.astype(fmap_ref.dtype)               # (C, L) lane-dense store
        else:
            fmap_ref[b] = emb_cl.T.astype(fmap_ref.dtype)             # (L, C) lane-dense store


def embedding_forward(x, weight, *, padding_idx=1, permuting=True,
                      tracking=True, block_n=None):
    """JAX/Pallas equivalent of Embedding.forward.

    Args:
      x:      (N, L) int32 token ids.
      weight: (V, C) embedding table (row `padding_idx` zeroed, as nn.Embedding).
    Returns:
      (fmap, length) if tracking else fmap;
      fmap is (N, C, L) if permuting else (N, L, C); length is (N,) int32.
    """
    N, L = x.shape
    V, C = weight.shape

    if block_n is None:
        block_n = N if N <= 8 else 8
    if N % block_n != 0:                  # keep blocks exact for the small demo
        block_n = N
    grid = (N // block_n,)

    if permuting:
        fmap_shape, fmap_block = (N, C, L), (block_n, C, L)
    else:
        fmap_shape, fmap_block = (N, L, C), (block_n, L, C)

    kernel = functools.partial(_embedding_kernel,
                               padding_idx=padding_idx, permuting=permuting)

    fmap, lengths = pl.pallas_call(
        kernel,
        out_shape=(
            jax.ShapeDtypeStruct(fmap_shape, weight.dtype),
            jax.ShapeDtypeStruct((N, 1), jnp.int32),
        ),
        grid=grid,
        in_specs=[
            pl.BlockSpec((block_n, L), lambda i: (i, 0)),   # token-id block
            pl.BlockSpec((V, C), lambda i: (0, 0)),         # table: resident, fetched once
        ],
        out_specs=(
            pl.BlockSpec(fmap_block, lambda i: (i, 0, 0)),
            pl.BlockSpec((block_n, 1), lambda i: (i, 0)),
        ),
        compiler_params=pltpu.CompilerParams(
            dimension_semantics=("parallel",),              # batch blocks independent (v7x 2 TCs)
        ),
    )(x.astype(jnp.int32), weight)

    if tracking:
        return fmap, lengths[:, 0]
    return fmap


if __name__ == "__main__":
    key = jax.random.PRNGKey(0)
    k_tok, k_len, k_w = jax.random.split(key, 3)

    N, L, V, C = 16, 16, 64, 32           # batch, seq, vocab, embedding dim
    padding_idx = 1

    # Token ids in [2, V), right-padded with padding_idx per row.
    tokens = jax.random.randint(k_tok, (N, L), 2, V, dtype=jnp.int32)
    true_len = jax.random.randint(k_len, (N,), 3, L + 1, dtype=jnp.int32)
    pos = jnp.arange(L, dtype=jnp.int32)[None, :]
    x = jnp.where(pos < true_len[:, None], tokens, padding_idx)

    # nn.Embedding weight with the padding row zeroed.
    weight = jax.random.normal(k_w, (V, C), dtype=jnp.float32)
    weight = weight.at[padding_idx].set(0.0)

    # Default module config: permuting=True, tracking=True.
    fmap, length = embedding_forward(x, weight, padding_idx=padding_idx,
                                     permuting=True, tracking=True)
    jax.block_until_ready((fmap, length))

    # Pure numpy reference of Embedding.forward.
    x_np = np.asarray(x)
    w_np = np.asarray(weight)
    ref_fmap = np.take(w_np, x_np, axis=0).transpose(0, 2, 1)    # (N, C, L)
    ref_len = (x_np != padding_idx).sum(axis=1).astype(np.int32)

    assert fmap.shape == ref_fmap.shape, (fmap.shape, ref_fmap.shape)
    np.testing.assert_allclose(np.asarray(fmap), ref_fmap, rtol=1e-5, atol=1e-5)
    np.testing.assert_array_equal(np.asarray(length), ref_len)

    # Non-permuting path (returns (N, L, C)).
    fmap_nlc = embedding_forward(x, weight, padding_idx=padding_idx,
                                 permuting=False, tracking=False)
    jax.block_until_ready(fmap_nlc)
    np.testing.assert_allclose(np.asarray(fmap_nlc),
                               np.take(w_np, x_np, axis=0), rtol=1e-5, atol=1e-5)

    print("KERNEL_OK")
</pallas_src>

<mosaic_0001>
module attributes {stable_mosaic.version = 11 : i64} {
  func.func @_embedding_kernel(%arg0: i32, %arg1: memref<8x16xi32, #tpu.memory_space<vmem>>, %arg2: memref<64x32xf32, #tpu.memory_space<vmem>>, %arg3: memref<8x32x16xf32, #tpu.memory_space<vmem>>, %arg4: memref<8x1xi32, #tpu.memory_space<vmem>>) attributes {dimension_semantics = [#tpu.dimension_semantics<parallel>], iteration_bounds = array<i64: 2>, scalar_prefetch = 0 : i64, scratch_operands = 0 : i64, tpu.core_type = #tpu.core_type<tc>, window_params = [{transform_indices = @transform_0, window_bounds = array<i64: 8, 16>}, {pipeline_mode = #tpu.pipeline_mode<synchronous>, transform_indices = @transform_1, window_bounds = array<i64: 64, 32>}, {transform_indices = @transform_2, window_bounds = array<i64: 8, 32, 16>}, {transform_indices = @transform_3, window_bounds = array<i64: 8, 1>}]} {
    %c0 = arith.constant 0 : index
    %c0_0 = arith.constant 0 : index
    %0 = vector.load %arg1[%c0, %c0_0] : memref<8x16xi32, #tpu.memory_space<vmem>>, vector<8x16xi32>
    %c0_1 = arith.constant 0 : index
    %c0_2 = arith.constant 0 : index
    %1 = vector.load %arg2[%c0_1, %c0_2] : memref<64x32xf32, #tpu.memory_space<vmem>>, vector<64x32xf32>
    %c1_i32 = arith.constant 1 : i32
    %2 = vector.broadcast %c1_i32 : i32 to vector<8x16xi32>
    %3 = arith.cmpi ne, %0, %2 : vector<8x16xi32>
    %4 = arith.extui %3 : vector<8x16xi1> to vector<8x16xi32>
    %cst = arith.constant dense<0> : vector<8xi32>
    %5 = vector.multi_reduction <add>, %4, %cst [1] : vector<8x16xi32> to vector<8xi32>
    %6 = vector.shape_cast %5 : vector<8xi32> to vector<8x1xi32>
    %c0_3 = arith.constant 0 : index
    %c0_4 = arith.constant 0 : index
    %7 = vector.load %arg4[%c0_3, %c0_4] : memref<8x1xi32, #tpu.memory_space<vmem>>, vector<8x1xi32>
    tpu.vector_store %arg4[%c0_3, %c0_4], %6 {strides = array<i32>} : memref<8x1xi32, #tpu.memory_space<vmem>>, vector<8x1xi32>,
    %8 = tpu.transpose %1, [1, 0] : vector<64x32xf32> -> vector<32x64xf32>
    %9 = tpu.iota {dimensions = array<i32: 0>} : vector<64x16xi32>
    %10 = vector.extract_strided_slice %0 {offsets = [0, 0], sizes = [1, 16], strides = [1, 1]} : vector<8x16xi32> to vector<1x16xi32>
    %11 = vector.broadcast %10 : vector<1x16xi32> to vector<64x16xi32>
    %12 = arith.cmpi eq, %11, %9 : vector<64x16xi32>
    %13 = arith.extui %12 : vector<64x16xi1> to vector<64x16xi32>
    %14 = arith.sitofp %13 : vector<64x16xi32> to vector<64x16xf32>
    %cst_5 = arith.constant dense<0.000000e+00> : vector<32x16xf32>
    %15 = tpu.matmul %8, %14, %cst_5 {dimension_numbers = #tpu.dot_dimension_numbers<[1], [0], [0], [1], [0, 0, 1, 1], [], []>, precision = #tpu.contract_precision<fp32>} : vector<32x64xf32>, vector<64x16xf32>, vector<32x16xf32> -> vector<32x16xf32>
    %c0_6 = arith.constant 0 : index
    %c0_7 = arith.constant 0 : index
    %c0_8 = arith.constant 0 : index
    %16 = vector.load %arg3[%c0_6, %c0_7, %c0_8] : memref<8x32x16xf32, #tpu.memory_space<vmem>>, vector<1x32x16xf32>
    %17 = vector.shape_cast %16 : vector<1x32x16xf32> to vector<32x16xf32>
    %18 = vector.shape_cast %15 : vector<32x16xf32> to vector<1x32x16xf32>
    tpu.vector_store %arg3[%c0_6, %c0_7, %c0_8], %18 {strides = array<i32>} : memref<8x32x16xf32, #tpu.memory_space<vmem>>, vector<1x32x16xf32>,
    %19 = vector.extract_strided_slice %0 {offsets = [1, 0], sizes = [1, 16], strides = [1, 1]} : vector<8x16xi32> to vector<1x16xi32>
    %20 = vector.broadcast %19 : vector<1x16xi32> to vector<64x16xi32>
    %21 = arith.cmpi eq, %20, %9 : vector<64x16xi32>
    %22 = arith.extui %21 : vector<64x16xi1> to vector<64x16xi32>
    %23 = arith.sitofp %22 : vector<64x16xi32> to vector<64x16xf32>
    %cst_9 = arith.constant dense<0.000000e+00> : vector<32x16xf32>
    %24 = tpu.matmul %8, %23, %cst_9 {dimension_numbers = #tpu.dot_dimension_numbers<[1], [0], [0], [1], [0, 0, 1, 1], [], []>, precision = #tpu.contract_precision<fp32>} : vector<32x64xf32>, vector<64x16xf32>, vector<32x16xf32> -> vector<32x16xf32>
    %c1 = arith.constant 1 : index
    %c0_10 = arith.constant 0 : index
    %c0_11 = arith.constant 0 : index
    %25 = vector.load %arg3[%c1, %c0_10, %c0_11] : memref<8x32x16xf32, #tpu.memory_space<vmem>>, vector<1x32x16xf32>
    %26 = vector.shape_cast %25 : vector<1x32x16xf32> to vector<32x16xf32>
    %27 = vector.shape_cast %24 : vector<32x16xf32> to vector<1x32x16xf32>
    tpu.vector_store %arg3[%c1, %c0_10, %c0_11], %27 {strides = array<i32>} : memref<8x32x16xf32, #tpu.memory_space<vmem>>, vector<1x32x16xf32>,
    %28 = vector.extract_strided_slice %0 {offsets = [2, 0], sizes = [1, 16], strides = [1, 1]} : vector<8x16xi32> to vector<1x16xi32>
    %29 = vector.broadcast %28 : vector<1x16xi32> to vector<64x16xi32>
    %30 = arith.cmpi eq, %29, %9 : vector<64x16xi32>
    %31 = arith.extui %30 : vector<64x16xi1> to vector<64x16xi32>
    %32 = arith.sitofp %31 : vector<64x16xi32> to vector<64x16xf32>
    %cst_12 = arith.constant dense<0.000000e+00> : vector<32x16xf32>
    %33 = tpu.matmul %8, %32, %cst_12 {dimension_numbers = #tpu.dot_dimension_numbers<[1], [0], [0], [1], [0, 0, 1, 1], [], []>, precision = #tpu.contract_precision<fp32>} : vector<32x64xf32>, vector<64x16xf32>, vector<32x16xf32> -> vector<32x16xf32>
    %c2 = arith.constant 2 : index
    %c0_13 = arith.constant 0 : index
    %c0_14 = arith.constant 0 : index
    %34 = vector.load %arg3[%c2, %c0_13, %c0_14] : memref<8x32x16xf32, #tpu.memory_space<vmem>>, vector<1x32x16xf32>
    %35 = vector.shape_cast %34 : vector<1x32x16xf32> to vector<32x16xf32>
    %36 = vector.shape_cast %33 : vector<32x16xf32> to vector<1x32x16xf32>
    tpu.vector_store %arg3[%c2, %c0_13, %c0_14], %36 {strides = array<i32>} : memref<8x32x16xf32, #tpu.memory_space<vmem>>, vector<1x32x16xf32>,
    %37 = vector.extract_strided_slice %0 {offsets = [3, 0], sizes = [1, 16], strides = [1, 1]} : vector<8x16xi32> to vector<1x16xi32>
    %38 = vector.broadcast %37 : vector<1x16xi32> to vector<64x16xi32>
    %39 = arith.cmpi eq, %38, %9 : vector<64x16xi32>
    %40 = arith.extui %39 : vector<64x16xi1> to vector<64x16xi32>
    %41 = arith.sitofp %40 : vector<64x16xi32> to vector<64x16xf32>
    %cst_15 = arith.constant dense<0.000000e+00> : vector<32x16xf32>
    %42 = tpu.matmul %8, %41, %cst_15 {dimension_numbers = #tpu.dot_dimension_numbers<[1], [0], [0], [1], [0, 0, 1, 1], [], []>, precision = #tpu.contract_precision<fp32>} : vector<32x64xf32>, vector<64x16xf32>, vector<32x16xf32> -> vector<32x16xf32>
    %c3 = arith.constant 3 : index
    %c0_16 = arith.constant 0 : index
    %c0_17 = arith.constant 0 : index
    %43 = vector.load %arg3[%c3, %c0_16, %c0_17] : memref<8x32x16xf32, #tpu.memory_space<vmem>>, vector<1x32x16xf32>
    %44 = vector.shape_cast %43 : vector<1x32x16xf32> to vector<32x16xf32>
    %45 = vector.shape_cast %42 : vector<32x16xf32> to vector<1x32x16xf32>
    tpu.vector_store %arg3[%c3, %c0_16, %c0_17], %45 {strides = array<i32>} : memref<8x32x16xf32, #tpu.memory_space<vmem>>, vector<1x32x16xf32>,
    %46 = vector.extract_strided_slice %0 {offsets = [4, 0], sizes = [1, 16], strides = [1, 1]} : vector<8x16xi32> to vector<1x16xi32>
    %47 = vector.broadcast %46 : vector<1x16xi32> to vector<64x16xi32>
    %48 = arith.cmpi eq, %47, %9 : vector<64x16xi32>
    %49 = arith.extui %48 : vector<64x16xi1> to vector<64x16xi32>
    %50 = arith.sitofp %49 : vector<64x16xi32> to vector<64x16xf32>
    %cst_18 = arith.constant dense<0.000000e+00> : vector<32x16xf32>
    %51 = tpu.matmul %8, %50, %cst_18 {dimension_numbers = #tpu.dot_dimension_numbers<[1], [0], [0], [1], [0, 0, 1, 1], [], []>, precision = #tpu.contract_precision<fp32>} : vector<32x64xf32>, vector<64x16xf32>, vector<32x16xf32> -> vector<32x16xf32>
    %c4 = arith.constant 4 : index
    %c0_19 = arith.constant 0 : index
    %c0_20 = arith.constant 0 : index
    %52 = vector.load %arg3[%c4, %c0_19, %c0_20] : memref<8x32x16xf32, #tpu.memory_space<vmem>>, vector<1x32x16xf32>
    %53 = vector.shape_cast %52 : vector<1x32x16xf32> to vector<32x16xf32>
    %54 = vector.shape_cast %51 : vector<32x16xf32> to vector<1x32x16xf32>
    tpu.vector_store %arg3[%c4, %c0_19, %c0_20], %54 {strides = array<i32>} : memref<8x32x16xf32, #tpu.memory_space<vmem>>, vector<1x32x16xf32>,
    %55 = vector.extract_strided_slice %0 {offsets = [5, 0], sizes = [1, 16], strides = [1, 1]} : vector<8x16xi32> to vector<1x16xi32>
    %56 = vector.broadcast %55 : vector<1x16xi32> to vector<64x16xi32>
    %57 = arith.cmpi eq, %56, %9 : vector<64x16xi32>
    %58 = arith.extui %57 : vector<64x16xi1> to vector<64x16xi32>
    %59 = arith.sitofp %58 : vector<64x16xi32> to vector<64x16xf32>
    %cst_21 = arith.constant dense<0.000000e+00> : vector<32x16xf32>
    %60 = tpu.matmul %8, %59, %cst_21 {dimension_numbers = #tpu.dot_dimension_numbers<[1], [0], [0], [1], [0, 0, 1, 1], [], []>, precision = #tpu.contract_precision<fp32>} : vector<32x64xf32>, vector<64x16xf32>, vector<32x16xf32> -> vector<32x16xf32>
    %c5 = arith.constant 5 : index
    %c0_22 = arith.constant 0 : index
    %c0_23 = arith.constant 0 : index
    %61 = vector.load %arg3[%c5, %c0_22, %c0_23] : memref<8x32x16xf32, #tpu.memory_space<vmem>>, vector<1x32x16xf32>
    %62 = vector.shape_cast %61 : vector<1x32x16xf32> to vector<32x16xf32>
    %63 = vector.shape_cast %60 : vector<32x16xf32> to vector<1x32x16xf32>
    tpu.vector_store %arg3[%c5, %c0_22, %c0_23], %63 {strides = array<i32>} : memref<8x32x16xf32, #tpu.memory_space<vmem>>, vector<1x32x16xf32>,
    %64 = vector.extract_strided_slice %0 {offsets = [6, 0], sizes = [1, 16], strides = [1, 1]} : vector<8x16xi32> to vector<1x16xi32>
    %65 = vector.broadcast %64 : vector<1x16xi32> to vector<64x16xi32>
    %66 = arith.cmpi eq, %65, %9 : vector<64x16xi32>
    %67 = arith.extui %66 : vector<64x16xi1> to vector<64x16xi32>
    %68 = arith.sitofp %67 : vector<64x16xi32> to vector<64x16xf32>
    %cst_24 = arith.constant dense<0.000000e+00> : vector<32x16xf32>
    %69 = tpu.matmul %8, %68, %cst_24 {dimension_numbers = #tpu.dot_dimension_numbers<[1], [0], [0], [1], [0, 0, 1, 1], [], []>, precision = #tpu.contract_precision<fp32>} : vector<32x64xf32>, vector<64x16xf32>, vector<32x16xf32> -> vector<32x16xf32>
    %c6 = arith.constant 6 : index
    %c0_25 = arith.constant 0 : index
    %c0_26 = arith.constant 0 : index
    %70 = vector.load %arg3[%c6, %c0_25, %c0_26] : memref<8x32x16xf32, #tpu.memory_space<vmem>>, vector<1x32x16xf32>
    %71 = vector.shape_cast %70 : vector<1x32x16xf32> to vector<32x16xf32>
    %72 = vector.shape_cast %69 : vector<32x16xf32> to vector<1x32x16xf32>
    tpu.vector_store %arg3[%c6, %c0_25, %c0_26], %72 {strides = array<i32>} : memref<8x32x16xf32, #tpu.memory_space<vmem>>, vector<1x32x16xf32>,
    %73 = vector.extract_strided_slice %0 {offsets = [7, 0], sizes = [1, 16], strides = [1, 1]} : vector<8x16xi32> to vector<1x16xi32>
    %74 = vector.broadcast %73 : vector<1x16xi32> to vector<64x16xi32>
    %75 = arith.cmpi eq, %74, %9 : vector<64x16xi32>
    %76 = arith.extui %75 : vector<64x16xi1> to vector<64x16xi32>
    %77 = arith.sitofp %76 : vector<64x16xi32> to vector<64x16xf32>
    %cst_27 = arith.constant dense<0.000000e+00> : vector<32x16xf32>
    %78 = tpu.matmul %8, %77, %cst_27 {dimension_numbers = #tpu.dot_dimension_numbers<[1], [0], [0], [1], [0, 0, 1, 1], [], []>, precision = #tpu.contract_precision<fp32>} : vector<32x64xf32>, vector<64x16xf32>, vector<32x16xf32> -> vector<32x16xf32>
    %c7 = arith.constant 7 : index
    %c0_28 = arith.constant 0 : index
    %c0_29 = arith.constant 0 : index
    %79 = vector.load %arg3[%c7, %c0_28, %c0_29] : memref<8x32x16xf32, #tpu.memory_space<vmem>>, vector<1x32x16xf32>
    %80 = vector.shape_cast %79 : vector<1x32x16xf32> to vector<32x16xf32>
    %81 = vector.shape_cast %78 : vector<32x16xf32> to vector<1x32x16xf32>
    tpu.vector_store %arg3[%c7, %c0_28, %c0_29], %81 {strides = array<i32>} : memref<8x32x16xf32, #tpu.memory_space<vmem>>, vector<1x32x16xf32>,
    return
  }
  func.func @transform_0(%arg0: i32) -> (i32, i32) {
    %c0_i32 = arith.constant 0 : i32
    %c0_i32_0 = arith.constant 0 : i32
    return %arg0, %c0_i32 : i32, i32
  }
  func.func @transform_1(%arg0: i32) -> (i32, i32) {
    %c0_i32 = arith.constant 0 : i32
    %c0_i32_0 = arith.constant 0 : i32
    %c0_i32_1 = arith.constant 0 : i32
    return %c0_i32, %c0_i32_0 : i32, i32
  }
  func.func @transform_2(%arg0: i32) -> (i32, i32, i32) {
    %c0_i32 = arith.constant 0 : i32
    %c0_i32_0 = arith.constant 0 : i32
    %c0_i32_1 = arith.constant 0 : i32
    return %arg0, %c0_i32, %c0_i32_0 : i32, i32, i32
  }
  func.func @transform_3(%arg0: i32) -> (i32, i32) {
    %c0_i32 = arith.constant 0 : i32
    %c0_i32_0 = arith.constant 0 : i32
    return %arg0, %c0_i32 : i32, i32
  }
}

</mosaic_0001>

<llo_original>
// kernel: tpu_custom_call.1
$region0: #{tpu_custom_call.1}
  #allocation0 [shape = 'u32[]', space=smem, size = 0x4, offset = 0x4, fixed_abs, tag = 'smem constant byte address 0x4 - core index']
  #allocation1 [shape = 'u32[144,128]{1,0:T(1,128)}', space=vmem, size = 0x12000, scoped, tag = 'internal scratch']
  %s0 = inlined_call_operand.vmem [shape: s32[16,16], index: 0, kind: input, shape index: {}]
  %s1 = inlined_call_operand.vmem [shape: f32[64,32], index: 1, kind: input, shape index: {}]
  %s2 = inlined_call_operand.vmem [shape: f32[16,32,16], index: 2, kind: output, shape index: {0}]
  %s3 = inlined_call_operand.vmem [shape: s32[16,1], index: 3, kind: output, shape index: {1}]
  %4 = xla_tuple %s2, %s3
  %s5 = sld [smem:[#allocation0]]
  $region49: #{tpu_custom_call.1} parent=0
    _
  %s7 = ssub.s32 1, %s5
  %s8 = scalar_select 0, %s7, %s5
  loop: start=0, step=1, limit=4
  $region2: #{tpu_custom_call.1} parent=0 // loop_pre_header
    _
  $region3: #{tpu_custom_call.1} parent=0 // loop_header
    %s10 = sphi 0, %s14
    %p11 = scmp.ge.s32.totalorder %s10, 4
    %s20 = sphi 0, %s22
    %s23 = sphi 0, %s20
    %s24 = sphi 0, %s23
    %s40 = sphi 0, %s24
    %s44 = sphi 0, %s44
    %s46 = sphi 0, %s44
    %s47 = sphi 0, %s46
    %s61 = sphi 0, %s47
    %s67 = sphi 0, %s69
    %s70 = sphi 0, %s67
    %s71 = sphi 0, %s70
    %s87 = sphi 0, %s71
    %s93 = sphi 0, %s95
    %s96 = sphi 0, %s93
    %s97 = sphi 0, %s96
    %s113 = sphi 0, %s97
  $region4: #{tpu_custom_call.1} parent=0 // loop_header_branch
    %13 = sbr.rel (%p11) target = $region8
  $region5: #{tpu_custom_call.1} parent=0 // loop_body
    %s15 = ssub.s32 %s10, 1
    %s16 = ssub.s32 %s10, 2
    %s17 = sadd.s32 %s10, 1
    %s18 = ssub.s32 %s10, %s17
    %p19 = scmp.eq.s32.totalorder %s18, 0
    %s21 = sadd.s32 %s20, 1
    %s22 = scalar_select %p19, %s20, %s21
    %p25 = pneg %p19
    %p26 = scmp.eq.s32.totalorder %s10, 1
    %p27 = por %p25, %p26
    %p28 = scmp.ne.s32.totalorder %s20, %s23
    %p29 = scmp.eq.s32.totalorder %s10, 0
    %p30 = por %p28, %p29
    %p31 = scmp.ne.s32.totalorder %s20, %s23
    %p32 = scmp.eq.s32.totalorder %s15, 1
    %p33 = por %p31, %p32
    %p34 = scmp.ne.s32.totalorder %s23, %s24
    %p35 = scmp.eq.s32.totalorder %s15, 0
    %p36 = por %p34, %p35
    %p37 = scmp.ne.s32.totalorder %s23, %s24
    %p38 = scmp.eq.s32.totalorder %s16, 1
    %p39 = por %p37, %p38
    %p41 = scmp.ne.s32.totalorder %s24, %s40
    %p42 = scmp.eq.s32.totalorder %s16, 0
    %p43 = por %p41, %p42
    %s45 = sadd.s32 %s44, 1
    %p48 = scmp.eq.s32.totalorder %s10, 1
    %p49 = scmp.ne.s32.totalorder %s44, %s46
    %p50 = scmp.eq.s32.totalorder %s10, 0
    %p51 = por %p49, %p50
    %p52 = scmp.ne.s32.totalorder %s44, %s46
    %p53 = scmp.eq.s32.totalorder %s15, 1
    %p54 = por %p52, %p53
    %p55 = scmp.ne.s32.totalorder %s46, %s47
    %p56 = scmp.eq.s32.totalorder %s15, 0
    %p57 = por %p55, %p56
    %p58 = scmp.ne.s32.totalorder %s46, %s47
    %p59 = scmp.eq.s32.totalorder %s16, 1
    %p60 = por %p58, %p59
    %p62 = scmp.ne.s32.totalorder %s47, %s61
    %p63 = scmp.eq.s32.totalorder %s16, 0
    %p64 = por %p62, %p63
    %s65 = ssub.s32 %s10, %s17
    %p66 = scmp.eq.s32.totalorder %s65, 0
    %s68 = sadd.s32 %s67, 1
    %s69 = scalar_select %p66, %s67, %s68
    %p72 = pneg %p66
    %p73 = scmp.eq.s32.totalorder %s10, 1
    %p74 = por %p72, %p73
    %p75 = scmp.ne.s32.totalorder %s67, %s70
    %p76 = scmp.eq.s32.totalorder %s10, 0
    %p77 = por %p75, %p76
    %p78 = scmp.ne.s32.totalorder %s67, %s70
    %p79 = scmp.eq.s32.totalorder %s15, 1
    %p80 = por %p78, %p79
    %p81 = scmp.ne.s32.totalorder %s70, %s71
    %p82 = scmp.eq.s32.totalorder %s15, 0
    %p83 = por %p81, %p82
    %p84 = scmp.ne.s32.totalorder %s70, %s71
    %p85 = scmp.eq.s32.totalorder %s16, 1
    %p86 = por %p84, %p85
    %p88 = scmp.ne.s32.totalorder %s71, %s87
    %p89 = scmp.eq.s32.totalorder %s16, 0
    %p90 = por %p88, %p89
    %s91 = ssub.s32 %s10, %s17
    %p92 = scmp.eq.s32.totalorder %s91, 0
    %s94 = sadd.s32 %s93, 1
    %s95 = scalar_select %p92, %s93, %s94
    %p98 = pneg %p92
    %p99 = scmp.eq.s32.totalorder %s10, 1
    %p100 = por %p98, %p99
    %p101 = scmp.ne.s32.totalorder %s93, %s96
    %p102 = scmp.eq.s32.totalorder %s10, 0
    %p103 = por %p101, %p102
    %p104 = scmp.ne.s32.totalorder %s93, %s96
    %p105 = scmp.eq.s32.totalorder %s15, 1
    %p106 = por %p104, %p105
    %p107 = scmp.ne.s32.totalorder %s96, %s97
    %p108 = scmp.eq.s32.totalorder %s15, 0
    %p109 = por %p107, %p108
    %p110 = scmp.ne.s32.totalorder %s96, %s97
    %p111 = scmp.eq.s32.totalorder %s16, 1
    %p112 = por %p110, %p111
    %p114 = scmp.ne.s32.totalorder %s97, %s113
    %p115 = scmp.eq.s32.totalorder %s16, 0
    %p116 = por %p114, %p115
    %p117 = scmp.le.s32.totalorder 1, %s10
    %p118 = scmp.lt.s32.totalorder %s10, 3
    %p119 = pnand %p117, %p118
    %p120 = pneg %p119
    // Predicated region
    $region9: #{tpu_custom_call.1} parent=5 // pred_check
      _
    $region10: #{tpu_custom_call.1} parent=5 // pred_check_branch
      %122 = sbr.rel (%p119) target = $region12
    $region11: #{tpu_custom_call.1} parent=5 // pred_region
      %s123 = ssub.s32 %s10, 1
      // Predicated region
      $region13: #{tpu_custom_call.1} parent=11 // pred_check
        %p124 = pneg %p57
      $region14: #{tpu_custom_call.1} parent=11 // pred_check_branch
        %126 = sbr.rel (%p124) target = $region16
      $region15: #{tpu_custom_call.1} parent=11 // pred_region
        _
      $region16: #{tpu_custom_call.1} parent=11 // pred_fallthru
        _
    $region12: #{tpu_custom_call.1} parent=5 // pred_fallthru
      _
    %p127 = scmp.lt.s32.totalorder %s10, 2
    // Predicated region
    $region17: #{tpu_custom_call.1} parent=5 // pred_check
      %p128 = pneg %p127
    $region18: #{tpu_custom_call.1} parent=5 // pred_check_branch
      %130 = sbr.rel (%p128) target = $region20
    $region19: #{tpu_custom_call.1} parent=5 // pred_region
      // Predicated region
      $region21: #{tpu_custom_call.1} parent=19 // pred_check
        %p131 = pneg %p30
      $region22: #{tpu_custom_call.1} parent=19 // pred_check_branch
        %133 = sbr.rel (%p131) target = $region24
      $region23: #{tpu_custom_call.1} parent=19 // pred_region
        %p134 = scmp.lt.s32.totalorder %s10, 1
        %s135 = scalar_select %p134, %s10, 1
        %s136 = smul.addr %s135, 8
        %s137 = scalar_lea.vmem %s0, %s136
      $region24: #{tpu_custom_call.1} parent=19 // pred_fallthru
        _
    $region20: #{tpu_custom_call.1} parent=5 // pred_fallthru
      _
    %p138 = scmp.le.s32.totalorder 1, %s10
    %p139 = scmp.lt.s32.totalorder %s10, 3
    %p140 = pnand %p138, %p139
    %p141 = pneg %p140
    // Predicated region
    $region25: #{tpu_custom_call.1} parent=5 // pred_check
      _
    $region26: #{tpu_custom_call.1} parent=5 // pred_check_branch
      %143 = sbr.rel (%p140) target = $region28
    $region27: #{tpu_custom_call.1} parent=5 // pred_region
      %s144 = ssub.s32 %s10, 1
      %p145 = scmp.lt.s32.totalorder %s15, 1
      %s146 = scalar_select %p145, %s15, 1
      %s147 = smul.addr %s146, 8
      %s148 = scalar_lea.vmem %s0, %s147
      %p149 = pneg %p36
      %p150 = pneg %p33
      %p151 = pneg %p57
      %p152 = pneg %p54
      %p153 = pneg %p83
      %p154 = pneg %p80
      %s155 = smul.u32 8, %s15
      %p156 = scmp.lt.s32.totalorder %s155, 15
      %s157 = scalar_select %p156, %s155, 15
      %s158 = smul.addr %s157, 4
      %s159 = smul.addr %s158, 8
      %s160 = scalar_lea.vmem %s2, %s159
      %p161 = pneg %p109
      %p162 = pneg %p106
      %p163 = scmp.lt.s32.totalorder %s15, 1
      %s164 = scalar_select %p163, %s15, 1
      %s165 = smul.addr %s164, 8
      %s166 = scalar_lea.vmem %s3, %s165
      %p167 = scmp.lt.s32.totalorder %s15, 1
      %s168 = scalar_select %p167, %s15, 1
      %s169 = smul.addr %s168, 8
      %s170 = scalar_lea.vmem %s0, %s169
      %s171 = smul.u32 8, %s15
      %p172 = scmp.lt.s32.totalorder %s171, 15
      %s173 = scalar_select %p172, %s171, 15
      %s174 = smul.addr %s173, 4
      %s175 = smul.addr %s174, 8
      %s176 = scalar_lea.vmem %s2, %s175
      %s177 = smul.u32 8, %s15
      %p178 = scmp.lt.s32.totalorder %s15, 1
      %s179 = scalar_select %p178, %s15, 1
      %s180 = smul.addr %s179, 8
      %s181 = scalar_lea.vmem %s3, %s180
      %v182 = vld [vmem:[%s170] sm:$0xff]
      %v183 = vld [vmem:[%s1] sm:$0xff]
      %v184 = vld [vmem:[%s1 + $0x8] sm:$0xff]
      %v185 = vld [vmem:[%s1 + $0x10] sm:$0xff]
      %v186 = vld [vmem:[%s1 + $0x18] sm:$0xff]
      %v187 = vld [vmem:[%s1 + $0x20] sm:$0xff]
      %v188 = vld [vmem:[%s1 + $0x28] sm:$0xff]
      %v189 = vld [vmem:[%s1 + $0x30] sm:$0xff]
      %v190 = vld [vmem:[%s1 + $0x38] sm:$0xff]
      %vm191 = vcmp.ne.s32.totalorder %v182, 1
      %v192 = vsel %vm191, 1, 0
      %vm193 = vcmask 130048
      %v194 = vsel %vm193, %v192, 0
      %v195 = vand.u32 %v194, 65535
      %v196 = vshrl.u32 %v194, 16
      %v197 = vcvt.s32.f32 %v195
      %v198 = vcvt.s32.f32 %v196
      %199 = vadd.xlane.f32.xlu0 %v197
      %v200 = vpop.xlane.xlu0 %199
      %201 = vadd.xlane.f32.xlu0 %v198
      %v202 = vpop.xlane.xlu0 %201
      %v203 = vcvt.f32.s32 %v200
      %v204 = vcvt.f32.s32 %v202
      %v205 = vshll.u32 %v204, 16
      %v206 = vadd.s32 %v205, %v203
      %vm207 = vcmask 7168
      %208 = vst.msk [vmem:[%s181] sm:$0xff] %vm207, %v206
      %209 = vxpose.xlu0.b32.start [1/16] %v183, 128
      %210 = vxpose.xlu0.b32.cont [2/16] %v184, 128
      %211 = vxpose.xlu0.b32.cont [3/16] %v185, 128
      %212 = vxpose.xlu0.b32.cont [4/16] %v186, 128
      %213 = vxpose.xlu0.b32.cont [5/16] %v187, 128
      %214 = vxpose.xlu0.b32.cont [6/16] %v188, 128
      %215 = vxpose.xlu0.b32.cont [7/16] %v189, 128
      %216 = vxpose.xlu0.b32.cont [8/16] %v190, 128
      %217 = vxpose.xlu0.b32.cont [9/16] 0.0, 128
      %218 = vxpose.xlu0.b32.cont [10/16] 0.0, 128
      %219 = vxpose.xlu0.b32.cont [11/16] 0.0, 128
      %220 = vxpose.xlu0.b32.cont [12/16] 0.0, 128
      %221 = vxpose.xlu0.b32.cont [13/16] 0.0, 128
      %222 = vxpose.xlu0.b32.cont [14/16] 0.0, 128
      %223 = vxpose.xlu0.b32.cont [15/16] 0.0, 128
      %224 = vxpose.xlu0.b32.end [16/16] 0.0, 128
      %v225 = vpop.trf.xlu0
      %v226 = vpop.trf.xlu0
      %v227 = vpop.trf.xlu0
      %v228 = vpop.trf.xlu0
      %v229 = vpop.trf.xlu0
      %v230 = vpop.trf.xlu0
      %v231 = vpop.trf.xlu0
      %v232 = vpop.trf.xlu0
      %v233 = vpop.trf.xlu0
      %v234 = vpop.trf.xlu0
      %v235 = vpop.trf.xlu0
      %v236 = vpop.trf.xlu0
      %v237 = vpop.trf.xlu0
      %v238 = vpop.trf.xlu0
      %v239 = vpop.trf.xlu0
      %v240 = vpop.trf.xlu0
      %v241 = vlaneseq
      %v242 = vshrl.u32 %v241, 7
      %v243 = vadd.s32 %v242, 8
      %v244 = vadd.s32 %v242, 16
      %v245 = vadd.s32 %v242, 24
      %v246 = vadd.s32 %v242, 32
      %v247 = vadd.s32 %v242, 40
      %v248 = vadd.s32 %v242, 48
      %v249 = vadd.s32 %v242, 56
      %v250 = vlaneseq
      %v251 = vshrl.u32 %v250, 7
      %v252 = vsub.s32 0, %v251
      %v253 = vrot.slane %v182, %v252
      %vm254 = vcmp.eq.s32.totalorder %v253, %v242
      %vm255 = vcmp.eq.s32.totalorder %v253, %v243
      %vm256 = vcmp.eq.s32.totalorder %v253, %v244
      %vm257 = vcmp.eq.s32.totalorder %v253, %v245
      %vm258 = vcmp.eq.s32.totalorder %v253, %v246
      %vm259 = vcmp.eq.s32.totalorder %v253, %v247
      %vm260 = vcmp.eq.s32.totalorder %v253, %v248
      %vm261 = vcmp.eq.s32.totalorder %v253, %v249
      %v262 = vsel %vm254, 1, 0
      %v263 = vsel %vm255, 1, 0
      %v264 = vsel %vm256, 1, 0
      %v265 = vsel %vm257, 1, 0
      %v266 = vsel %vm258, 1, 0
      %v267 = vsel %vm259, 1, 0
      %v268 = vsel %vm260, 1, 0
      %v269 = vsel %vm261, 1, 0
      %v270 = vcvt.s32.f32 %v262
      %v271 = vcvt.s32.f32 %v263
      %v272 = vcvt.s32.f32 %v264
      %v273 = vcvt.s32.f32 %v265
      %v274 = vcvt.s32.f32 %v266
      %v275 = vcvt.s32.f32 %v267
      %v276 = vcvt.s32.f32 %v268
      %v277 = vcvt.s32.f32 %v269
      %vm278 = vcmask 523264
      %v280 = vsel %vm278, %v225, 0
      %v283 = vsel %vm278, %v226, 0
      %v286 = vsel %vm278, %v227, 0
      %v289 = vsel %vm278, %v228, 0
      %291 = vmatprep.subr.mxu0 0.0
      %v292 = vand.u32 %v270, 4294901760
      %293 = vmatpush1.msra.mxu0 %v292
      %294 = vmatprep.subr.mxu0 0.0
      %v295 = vand.u32 %v271, 4294901760
      %296 = vmatpush1.msra.mxu0 %v295
      %297 = vmatprep.subr.mxu0 0.0
      %v298 = vand.u32 %v272, 4294901760
      %299 = vmatpush1.msra.mxu0 %v298
      %300 = vmatprep.subr.mxu0 0.0
      %v301 = vand.u32 %v273, 4294901760
      %302 = vmatpush1.msra.mxu0 %v301
      %303 = vmatprep.subr.mxu0 0.0
      %v304 = vand.u32 %v274, 4294901760
      %305 = vmatpush1.msra.mxu0 %v304
      %306 = vmatprep.subr.mxu0 0.0
      %v307 = vand.u32 %v275, 4294901760
      %308 = vmatpush1.msra.mxu0 %v307
      %309 = vmatprep.subr.mxu0 0.0
      %v310 = vand.u32 %v276, 4294901760
      %311 = vmatpush1.msra.mxu0 %v310
      %312 = vmatprep.subr.mxu0 0.0
      %v313 = vand.u32 %v277, 4294901760
      %314 = vmatpush1.msra.mxu0 %v313
      %315 = vmatprep.subr.mxu0 0.0
      %316 = vmatpush1.msra.mxu0 0.0
      %317 = vmatprep.subr.mxu0 0.0
      %318 = vmatpush1.msra.mxu0 0.0
      %319 = vmatprep.subr.mxu0 0.0
      %320 = vmatpush1.msra.mxu0 0.0
      %321 = vmatprep.subr.mxu0 0.0
      %322 = vmatpush1.msra.mxu0 0.0
      %323 = vmatprep.subr.mxu0 0.0
      %324 = vmatpush1.msra.mxu0 0.0
      %325 = vmatprep.subr.mxu0 0.0
      %326 = vmatpush1.msra.mxu0 0.0
      %327 = vmatprep.subr.mxu0 0.0
      %328 = vmatpush1.msra.mxu0 0.0
      %329 = vmatprep.subr.mxu0 0.0
      %330 = vmatpush1.msra.mxu0 0.0
      %331 = vmatprep.subr.mxu0 0.0
      %332 = vmatpush1.msra.mxu0 0.0
      %333 = vmatprep.subr.mxu0 0.0
      %334 = vmatpush1.msra.mxu0 0.0
      %335 = vmatprep.subr.mxu0 0.0
      %336 = vmatpush1.msra.mxu0 0.0
      %337 = vmatprep.subr.mxu0 0.0
      %338 = vmatpush1.msra.mxu0 0.0
      %339 = vmatprep.subr.mxu0 0.0
      %340 = vmatpush1.msra.mxu0 0.0
      %341 = vmatprep.subr.mxu0 0.0
      %342 = vmatpush1.msra.mxu0 0.0
      %343 = vmatprep.subr.mxu0 0.0
      %344 = vmatpush1.msra.mxu0 0.0
      %345 = vmatprep.subr.mxu0 0.0
      %346 = vmatpush1.msra.mxu0 0.0
      %347 = vmatprep.subr.mxu0 0.0
      %348 = vmatpush1.msra.mxu0 0.0
      %349 = vmatprep.subr.mxu0 0.0
      %350 = vmatpush1.msra.mxu0 0.0
      %351 = vmatprep.subr.mxu0 0.0
      %352 = vmatpush1.msra.mxu0 0.0
      %353 = vmatprep.subr.mxu0 0.0
      %354 = vmatpush1.msra.mxu0 0.0
      %355 = vmatprep.subr.mxu0 0.0
      %356 = vmatpush1.msra.mxu0 0.0
      %357 = vmatprep.subr.mxu0 0.0
      %358 = vmatpush1.msra.mxu0 0.0
      %359 = vmatprep.subr.mxu0 0.0
      %360 = vmatpush1.msra.mxu0 0.0
      %361 = vmatprep.subr.mxu0 0.0
      %362 = vmatpush1.msra.mxu0 0.0
      %363 = vmatprep.mubr.f32.mxu0 0.0
      %v364 = vand.u32 %v280, 4294901760
      %v365 = vsub.f32 %v280, %v364
      %v366 = vand.u32 %v365, 4294901760
      %v367 = vsub.f32 %v365, %v366
      %v368 = vand.u32 %v367, 4294901760
      %369 = vmatmul.mubr.f32.gmra.mrb[0].mxu0 %v368
      %v370 = vpop.f32.mrb[0].mxu0
      %v371 = vadd.f32 0.0, %v370
      %v372 = vpop.f32.mrb[0].mxu0
      %373 = vmatprep.mubr.f32.mxu0 0.0
      %v374 = vand.u32 %v283, 4294901760
      %v375 = vsub.f32 %v283, %v374
      %v376 = vand.u32 %v375, 4294901760
      %v377 = vsub.f32 %v375, %v376
      %v378 = vand.u32 %v377, 4294901760
      %379 = vmatmul.mubr.f32.gmra.mrb[0].mxu0 %v378
      %v380 = vpop.f32.mrb[0].mxu0
      %v381 = vadd.f32 0.0, %v380
      %v382 = vpop.f32.mrb[0].mxu0
      %383 = vmatprep.mubr.f32.mxu0 0.0
      %v384 = vand.u32 %v286, 4294901760
      %v385 = vsub.f32 %v286, %v384
      %v386 = vand.u32 %v385, 4294901760
      %v387 = vsub.f32 %v385, %v386
      %v388 = vand.u32 %v387, 4294901760
      %389 = vmatmul.mubr.f32.gmra.mrb[0].mxu0 %v388
      %v390 = vpop.f32.mrb[0].mxu0
      %v391 = vadd.f32 0.0, %v390
      %v392 = vpop.f32.mrb[0].mxu0
      %393 = vmatprep.mubr.f32.mxu0 0.0
      %v394 = vand.u32 %v289, 4294901760
      %v395 = vsub.f32 %v289, %v394
      %v396 = vand.u32 %v395, 4294901760
      %v397 = vsub.f32 %v395, %v396
      %v398 = vand.u32 %v397, 4294901760
      %399 = vmatmul.mubr.f32.gmra.mrb[0].mxu0 %v398
      %v400 = vpop.f32.mrb[0].mxu0
      %v401 = vadd.f32 0.0, %v400
      %v402 = vpop.f32.mrb[0].mxu0
      %403 = vdwg.mxu0
      %404 = vmatprep.subr.mxu0 0.0
      %v405 = vand.u32 %v270, 4294901760
      %v406 = vsub.f32 %v270, %v405
      %v407 = vand.u32 %v406, 4294901760
      %v408 = vsub.f32 %v406, %v407
      %v409 = vand.u32 %v408, 4294901760
      %410 = vmatpush1.msra.mxu0 %v409
      %411 = vmatprep.subr.mxu0 0.0
      %v412 = vand.u32 %v271, 4294901760
      %v413 = vsub.f32 %v271, %v412
      %v414 = vand.u32 %v413, 4294901760
      %v415 = vsub.f32 %v413, %v414
      %v416 = vand.u32 %v415, 4294901760
      %417 = vmatpush1.msra.mxu0 %v416
      %418 = vmatprep.subr.mxu0 0.0
      %v419 = vand.u32 %v272, 4294901760
      %v420 = vsub.f32 %v272, %v419
      %v421 = vand.u32 %v420, 4294901760
      %v422 = vsub.f32 %v420, %v421
      %v423 = vand.u32 %v422, 4294901760
      %424 = vmatpush1.msra.mxu0 %v423
      %425 = vmatprep.subr.mxu0 0.0
      %v426 = vand.u32 %v273, 4294901760
      %v427 = vsub.f32 %v273, %v426
      %v428 = vand.u32 %v427, 4294901760
      %v429 = vsub.f32 %v427, %v428
      %v430 = vand.u32 %v429, 4294901760
      %431 = vmatpush1.msra.mxu0 %v430
      %432 = vmatprep.subr.mxu0 0.0
      %v433 = vand.u32 %v274, 4294901760
      %v434 = vsub.f32 %v274, %v433
      %v435 = vand.u32 %v434, 4294901760
      %v436 = vsub.f32 %v434, %v435
      %v437 = vand.u32 %v436, 4294901760
      %438 = vmatpush1.msra.mxu0 %v437
      %439 = vmatprep.subr.mxu0 0.0
      %v440 = vand.u32 %v275, 4294901760
      %v441 = vsub.f32 %v275, %v440
      %v442 = vand.u32 %v441, 4294901760
      %v443 = vsub.f32 %v441, %v442
      %v444 = vand.u32 %v443, 4294901760
      %445 = vmatpush1.msra.mxu0 %v444
      %446 = vmatprep.subr.mxu0 0.0
      %v447 = vand.u32 %v276, 4294901760
      %v448 = vsub.f32 %v276, %v447
      %v449 = vand.u32 %v448, 4294901760
      %v450 = vsub.f32 %v448, %v449
      %v451 = vand.u32 %v450, 4294901760
      %452 = vmatpush1.msra.mxu0 %v451
      %453 = vmatprep.subr.mxu0 0.0
      %v454 = vand.u32 %v277, 4294901760
      %v455 = vsub.f32 %v277, %v454
      %v456 = vand.u32 %v455, 4294901760
      %v457 = vsub.f32 %v455, %v456
      %v458 = vand.u32 %v457, 4294901760
      %459 = vmatpush1.msra.mxu0 %v458
      %460 = vmatprep.subr.mxu0 0.0
      %461 = vmatpush1.msra.mxu0 0.0
      %462 = vmatprep.subr.mxu0 0.0
      %463 = vmatpush1.msra.mxu0 0.0
      %464 = vmatprep.subr.mxu0 0.0
      %465 = vmatpush1.msra.mxu0 0.0
      %466 = vmatprep.subr.mxu0 0.0
      %467 = vmatpush1.msra.mxu0 0.0
      %468 = vmatprep.subr.mxu0 0.0
      %469 = vmatpush1.msra.mxu0 0.0
      %470 = vmatprep.subr.mxu0 0.0
      %471 = vmatpush1.msra.mxu0 0.0
      %472 = vmatprep.subr.mxu0 0.0
      %473 = vmatpush1.msra.mxu0 0.0
      %474 = vmatprep.subr.mxu0 0.0
      %475 = vmatpush1.msra.mxu0 0.0
      %476 = vmatprep.subr.mxu0 0.0
      %477 = vmatpush1.msra.mxu0 0.0
      %478 = vmatprep.subr.mxu0 0.0
      %479 = vmatpush1.msra.mxu0 0.0
      %480 = vmatprep.subr.mxu0 0.0
      %481 = vmatpush1.msra.mxu0 0.0
      %482 = vmatprep.subr.mxu0 0.0
      %483 = vmatpush1.msra.mxu0 0.0
      %484 = vmatprep.subr.mxu0 0.0
      %485 = vmatpush1.msra.mxu0 0.0
      %486 = vmatprep.subr.mxu0 0.0
      %487 = vmatpush1.msra.mxu0 0.0
      %488 = vmatprep.subr.mxu0 0.0
      %489 = vmatpush1.msra.mxu0 0.0
      %490 = vmatprep.subr.mxu0 0.0
      %491 = vmatpush1.msra.mxu0 0.0
      %492 = vmatprep.subr.mxu0 0.0
      %493 = vmatpush1.msra.mxu0 0.0
      %494 = vmatprep.subr.mxu0 0.0
      %495 = vmatpush1.msra.mxu0 0.0
      %496 = vmatprep.subr.mxu0 0.0
      %497 = vmatpush1.msra.mxu0 0.0
      %498 = vmatprep.subr.mxu0 0.0
      %499 = vmatpush1.msra.mxu0 0.0
      %500 = vmatprep.subr.mxu0 0.0
      %501 = vmatpush1.msra.mxu0 0.0
      %502 = vmatprep.subr.mxu0 0.0
      %503 = vmatpush1.msra.mxu0 0.0
      %504 = vmatprep.subr.mxu0 0.0
      %505 = vmatpush1.msra.mxu0 0.0
      %506 = vmatprep.subr.mxu0 0.0
      %507 = vmatpush1.msra.mxu0 0.0
      %508 = vmatprep.mubr.f32.mxu0 0.0
      %v509 = vand.u32 %v280, 4294901760
      %510 = vmatmul.mubr.f32.gmra.mrb[0].mxu0 %v509
      %v511 = vpop.f32.mrb[0].mxu0
      %v512 = vadd.f32 %v371, %v511
      %v513 = vpop.f32.mrb[0].mxu0
      %514 = vmatprep.mubr.f32.mxu0 0.0
      %v515 = vand.u32 %v283, 4294901760
      %516 = vmatmul.mubr.f32.gmra.mrb[0].mxu0 %v515
      %v517 = vpop.f32.mrb[0].mxu0
      %v518 = vadd.f32 %v381, %v517
      %v519 = vpop.f32.mrb[0].mxu0
      %520 = vmatprep.mubr.f32.mxu0 0.0
      %v521 = vand.u32 %v286, 4294901760
      %522 = vmatmul.mubr.f32.gmra.mrb[0].mxu0 %v521
      %v523 = vpop.f32.mrb[0].mxu0
      %v524 = vadd.f32 %v391, %v523
      %v525 = vpop.f32.mrb[0].mxu0
      %526 = vmatprep.mubr.f32.mxu0 0.0
      %v527 = vand.u32 %v289, 4294901760
      %528 = vmatmul.mubr.f32.gmra.mrb[0].mxu0 %v527
      %v529 = vpop.f32.mrb[0].mxu0
      %v530 = vadd.f32 %v401, %v529
      %v531 = vpop.f32.mrb[0].mxu0
      %532 = vdwg.mxu0
      %533 = vmatprep.subr.mxu0 0.0
      %v534 = vand.u32 %v270, 4294901760
      %v535 = vsub.f32 %v270, %v534
      %536 = vmatpush1.msra.mxu0 %v535
      %537 = vmatprep.subr.mxu0 0.0
      %v538 = vand.u32 %v271, 4294901760
      %v539 = vsub.f32 %v271, %v538
      %540 = vmatpush1.msra.mxu0 %v539
      %541 = vmatprep.subr.mxu0 0.0
      %v542 = vand.u32 %v272, 4294901760
      %v543 = vsub.f32 %v272, %v542
      %544 = vmatpush1.msra.mxu0 %v543
      %545 = vmatprep.subr.mxu0 0.0
      %v546 = vand.u32 %v273, 4294901760
      %v547 = vsub.f32 %v273, %v546
      %548 = vmatpush1.msra.mxu0 %v547
      %549 = vmatprep.subr.mxu0 0.0
      %v550 = vand.u32 %v274, 4294901760
      %v551 = vsub.f32 %v274, %v550
      %552 = vmatpush1.msra.mxu0 %v551
      %553 = vmatprep.subr.mxu0 0.0
      %v554 = vand.u32 %v275, 4294901760
      %v555 = vsub.f32 %v275, %v554
      %556 = vmatpush1.msra.mxu0 %v555
      %557 = vmatprep.subr.mxu0 0.0
      %v558 = vand.u32 %v276, 4294901760
      %v559 = vsub.f32 %v276, %v558
      %560 = vmatpush1.msra.mxu0 %v559
      %561 = vmatprep.subr.mxu0 0.0
      %v562 = vand.u32 %v277, 4294901760
      %v563 = vsub.f32 %v277, %v562
      %564 = vmatpush1.msra.mxu0 %v563
      %565 = vmatprep.subr.mxu0 0.0
      %566 = vmatpush1.msra.mxu0 0.0
      %567 = vmatprep.subr.mxu0 0.0
      %568 = vmatpush1.msra.mxu0 0.0
      %569 = vmatprep.subr.mxu0 0.0
      %570 = vmatpush1.msra.mxu0 0.0
      %571 = vmatprep.subr.mxu0 0.0
      %572 = vmatpush1.msra.mxu0 0.0
      %573 = vmatprep.subr.mxu0 0.0
      %574 = vmatpush1.msra.mxu0 0.0
      %575 = vmatprep.subr.mxu0 0.0
      %576 = vmatpush1.msra.mxu0 0.0
      %577 = vmatprep.subr.mxu0 0.0
      %578 = vmatpush1.msra.mxu0 0.0
      %579 = vmatprep.subr.mxu0 0.0
      %580 = vmatpush1.msra.mxu0 0.0
      %581 = vmatprep.subr.mxu0 0.0
      %582 = vmatpush1.msra.mxu0 0.0
      %583 = vmatprep.subr.mxu0 0.0
      %584 = vmatpush1.msra.mxu0 0.0
      %585 = vmatprep.subr.mxu0 0.0
      %586 = vmatpush1.msra.mxu0 0.0
      %587 = vmatprep.subr.mxu0 0.0
      %588 = vmatpush1.msra.mxu0 0.0
      %589 = vmatprep.subr.mxu0 0.0
      %590 = vmatpush1.msra.mxu0 0.0
      %591 = vmatprep.subr.mxu0 0.0
      %592 = vmatpush1.msra.mxu0 0.0
      %593 = vmatprep.subr.mxu0 0.0
      %594 = vmatpush1.msra.mxu0 0.0
      %595 = vmatprep.subr.mxu0 0.0
      %596 = vmatpush1.msra.mxu0 0.0
      %597 = vmatprep.subr.mxu0 0.0
      %598 = vmatpush1.msra.mxu0 0.0
      %599 = vmatprep.subr.mxu0 0.0
      %600 = vmatpush1.msra.mxu0 0.0
      %601 = vmatprep.subr.mxu0 0.0
      %602 = vmatpush1.msra.mxu0 0.0
      %603 = vmatprep.subr.mxu0 0.0
      %604 = vmatpush1.msra.mxu0 0.0
      %605 = vmatprep.subr.mxu0 0.0
      %606 = vmatpush1.msra.mxu0 0.0
      %607 = vmatprep.subr.mxu0 0.0
      %608 = vmatpush1.msra.mxu0 0.0
      %609 = vmatprep.subr.mxu0 0.0
      %610 = vmatpush1.msra.mxu0 0.0
      %611 = vmatprep.subr.mxu0 0.0
      %612 = vmatpush1.msra.mxu0 0.0
      %613 = vmatprep.mubr.f32.mxu0 0.0
      %v614 = vand.u32 %v280, 4294901760
      %v615 = vsub.f32 %v280, %v614
      %616 = vmatmul.mubr.f32.gmra.mrb[0].mxu0 %v615
      %v617 = vpop.f32.mrb[0].mxu0
      %v618 = vadd.f32 %v512, %v617
      %v619 = vpop.f32.mrb[0].mxu0
      %620 = vmatprep.mubr.f32.mxu0 0.0
      %v621 = vand.u32 %v283, 4294901760
      %v622 = vsub.f32 %v283, %v621
      %623 = vmatmul.mubr.f32.gmra.mrb[0].mxu0 %v622
      %v624 = vpop.f32.mrb[0].mxu0
      %v625 = vadd.f32 %v518, %v624
      %v626 = vpop.f32.mrb[0].mxu0
      %627 = vmatprep.mubr.f32.mxu0 0.0
      %v628 = vand.u32 %v286, 4294901760
      %v629 = vsub.f32 %v286, %v628
      %630 = vmatmul.mubr.f32.gmra.mrb[0].mxu0 %v629
      %v631 = vpop.f32.mrb[0].mxu0
      %v632 = vadd.f32 %v524, %v631
      %v633 = vpop.f32.mrb[0].mxu0
      %634 = vmatprep.mubr.f32.mxu0 0.0
      %v635 = vand.u32 %v289, 4294901760
      %v636 = vsub.f32 %v289, %v635
      %637 = vmatmul.mubr.f32.gmra.mrb[0].mxu0 %v636
      %v638 = vpop.f32.mrb[0].mxu0
      %v639 = vadd.f32 %v530, %v638
      %v640 = vpop.f32.mrb[0].mxu0
      %641 = vdwg.mxu0
      %642 = vmatprep.subr.mxu0 0.0
      %v643 = vand.u32 %v270, 4294901760
      %644 = vmatpush1.msra.mxu0 %v643
      %645 = vmatprep.subr.mxu0 0.0
      %v646 = vand.u32 %v271, 4294901760
      %647 = vmatpush1.msra.mxu0 %v646
      %648 = vmatprep.subr.mxu0 0.0
      %v649 = vand.u32 %v272, 4294901760
      %650 = vmatpush1.msra.mxu0 %v649
      %651 = vmatprep.subr.mxu0 0.0
      %v652 = vand.u32 %v273, 4294901760
      %653 = vmatpush1.msra.mxu0 %v652
      %654 = vmatprep.subr.mxu0 0.0
      %v655 = vand.u32 %v274, 4294901760
      %656 = vmatpush1.msra.mxu0 %v655
      %657 = vmatprep.subr.mxu0 0.0
      %v658 = vand.u32 %v275, 4294901760
      %659 = vmatpush1.msra.mxu0 %v658
      %660 = vmatprep.subr.mxu0 0.0
      %v661 = vand.u32 %v276, 4294901760
      %662 = vmatpush1.msra.mxu0 %v661
      %663 = vmatprep.subr.mxu0 0.0
      %v664 = vand.u32 %v277, 4294901760
      %665 = vmatpush1.msra.mxu0 %v664
      %666 = vmatprep.subr.mxu0 0.0
      %667 = vmatpush1.msra.mxu0 0.0
      %668 = vmatprep.subr.mxu0 0.0
      %669 = vmatpush1.msra.mxu0 0.0
      %670 = vmatprep.subr.mxu0 0.0
      %671 = vmatpush1.msra.mxu0 0.0
      %672 = vmatprep.subr.mxu0 0.0
      %673 = vmatpush1.msra.mxu0 0.0
      %674 = vmatprep.subr.mxu0 0.0
      %675 = vmatpush1.msra.mxu0 0.0
      %676 = vmatprep.subr.mxu0 0.0
      %677 = vmatpush1.msra.mxu0 0.0
      %678 = vmatprep.subr.mxu0 0.0
      %679 = vmatpush1.msra.mxu0 0.0
      %680 = vmatprep.subr.mxu0 0.0
      %681 = vmatpush1.msra.mxu0 0.0
      %682 = vmatprep.subr.mxu0 0.0
      %683 = vmatpush1.msra.mxu0 0.0
      %684 = vmatprep.subr.mxu0 0.0
      %685 = vmatpush1.msra.mxu0 0.0
      %686 = vmatprep.subr.mxu0 0.0
      %687 = vmatpush1.msra.mxu0 0.0
      %688 = vmatprep.subr.mxu0 0.0
      %689 = vmatpush1.msra.mxu0 0.0
      %690 = vmatprep.subr.mxu0 0.0
      %691 = vmatpush1.msra.mxu0 0.0
      %692 = vmatprep.subr.mxu0 0.0
      %693 = vmatpush1.msra.mxu0 0.0
      %694 = vmatprep.subr.mxu0 0.0
      %695 = vmatpush1.msra.mxu0 0.0
      %696 = vmatprep.subr.mxu0 0.0
      %697 = vmatpush1.msra.mxu0 0.0
      %698 = vmatprep.subr.mxu0 0.0
      %699 = vmatpush1.msra.mxu0 0.0
      %700 = vmatprep.subr.mxu0 0.0
      %701 = vmatpush1.msra.mxu0 0.0
      %702 = vmatprep.subr.mxu0 0.0
      %703 = vmatpush1.msra.mxu0 0.0
      %704 = vmatprep.subr.mxu0 0.0
      %705 = vmatpush1.msra.mxu0 0.0
      %706 = vmatprep.subr.mxu0 0.0
      %707 = vmatpush1.msra.mxu0 0.0
      %708 = vmatprep.subr.mxu0 0.0
      %709 = vmatpush1.msra.mxu0 0.0
      %710 = vmatprep.subr.mxu0 0.0
      %711 = vmatpush1.msra.mxu0 0.0
      %712 = vmatprep.subr.mxu0 0.0
      %713 = vmatpush1.msra.mxu0 0.0
      %714 = vmatprep.mubr.f32.mxu0 0.0
      %v715 = vand.u32 %v280, 4294901760
      %v716 = vsub.f32 %v280, %v715
      %v717 = vand.u32 %v716, 4294901760
      %718 = vmatmul.mubr.f32.gmra.mrb[0].mxu0 %v717
      %v719 = vpop.f32.mrb[0].mxu0
      %v720 = vadd.f32 %v618, %v719
      %v721 = vpop.f32.mrb[0].mxu0
      %722 = vmatprep.mubr.f32.mxu0 0.0
      %v723 = vand.u32 %v283, 4294901760
      %v724 = vsub.f32 %v283, %v723
      %v725 = vand.u32 %v724, 4294901760
      %726 = vmatmul.mubr.f32.gmra.mrb[0].mxu0 %v725
      %v727 = vpop.f32.mrb[0].mxu0
      %v728 = vadd.f32 %v625, %v727
      %v729 = vpop.f32.mrb[0].mxu0
      %730 = vmatprep.mubr.f32.mxu0 0.0
      %v731 = vand.u32 %v286, 4294901760
      %v732 = vsub.f32 %v286, %v731
      %v733 = vand.u32 %v732, 4294901760
      %734 = vmatmul.mubr.f32.gmra.mrb[0].mxu0 %v733
      %v735 = vpop.f32.mrb[0].mxu0
      %v736 = vadd.f32 %v632, %v735
      %v737 = vpop.f32.mrb[0].mxu0
      %738 = vmatprep.mubr.f32.mxu0 0.0
      %v739 = vand.u32 %v289, 4294901760
      %v740 = vsub.f32 %v289, %v739
      %v741 = vand.u32 %v740, 4294901760
      %742 = vmatmul.mubr.f32.gmra.mrb[0].mxu0 %v741
      %v743 = vpop.f32.mrb[0].mxu0
      %v744 = vadd.f32 %v639, %v743
      %v745 = vpop.f32.mrb[0].mxu0
      %746 = vdwg.mxu0
      %747 = vmatprep.subr.mxu0 0.0
      %v748 = vand.u32 %v270, 4294901760
      %v749 = vsub.f32 %v270, %v748
      %v750 = vand.u32 %v749, 4294901760
      %751 = vmatpush1.msra.mxu0 %v750
      %752 = vmatprep.subr.mxu0 0.0
      %v753 = vand.u32 %v271, 4294901760
      %v754 = vsub.f32 %v271, %v753
      %v755 = vand.u32 %v754, 4294901760
      %756 = vmatpush1.msra.mxu0 %v755
      %757 = vmatprep.subr.mxu0 0.0
      %v758 = vand.u32 %v272, 4294901760
      %v759 = vsub.f32 %v272, %v758
      %v760 = vand.u32 %v759, 4294901760
      %761 = vmatpush1.msra.mxu0 %v760
      %762 = vmatprep.subr.mxu0 0.0
      %v763 = vand.u32 %v273, 4294901760
      %v764 = vsub.f32 %v273, %v763
      %v765 = vand.u32 %v764, 4294901760
      %766 = vmatpush1.msra.mxu0 %v765
      %767 = vmatprep.subr.mxu0 0.0
      %v768 = vand.u32 %v274, 4294901760
      %v769 = vsub.f32 %v274, %v768
      %v770 = vand.u32 %v769, 4294901760
      %771 = vmatpush1.msra.mxu0 %v770
      %772 = vmatprep.subr.mxu0 0.0
      %v773 = vand.u32 %v275, 4294901760
      %v774 = vsub.f32 %v275, %v773
      %v775 = vand.u32 %v774, 4294901760
      %776 = vmatpush1.msra.mxu0 %v775
      %777 = vmatprep.subr.mxu0 0.0
      %v778 = vand.u32 %v276, 4294901760
      %v779 = vsub.f32 %v276, %v778
      %v780 = vand.u32 %v779, 4294901760
      %781 = vmatpush1.msra.mxu0 %v780
      %782 = vmatprep.subr.mxu0 0.0
      %v783 = vand.u32 %v277, 4294901760
      %v784 = vsub.f32 %v277, %v783
      %v785 = vand.u32 %v784, 4294901760
      %786 = vmatpush1.msra.mxu0 %v785
      %787 = vmatprep.subr.mxu0 0.0
      %788 = vmatpush1.msra.mxu0 0.0
      %789 = vmatprep.subr.mxu0 0.0
      %790 = vmatpush1.msra.mxu0 0.0
      %791 = vmatprep.subr.mxu0 0.0
      %792 = vmatpush1.msra.mxu0 0.0
      %793 = vmatprep.subr.mxu0 0.0
      %794 = vmatpush1.msra.mxu0 0.0
      %795 = vmatprep.subr.mxu0 0.0
      %796 = vmatpush1.msra.mxu0 0.0
      %797 = vmatprep.subr.mxu0 0.0
      %798 = vmatpush1.msra.mxu0 0.0
      %799 = vmatprep.subr.mxu0 0.0
      %800 = vmatpush1.msra.mxu0 0.0
      %801 = vmatprep.subr.mxu0 0.0
      %802 = vmatpush1.msra.mxu0 0.0
      %803 = vmatprep.subr.mxu0 0.0
      %804 = vmatpush1.msra.mxu0 0.0
      %805 = vmatprep.subr.mxu0 0.0
      %806 = vmatpush1.msra.mxu0 0.0
      %807 = vmatprep.subr.mxu0 0.0
      %808 = vmatpush1.msra.mxu0 0.0
      %809 = vmatprep.subr.mxu0 0.0
      %810 = vmatpush1.msra.mxu0 0.0
      %811 = vmatprep.subr.mxu0 0.0
      %812 = vmatpush1.msra.mxu0 0.0
      %813 = vmatprep.subr.mxu0 0.0
      %814 = vmatpush1.msra.mxu0 0.0
      %815 = vmatprep.subr.mxu0 0.0
      %816 = vmatpush1.msra.mxu0 0.0
      %817 = vmatprep.subr.mxu0 0.0
      %818 = vmatpush1.msra.mxu0 0.0
      %819 = vmatprep.subr.mxu0 0.0
      %820 = vmatpush1.msra.mxu0 0.0
      %821 = vmatprep.subr.mxu0 0.0
      %822 = vmatpush1.msra.mxu0 0.0
      %823 = vmatprep.subr.mxu0 0.0
      %824 = vmatpush1.msra.mxu0 0.0
      %825 = vmatprep.subr.mxu0 0.0
      %826 = vmatpush1.msra.mxu0 0.0
      %827 = vmatprep.subr.mxu0 0.0
      %828 = vmatpush1.msra.mxu0 0.0
      %829 = vmatprep.subr.mxu0 0.0
      %830 = vmatpush1.msra.mxu0 0.0
      %831 = vmatprep.subr.mxu0 0.0
      %832 = vmatpush1.msra.mxu0 0.0
      %833 = vmatprep.subr.mxu0 0.0
      %834 = vmatpush1.msra.mxu0 0.0
      %835 = vmatprep.mubr.f32.mxu0 0.0
      %v836 = vand.u32 %v280, 4294901760
      %837 = vmatmul.mubr.f32.gmra.mrb[0].mxu0 %v836
      %v838 = vpop.f32.mrb[0].mxu0
      %v839 = vadd.f32 %v720, %v838
      %v840 = vpop.f32.mrb[0].mxu0
      %841 = vmatprep.mubr.f32.mxu0 0.0
      %v842 = vand.u32 %v283, 4294901760
      %843 = vmatmul.mubr.f32.gmra.mrb[0].mxu0 %v842
      %v844 = vpop.f32.mrb[0].mxu0
      %v845 = vadd.f32 %v728, %v844
      %v846 = vpop.f32.mrb[0].mxu0
      %847 = vmatprep.mubr.f32.mxu0 0.0
      %v848 = vand.u32 %v286, 4294901760
      %849 = vmatmul.mubr.f32.gmra.mrb[0].mxu0 %v848
      %v850 = vpop.f32.mrb[0].mxu0
      %v851 = vadd.f32 %v736, %v850
      %v852 = vpop.f32.mrb[0].mxu0
      %853 = vmatprep.mubr.f32.mxu0 0.0
      %v854 = vand.u32 %v289, 4294901760
      %855 = vmatmul.mubr.f32.gmra.mrb[0].mxu0 %v854
      %v856 = vpop.f32.mrb[0].mxu0
      %v857 = vadd.f32 %v744, %v856
      %v858 = vpop.f32.mrb[0].mxu0
      %859 = vdwg.mxu0
      %860 = vmatprep.subr.mxu0 0.0
      %v861 = vand.u32 %v270, 4294901760
      %862 = vmatpush1.msra.mxu0 %v861
      %863 = vmatprep.subr.mxu0 0.0
      %v864 = vand.u32 %v271, 4294901760
      %865 = vmatpush1.msra.mxu0 %v864
      %866 = vmatprep.subr.mxu0 0.0
      %v867 = vand.u32 %v272, 4294901760
      %868 = vmatpush1.msra.mxu0 %v867
      %869 = vmatprep.subr.mxu0 0.0
      %v870 = vand.u32 %v273, 4294901760
      %871 = vmatpush1.msra.mxu0 %v870
      %872 = vmatprep.subr.mxu0 0.0
      %v873 = vand.u32 %v274, 4294901760
      %874 = vmatpush1.msra.mxu0 %v873
      %875 = vmatprep.subr.mxu0 0.0
      %v876 = vand.u32 %v275, 4294901760
      %877 = vmatpush1.msra.mxu0 %v876
      %878 = vmatprep.subr.mxu0 0.0
      %v879 = vand.u32 %v276, 4294901760
      %880 = vmatpush1.msra.mxu0 %v879
      %881 = vmatprep.subr.mxu0 0.0
      %v882 = vand.u32 %v277, 4294901760
      %883 = vmatpush1.msra.mxu0 %v882
      %884 = vmatprep.subr.mxu0 0.0
      %885 = vmatpush1.msra.mxu0 0.0
      %886 = vmatprep.subr.mxu0 0.0
      %887 = vmatpush1.msra.mxu0 0.0
      %888 = vmatprep.subr.mxu0 0.0
      %889 = vmatpush1.msra.mxu0 0.0
      %890 = vmatprep.subr.mxu0 0.0
      %891 = vmatpush1.msra.mxu0 0.0
      %892 = vmatprep.subr.mxu0 0.0
      %893 = vmatpush1.msra.mxu0 0.0
      %894 = vmatprep.subr.mxu0 0.0
      %895 = vmatpush1.msra.mxu0 0.0
      %896 = vmatprep.subr.mxu0 0.0
      %897 = vmatpush1.msra.mxu0 0.0
      %898 = vmatprep.subr.mxu0 0.0
      %899 = vmatpush1.msra.mxu0 0.0
      %900 = vmatprep.subr.mxu0 0.0
      %901 = vmatpush1.msra.mxu0 0.0
      %902 = vmatprep.subr.mxu0 0.0
      %903 = vmatpush1.msra.mxu0 0.0
      %904 = vmatprep.subr.mxu0 0.0
      %905 = vmatpush1.msra.mxu0 0.0
      %906 = vmatprep.subr.mxu0 0.0
      %907 = vmatpush1.msra.mxu0 0.0
      %908 = vmatprep.subr.mxu0 0.0
      %909 = vmatpush1.msra.mxu0 0.0
      %910 = vmatprep.subr.mxu0 0.0
      %911 = vmatpush1.msra.mxu0 0.0
      %912 = vmatprep.subr.mxu0 0.0
      %913 = vmatpush1.msra.mxu0 0.0
      %914 = vmatprep.subr.mxu0 0.0
      %915 = vmatpush1.msra.mxu0 0.0
      %916 = vmatprep.subr.mxu0 0.0
      %917 = vmatpush1.msra.mxu0 0.0
      %918 = vmatprep.subr.mxu0 0.0
      %919 = vmatpush1.msra.mxu0 0.0
      %920 = vmatprep.subr.mxu0 0.0
      %921 = vmatpush1.msra.mxu0 0.0
      %922 = vmatprep.subr.mxu0 0.0
      %923 = vmatpush1.msra.mxu0 0.0
      %924 = vmatprep.subr.mxu0 0.0
      %925 = vmatpush1.msra.mxu0 0.0
      %926 = vmatprep.subr.mxu0 0.0
      %927 = vmatpush1.msra.mxu0 0.0
      %928 = vmatprep.subr.mxu0 0.0
      %929 = vmatpush1.msra.mxu0 0.0
      %930 = vmatprep.subr.mxu0 0.0
      %931 = vmatpush1.msra.mxu0 0.0
      %932 = vmatprep.mubr.f32.mxu0 0.0
      %v933 = vand.u32 %v280, 4294901760
      %934 = vmatmul.mubr.f32.gmra.mrb[0].mxu0 %v933
      %v935 = vpop.f32.mrb[0].mxu0
      %v936 = vadd.f32 %v839, %v935
      %v937 = vpop.f32.mrb[0].mxu0
      %938 = vmatprep.mubr.f32.mxu0 0.0
      %v939 = vand.u32 %v283, 4294901760
      %940 = vmatmul.mubr.f32.gmra.mrb[0].mxu0 %v939
      %v941 = vpop.f32.mrb[0].mxu0
      %v942 = vadd.f32 %v845, %v941
      %v943 = vpop.f32.mrb[0].mxu0
      %944 = vmatprep.mubr.f32.mxu0 0.0
      %v945 = vand.u32 %v286, 4294901760
      %946 = vmatmul.mubr.f32.gmra.mrb[0].mxu0 %v945
      %v947 = vpop.f32.mrb[0].mxu0
      %v948 = vadd.f32 %v851, %v947
      %v949 = vpop.f32.mrb[0].mxu0
      %950 = vmatprep.mubr.f32.mxu0 0.0
      %v951 = vand.u32 %v289, 4294901760
      %952 = vmatmul.mubr.f32.gmra.mrb[0].mxu0 %v951
      %v953 = vpop.f32.mrb[0].mxu0
      %v954 = vadd.f32 %v857, %v953
      %v955 = vpop.f32.mrb[0].mxu0
      %956 = vdwg.mxu0
      %957 = vst.msk [vmem:[%s176] sm:$0xff] %vm193, %v936
      %958 = vst.msk [vmem:[%s176 + $0x8] sm:$0xff] %vm193, %v942
      %959 = vst.msk [vmem:[%s176 + $0x10] sm:$0xff] %vm193, %v948
      %960 = vst.msk [vmem:[%s176 + $0x18] sm:$0xff] %vm193, %v954
      %v961 = vlaneseq
      %v962 = vshrl.u32 %v961, 7
      %v963 = vsub.s32 1, %v962
      %v964 = vrot.slane %v182, %v963
      %vm965 = vcmp.eq.s32.totalorder %v964, %v242
      %vm966 = vcmp.eq.s32.totalorder %v964, %v243
      %vm967 = vcmp.eq.s32.totalorder %v964, %v244
      %vm968 = vcmp.eq.s32.totalorder %v964, %v245
      %vm969 = vcmp.eq.s32.totalorder %v964, %v246
      %vm970 = vcmp.eq.s32.totalorder %v964, %v247
      %vm971 = vcmp.eq.s32.totalorder %v964, %v248
      %vm972 = vcmp.eq.s32.totalorder %v964, %v249
      %v973 = vsel %vm965, 1, 0
      %v974 = vsel %vm966, 1, 0
      %v975 = vsel %vm967, 1, 0
      %v976 = vsel %vm968, 1, 0
      %v977 = vsel %vm969, 1, 0
      %v978 = vsel %vm970, 1, 0
      %v979 = vsel %vm971, 1, 0
      %v980 = vsel %vm972, 1, 0
      %v981 = vcvt.s32.f32 %v973
      %v982 = vcvt.s32.f32 %v974
      %v983 = vcvt.s32.f32 %v975
      %v984 = vcvt.s32.f32 %v976
      %v985 = vcvt.s32.f32 %v977
      %v986 = vcvt.s32.f32 %v978
      %v987 = vcvt.s32.f32 %v979
      %v988 = vcvt.s32.f32 %v980
      %989 = vmatprep.subr.mxu0 0.0
      %v990 = vand.u32 %v981, 4294901760
      %991 = vmatpush1.msra.mxu0 %v990
      %992 = vmatprep.subr.mxu0 0.0
      %v993 = vand.u32 %v982, 4294901760
      %994 = vmatpush1.msra.mxu0 %v993
      %995 = vmatprep.subr.mxu0 0.0
      %v996 = vand.u32 %v983, 4294901760
      %997 = vmatpush1.msra.mxu0 %v996
      %998 = vmatprep.subr.mxu0 0.0
      %v999 = vand.u32 %v984, 4294901760
      %1000 = vmatpush1.msra.mxu0 %v999
      %1001 = vmatprep.subr.mxu0 0.0
      %v1002 = vand.u32 %v985, 4294901760
      %1003 = vmatpush1.msra.mxu0 %v1002
      %1004 = vmatprep.subr.mxu0 0.0
      %v1005 = vand.u32 %v986, 4294901760
      %1006 = vmatpush1.msra.mxu0 %v1005
      %1007 = vmatprep.subr.mxu0 0.0
      %v1008 = vand.u32 %v987, 4294901760
      %1009 = vmatpush1.msra.mxu0 %v1008
      %1010 = vmatprep.subr.mxu0 0.0
      %v1011 = vand.u32 %v988, 4294901760
      %1012 = vmatpush1.msra.mxu0 %v1011
      %1013 = vmatprep.subr.mxu0 0.0
      %1014 = vmatpush1.msra.mxu0 0.0
      %1015 = vmatprep.subr.mxu0 0.0
      %1016 = vmatpush1.msra.mxu0 0.0
      %1017 = vmatprep.subr.mxu0 0.0
      %1018 = vmatpush1.msra.mxu0 0.0
      %1019 = vmatprep.subr.mxu0 0.0
      %1020 = vmatpush1.msra.mxu0 0.0
      %1021 = vmatprep.subr.mxu0 0.0
      %1022 = vmatpush1.msra.mxu0 0.0
      %1023 = vmatprep.subr.mxu0 0.0
      %1024 = vmatpush1.msra.mxu0 0.0
      %1025 = vmatprep.subr.mxu0 0.0
      %1026 = vmatpush1.msra.mxu0 0.0
      %1027 = vmatprep.subr.mxu0 0.0
      %1028 = vmatpush1.msra.mxu0 0.0
      %1029 = vmatprep.subr.mxu0 0.0
      %1030 = vmatpush1.msra.mxu0 0.0
      %1031 = vmatprep.subr.mxu0 0.0
      %1032 = vmatpush1.msra.mxu0 0.0
      %1033 = vmatprep.subr.mxu0 0.0
      %1034 = vmatpush1.msra.mxu0 0.0
      %1035 = vmatprep.subr.mxu0 0.0
      %1036 = vmatpush1.msra.mxu0 0.0
      %1037 = vmatprep.subr.mxu0 0.0
      %1038 = vmatpush1.msra.mxu0 0.0
      %1039 = vmatprep.subr.mxu0 0.0
      %1040 = vmatpush1.msra.mxu0 0.0
      %1041 = vmatprep.subr.mxu0 0.0
      %1042 = vmatpush1.msra.mxu0 0.0
      %1043 = vmatprep.subr.mxu0 0.0
      %1044 = vmatpush1.msra.mxu0 0.0
      %1045 = vmatprep.subr.mxu0 0.0
      %1046 = vmatpush1.msra.mxu0 0.0
      %1047 = vmatprep.subr.mxu0 0.0
      %1048 = vmatpush1.msra.mxu0 0.0
      %1049 = vmatprep.subr.mxu0 0.0
      %1050 = vmatpush1.msra.mxu0 0.0
      %1051 = vmatprep.subr.mxu0 0.0
      %1052 = vmatpush1.msra.mxu0 0.0
      %1053 = vmatprep.subr.mxu0 0.0
      %1054 = vmatpush1.msra.mxu0 0.0
      %1055 = vmatprep.subr.mxu0 0.0
      %1056 = vmatpush1.msra.mxu0 0.0
      %1057 = vmatprep.subr.mxu0 0.0
      %1058 = vmatpush1.msra.mxu0 0.0
      %1059 = vmatprep.subr.mxu0 0.0
      %1060 = vmatpush1.msra.mxu0 0.0
      %1061 = vmatprep.mubr.f32.mxu0 0.0
      %v1062 = vand.u32 %v280, 4294901760
      %v1063 = vsub.f32 %v280, %v1062
      %v1064 = vand.u32 %v1063, 4294901760
      %v1065 = vsub.f32 %v1063, %v1064
      %v1066 = vand.u32 %v1065, 4294901760
      %1067 = vmatmul.mubr.f32.gmra.mrb[0].mxu0 %v1066
      %v1068 = vpop.f32.mrb[0].mxu0
      %v1069 = vadd.f32 0.0, %v1068
      %v1070 = vpop.f32.mrb[0].mxu0
      %1071 = vmatprep.mubr.f32.mxu0 0.0
      %v1072 = vand.u32 %v283, 4294901760
      %v1073 = vsub.f32 %v283, %v1072
      %v1074 = vand.u32 %v1073, 4294901760
      %v1075 = vsub.f32 %v1073, %v1074
      %v1076 = vand.u32 %v1075, 4294901760
      %1077 = vmatmul.mubr.f32.gmra.mrb[0].mxu0 %v1076
      %v1078 = vpop.f32.mrb[0].mxu0
      %v1079 = vadd.f32 0.0, %v1078
      %v1080 = vpop.f32.mrb[0].mxu0
      %1081 = vmatprep.mubr.f32.mxu0 0.0
      %v1082 = vand.u32 %v286, 4294901760
      %v1083 = vsub.f32 %v286, %v1082
      %v1084 = vand.u32 %v1083, 4294901760
      %v1085 = vsub.f32 %v1083, %v1084
      %v1086 = vand.u32 %v1085, 4294901760
      %1087 = vmatmul.mubr.f32.gmra.mrb[0].mxu0 %v1086
      %v1088 = vpop.f32.mrb[0].mxu0
      %v1089 = vadd.f32 0.0, %v1088
      %v1090 = vpop.f32.mrb[0].mxu0
      %1091 = vmatprep.mubr.f32.mxu0 0.0
      %v1092 = vand.u32 %v289, 4294901760
      %v1093 = vsub.f32 %v289, %v1092
      %v1094 = vand.u32 %v1093, 4294901760
      %v1095 = vsub.f32 %v1093, %v1094
      %v1096 = vand.u32 %v1095, 4294901760
      %1097 = vmatmul.mubr.f32.gmra.mrb[0].mxu0 %v1096
      %v1098 = vpop.f32.mrb[0].mxu0
      %v1099 = vadd.f32 0.0, %v1098
      %v1100 = vpop.f32.mrb[0].mxu0
      %1101 = vdwg.mxu0
      %1102 = vmatprep.subr.mxu0 0.0
      %v1103 = vand.u32 %v981, 4294901760
      %v1104 = vsub.f32 %v981, %v1103
      %v1105 = vand.u32 %v1104, 4294901760
      %v1106 = vsub.f32 %v1104, %v1105
      %v1107 = vand.u32 %v1106, 4294901760
      %1108 = vmatpush1.msra.mxu0 %v1107
      %1109 = vmatprep.subr.mxu0 0.0
      %v1110 = vand.u32 %v982, 4294901760
      %v1111 = vsub.f32 %v982, %v1110
      %v1112 = vand.u32 %v1111, 4294901760
      %v1113 = vsub.f32 %v1111, %v1112
      %v1114 = vand.u32 %v1113, 4294901760
      %1115 = vmatpush1.msra.mxu0 %v1114
      %1116 = vmatprep.subr.mxu0 0.0
      %v1117 = vand.u32 %v983, 4294901760
      %v1118 = vsub.f32 %v983, %v1117
      %v1119 = vand.u32 %v1118, 4294901760
      %v1120 = vsub.f32 %v1118, %v1119
      %v1121 = vand.u32 %v1120, 4294901760
      %1122 = vmatpush1.msra.mxu0 %v1121
      %1123 = vmatprep.subr.mxu0 0.0
      %v1124 = vand.u32 %v984, 4294901760
      %v1125 = vsub.f32 %v984, %v1124
      %v1126 = vand.u32 %v1125, 4294901760
      %v1127 = vsub.f32 %v1125, %v1126
      %v1128 = vand.u32 %v1127, 4294901760
      %1129 = vmatpush1.msra.mxu0 %v1128
      %1130 = vmatprep.subr.mxu0 0.0
      %v1131 = vand.u32 %v985, 4294901760
      %v1132 = vsub.f32 %v985, %v1131
      %v1133 = vand.u32 %v1132, 4294901760
      %v1134 = vsub.f32 %v1132, %v1133
      %v1135 = vand.u32 %v1134, 4294901760
      %1136 = vmatpush1.msra.mxu0 %v1135
      %1137 = vmatprep.subr.mxu0 0.0
      %v1138 = vand.u32 %v986, 4294901760
      %v1139 = vsub.f32 %v986, %v1138
      %v1140 = vand.u32 %v1139, 4294901760
      %v1141 = vsub.f32 %v1139, %v1140
      %v1142 = vand.u32 %v1141, 4294901760
      %1143 = vmatpush1.msra.mxu0 %v1142
      %1144 = vmatprep.subr.mxu0 0.0
      %v1145 = vand.u32 %v987, 4294901760
      %v1146 = vsub.f32 %v987, %v1145
      %v1147 = vand.u32 %v1146, 4294901760
      %v1148 = vsub.f32 %v1146, %v1147
      %v1149 = vand.u32 %v1148, 4294901760
      %1150 = vmatpush1.msra.mxu0 %v1149
      %1151 = vmatprep.subr.mxu0 0.0
      %v1152 = vand.u32 %v988, 4294901760
      %v1153 = vsub.f32 %v988, %v1152
      %v1154 = vand.u32 %v1153, 4294901760
      %v1155 = vsub.f32 %v1153, %v1154
      %v1156 = vand.u32 %v1155, 4294901760
      %1157 = vmatpush1.msra.mxu0 %v1156
      %1158 = vmatprep.subr.mxu0 0.0
      %1159 = vmatpush1.msra.mxu0 0.0
      %1160 = vmatprep.subr.mxu0 0.0
      %1161 = vmatpush1.msra.mxu0 0.0
      %1162 = vmatprep.subr.mxu0 0.0
      %1163 = vmatpush1.msra.mxu0 0.0
      %1164 = vmatprep.subr.mxu0 0.0
      %1165 = vmatpush1.msra.mxu0 0.0
      %1166 = vmatprep.subr.mxu0 0.0
      %1167 = vmatpush1.msra.mxu0 0.0
      %1168 = vmatprep.subr.mxu0 0.0
      %1169 = vmatpush1.msra.mxu0 0.0
      %1170 = vmatprep.subr.mxu0 0.0
      %1171 = vmatpush1.msra.mxu0 0.0
      %1172 = vmatprep.subr.mxu0 0.0
      %1173 = vmatpush1.msra.mxu0 0.0
      %1174 = vmatprep.subr.mxu0 0.0
      %1175 = vmatpush1.msra.mxu0 0.0
      %1176 = vmatprep.subr.mxu0 0.0
      %1177 = vmatpush1.msra.mxu0 0.0
      %1178 = vmatprep.subr.mxu0 0.0
      %1179 = vmatpush1.msra.mxu0 0.0
      %1180 = vmatprep.subr.mxu0 0.0
      %1181 = vmatpush1.msra.mxu0 0.0
      %1182 = vmatprep.subr.mxu0 0.0
      %1183 = vmatpush1.msra.mxu0 0.0
      %1184 = vmatprep.subr.mxu0 0.0
      %1185 = vmatpush1.msra.mxu0 0.0
      %1186 = vmatprep.subr.mxu0 0.0
      %1187 = vmatpush1.msra.mxu0 0.0
      %1188 = vmatprep.subr.mxu0 0.0
      %1189 = vmatpush1.msra.mxu0 0.0
      %1190 = vmatprep.subr.mxu0 0.0
      %1191 = vmatpush1.msra.mxu0 0.0
      %1192 = vmatprep.subr.mxu0 0.0
      %1193 = vmatpush1.msra.mxu0 0.0
      %1194 = vmatprep.subr.mxu0 0.0
      %1195 = vmatpush1.msra.mxu0 0.0
      %1196 = vmatprep.subr.mxu0 0.0
      %1197 = vmatpush1.msra.mxu0 0.0
      %1198 = vmatprep.subr.mxu0 0.0
      %1199 = vmatpush1.msra.mxu0 0.0
      %1200 = vmatprep.subr.mxu0 0.0
      %1201 = vmatpush1.msra.mxu0 0.0
      %1202 = vmatprep.subr.mxu0 0.0
      %1203 = vmatpush1.msra.mxu0 0.0
      %1204 = vmatprep.subr.mxu0 0.0
      %1205 = vmatpush1.msra.mxu0 0.0
      %1206 = vmatprep.mubr.f32.mxu0 0.0
      %v1207 = vand.u32 %v280, 4294901760
      %1208 = vmatmul.mubr.f32.gmra.mrb[0].mxu0 %v1207
      %v1209 = vpop.f32.mrb[0].mxu0
      %v1210 = vadd.f32 %v1069, %v1209
      %v1211 = vpop.f32.mrb[0].mxu0
      %1212 = vmatprep.mubr.f32.mxu0 0.0
      %v1213 = vand.u32 %v283, 4294901760
      %1214 = vmatmul.mubr.f32.gmra.mrb[0].mxu0 %v1213
      %v1215 = vpop.f32.mrb[0].mxu0
      %v1216 = vadd.f32 %v1079, %v1215
      %v1217 = vpop.f32.mrb[0].mxu0
      %1218 = vmatprep.mubr.f32.mxu0 0.0
      %v1219 = vand.u32 %v286, 4294901760
      %1220 = vmatmul.mubr.f32.gmra.mrb[0].mxu0 %v1219
      %v1221 = vpop.f32.mrb[0].mxu0
      %v1222 = vadd.f32 %v1089, %v1221
      %v1223 = vpop.f32.mrb[0].mxu0
      %1224 = vmatprep.mubr.f32.mxu0 0.0
      %v1225 = vand.u32 %v289, 4294901760
      %1226 = vmatmul.mubr.f32.gmra.mrb[0].mxu0 %v1225
      %v1227 = vpop.f32.mrb[0].mxu0
      %v1228 = vadd.f32 %v1099, %v1227
      %v1229 = vpop.f32.mrb[0].mxu0
      %1230 = vdwg.mxu0
      %1231 = vmatprep.subr.mxu0 0.0
      %v1232 = vand.u32 %v981, 4294901760
      %v1233 = vsub.f32 %v981, %v1232
      %1234 = vmatpush1.msra.mxu0 %v1233
      %1235 = vmatprep.subr.mxu0 0.0
      %v1236 = vand.u32 %v982, 4294901760
      %v1237 = vsub.f32 %v982, %v1236
      %1238 = vmatpush1.msra.mxu0 %v1237
      %1239 = vmatprep.subr.mxu0 0.0
      %v1240 = vand.u32 %v983, 4294901760
      %v1241 = vsub.f32 %v983, %v1240
      %1242 = vmatpush1.msra.mxu0 %v1241
      %1243 = vmatprep.subr.mxu0 0.0
      %v1244 = vand.u32 %v984, 4294901760
      %v1245 = vsub.f32 %v984, %v1244
      %1246 = vmatpush1.msra.mxu0 %v1245
      %1247 = vmatprep.subr.mxu0 0.0
      %v1248 = vand.u32 %v985, 4294901760
      %v1249 = vsub.f32 %v985, %v1248
      %1250 = vmatpush1.msra.mxu0 %v1249
      %1251 = vmatprep.subr.mxu0 0.0
      %v1252 = vand.u32 %v986, 4294901760
      %v1253 = vsub.f32 %v986, %v1252
      %1254 = vmatpush1.msra.mxu0 %v1253
      %1255 = vmatprep.subr.mxu0 0.0
      %v1256 = vand.u32 %v987, 4294901760
      %v1257 = vsub.f32 %v987, %v1256
      %1258 = vmatpush1.msra.mxu0 %v1257
      %1259 = vmatprep.subr.mxu0 0.0
      %v1260 = vand.u32 %v988, 4294901760
      %v1261 = vsub.f32 %v988, %v1260
      %1262 = vmatpush1.msra.mxu0 %v1261
      %1263 = vmatprep.subr.mxu0 0.0
      %1264 = vmatpush1.msra.mxu0 0.0
      %1265 = vmatprep.subr.mxu0 0.0
      %1266 = vmatpush1.msra.mxu0 0.0
      %1267 = vmatprep.subr.mxu0 0.0
      %1268 = vmatpush1.msra.mxu0 0.0
      %1269 = vmatprep.subr.mxu0 0.0
      %1270 = vmatpush1.msra.mxu0 0.0
      %1271 = vmatprep.subr.mxu0 0.0
      %1272 = vmatpush1.msra.mxu0 0.0
      %1273 = vmatprep.subr.mxu0 0.0
      %1274 = vmatpush1.msra.mxu0 0.0
      %1275 = vmatprep.subr.mxu0 0.0
      %1276 = vmatpush1.msra.mxu0 0.0
      %1277 = vmatprep.subr.mxu0 0.0
      %1278 = vmatpush1.msra.mxu0 0.0
      %1279 = vmatprep.subr.mxu0 0.0
      %1280 = vmatpush1.msra.mxu0 0.0
      %1281 = vmatprep.subr.mxu0 0.0
      %1282 = vmatpush1.msra.mxu0 0.0
      %1283 = vmatprep.subr.mxu0 0.0
      %1284 = vmatpush1.msra.mxu0 0.0
      %1285 = vmatprep.subr.mxu0 0.0
      %1286 = vmatpush1.msra.mxu0 0.0
      %1287 = vmatprep.subr.mxu0 0.0
      %1288 = vmatpush1.msra.mxu0 0.0
      %1289 = vmatprep.subr.mxu0 0.0
      %1290 = vmatpush1.msra.mxu0 0.0
      %1291 = vmatprep.subr.mxu0 0.0
      %1292 = vmatpush1.msra.mxu0 0.0
      %1293 = vmatprep.subr.mxu0 0.0
      %1294 = vmatpush1.msra.mxu0 0.0
      %1295 = vmatprep.subr.mxu0 0.0
      %1296 = vmatpush1.msra.mxu0 0.0
      %1297 = vmatprep.subr.mxu0 0.0
      %1298 = vmatpush1.msra.mxu0 0.0
      %1299 = vmatprep.subr.mxu0 0.0
      %1300 = vmatpush1.msra.mxu0 0.0
      %1301 = vmatprep.subr.mxu0 0.0
      %1302 = vmatpush1.msra.mxu0 0.0
      %1303 = vmatprep.subr.mxu0 0.0
      %1304 = vmatpush1.msra.mxu0 0.0
      %1305 = vmatprep.subr.mxu0 0.0
      %1306 = vmatpush1.msra.mxu0 0.0
      %1307 = vmatprep.subr.mxu0 0.0
      %1308 = vmatpush1.msra.mxu0 0.0
      %1309 = vmatprep.subr.mxu0 0.0
      %1310 = vmatpush1.msra.mxu0 0.0
      %1311 = vmatprep.mubr.f32.mxu0 0.0
      %v1312 = vand.u32 %v280, 4294901760
      %v1313 = vsub.f32 %v280, %v1312
      %1314 = vmatmul.mubr.f32.gmra.mrb[0].mxu0 %v1313
      %v1315 = vpop.f32.mrb[0].mxu0
      %v1316 = vadd.f32 %v1210, %v1315
      %v1317 = vpop.f32.mrb[0].mxu0
      %1318 = vmatprep.mubr.f32.mxu0 0.0
      %v1319 = vand.u32 %v283, 4294901760
      %v1320 = vsub.f32 %v283, %v1319
      %1321 = vmatmul.mubr.f32.gmra.mrb[0].mxu0 %v1320
      %v1322 = vpop.f32.mrb[0].mxu0
      %v1323 = vadd.f32 %v1216, %v1322
      %v1324 = vpop.f32.mrb[0].mxu0
      %1325 = vmatprep.mubr.f32.mxu0 0.0
      %v1326 = vand.u32 %v286, 4294901760
      %v1327 = vsub.f32 %v286, %v1326
      %1328 = vmatmul.mubr.f32.gmra.mrb[0].mxu0 %v1327
      %v1329 = vpop.f32.mrb[0].mxu0
      %v1330 = vadd.f32 %v1222, %v1329
      %v1331 = vpop.f32.mrb[0].mxu0
      %1332 = vmatprep.mubr.f32.mxu0 0.0
      %v1333 = vand.u32 %v289, 4294901760
      %v1334 = vsub.f32 %v289, %v1333
      %1335 = vmatmul.mubr.f32.gmra.mrb[0].mxu0 %v1334
      %v1336 = vpop.f32.mrb[0].mxu0
      %v1337 = vadd.f32 %v1228, %v1336
      %v1338 = vpop.f32.mrb[0].mxu0
      %1339 = vdwg.mxu0
      %1340 = vmatprep.subr.mxu0 0.0
      %v1341 = vand.u32 %v981, 4294901760
      %1342 = vmatpush1.msra.mxu0 %v1341
      %1343 = vmatprep.subr.mxu0 0.0
      %v1344 = vand.u32 %v982, 4294901760
      %1345 = vmatpush1.msra.mxu0 %v1344
      %1346 = vmatprep.subr.mxu0 0.0
      %v1347 = vand.u32 %v983, 4294901760
      %1348 = vmatpush1.msra.mxu0 %v1347
      %1349 = vmatprep.subr.mxu0 0.0
      %v1350 = vand.u32 %v984, 4294901760
      %1351 = vmatpush1.msra.mxu0 %v1350
      %1352 = vmatprep.subr.mxu0 0.0
      %v1353 = vand.u32 %v985, 4294901760
      %1354 = vmatpush1.msra.mxu0 %v1353
      %1355 = vmatprep.subr.mxu0 0.0
      %v1356 = vand.u32 %v986, 4294901760
      %1357 = vmatpush1.msra.mxu0 %v1356
      %1358 = vmatprep.subr.mxu0 0.0
      %v1359 = vand.u32 %v987, 4294901760
      %1360 = vmatpush1.msra.mxu0 %v1359
      %1361 = vmatprep.subr.mxu0 0.0
      %v1362 = vand.u32 %v988, 4294901760
      %1363 = vmatpush1.msra.mxu0 %v1362
      %1364 = vmatprep.subr.mxu0 0.0
      %1365 = vmatpush1.msra.mxu0 0.0
      %1366 = vmatprep.subr.mxu0 0.0
      %1367 = vmatpush1.msra.mxu0 0.0
      %1368 = vmatprep.subr.mxu0 0.0
      %1369 = vmatpush1.msra.mxu0 0.0
      %1370 = vmatprep.subr.mxu0 0.0
      %1371 = vmatpush1.msra.mxu0 0.0
      %1372 = vmatprep.subr.mxu0 0.0
      %1373 = vmatpush1.msra.mxu0 0.0
      %1374 = vmatprep.subr.mxu0 0.0
      %1375 = vmatpush1.msra.mxu0 0.0
      %1376 = vmatprep.subr.mxu0 0.0
      %1377 = vmatpush1.msra.mxu0 0.0
      %1378 = vmatprep.subr.mxu0 0.0
      %1379 = vmatpush1.msra.mxu0 0.0
      %1380 = vmatprep.subr.mxu0 0.0
      %1381 = vmatpush1.msra.mxu0 0.0
      %1382 = vmatprep.subr.mxu0 0.0
      %1383 = vmatpush1.msra.mxu0 0.0
      %1384 = vmatprep.subr.mxu0 0.0
      %1385 = vmatpush1.msra.mxu0 0.0
      %1386 = vmatprep.subr.mxu0 0.0
      %1387 = vmatpush1.msra.mxu0 0.0
      %1388 = vmatprep.subr.mxu0 0.0
      %1389 = vmatpush1.msra.mxu0 0.0
      %1390 = vmatprep.subr.mxu0 0.0
      %1391 = vmatpush1.msra.mxu0 0.0
      %1392 = vmatprep.subr.mxu0 0.0
      %1393 = vmatpush1.msra.mxu0 0.0
      %1394 = vmatprep.subr.mxu0 0.0
      %1395 = vmatpush1.msra.mxu0 0.0
      %1396 = vmatprep.subr.mxu0 0.0
      %1397 = vmatpush1.msra.mxu0 0.0
      %1398 = vmatprep.subr.mxu0 0.0
      %1399 = vmatpush1.msra.mxu0 0.0
      %1400 = vmatprep.subr.mxu0 0.0
      %1401 = vmatpush1.msra.mxu0 0.0
      %1402 = vmatprep.subr.mxu0 0.0
      %1403 = vmatpush1.msra.mxu0 0.0
      %1404 = vmatprep.subr.mxu0 0.0
      %1405 = vmatpush1.msra.mxu0 0.0
      %1406 = vmatprep.subr.mxu0 0.0
      %1407 = vmatpush1.msra.mxu0 0.0
      %1408 = vmatprep.subr.mxu0 0.0
      %1409 = vmatpush1.msra.mxu0 0.0
      %1410 = vmatprep.subr.mxu0 0.0
      %1411 = vmatpush1.msra.mxu0 0.0
      %1412 = vmatprep.mubr.f32.mxu0 0.0
      %v1413 = vand.u32 %v280, 4294901760
      %v1414 = vsub.f32 %v280, %v1413
      %v1415 = vand.u32 %v1414, 4294901760
      %1416 = vmatmul.mubr.f32.gmra.mrb[0].mxu0 %v1415
      %v1417 = vpop.f32.mrb[0].mxu0
      %v1418 = vadd.f32 %v1316, %v1417
      %v1419 = vpop.f32.mrb[0].mxu0
      %1420 = vmatprep.mubr.f32.mxu0 0.0
      %v1421 = vand.u32 %v283, 4294901760
      %v1422 = vsub.f32 %v283, %v1421
      %v1423 = vand.u32 %v1422, 4294901760
      %1424 = vmatmul.mubr.f32.gmra.mrb[0].mxu0 %v1423
      %v1425 = vpop.f32.mrb[0].mxu0
      %v1426 = vadd.f32 %v1323, %v1425
      %v1427 = vpop.f32.mrb[0].mxu0
      %1428 = vmatprep.mubr.f32.mxu0 0.0
      %v1429 = vand.u32 %v286, 4294901760
      %v1430 = vsub.f32 %v286, %v1429
      %v1431 = vand.u32 %v1430, 4294901760
      %1432 = vmatmul.mubr.f32.gmra.mrb[0].mxu0 %v1431
      %v1433 = vpop.f32.mrb[0].mxu0
      %v1434 = vadd.f32 %v1330, %v1433
      %v1435 = vpop.f32.mrb[0].mxu0
      %1436 = vmatprep.mubr.f32.mxu0 0.0
      %v1437 = vand.u32 %v289, 4294901760
      %v1438 = vsub.f32 %v289, %v1437
      %v1439 = vand.u32 %v1438, 4294901760
      %1440 = vmatmul.mubr.f32.gmra.mrb[0].mxu0 %v1439
      %v1441 = vpop.f32.mrb[0].mxu0
      %v1442 = vadd.f32 %v1337, %v1441
      %v1443 = vpop.f32.mrb[0].mxu0
      %1444 = vdwg.mxu0
      %1445 = vmatprep.subr.mxu0 0.0
      %v1446 = vand.u32 %v981, 4294901760
      %v1447 = vsub.f32 %v981, %v1446
      %v1448 = vand.u32 %v1447, 4294901760
      %1449 = vmatpush1.msra.mxu0 %v1448
      %1450 = vmatprep.subr.mxu0 0.0
      %v1451 = vand.u32 %v982, 4294901760
      %v1452 = vsub.f32 %v982, %v1451
      %v1453 = vand.u32 %v1452, 4294901760
      %1454 = vmatpush1.msra.mxu0 %v1453
      %1455 = vmatprep.subr.mxu0 0.0
      %v1456 = vand.u32 %v983, 4294901760
      %v1457 = vsub.f32 %v983, %v1456
      %v1458 = vand.u32 %v1457, 4294901760
      %1459 = vmatpush1.msra.mxu0 %v1458
      %1460 = vmatprep.subr.mxu0 0.0
      %v1461 = vand.u32 %v984, 4294901760
      %v1462 = vsub.f32 %v984, %v1461
      %v1463 = vand.u32 %v1462, 4294901760
      %1464 = vmatpush1.msra.mxu0 %v1463
      %1465 = vmatprep.subr.mxu0 0.0
      %v1466 = vand.u32 %v985, 4294901760
      %v1467 = vsub.f32 %v985, %v1466
      %v1468 = vand.u32 %v1467, 4294901760
      %1469 = vmatpush1.msra.mxu0 %v1468
      %1470 = vmatprep.subr.mxu0 0.0
      %v1471 = vand.u32 %v986, 4294901760
      %v1472 = vsub.f32 %v986, %v1471
      %v1473 = vand.u32 %v1472, 4294901760
      %1474 = vmatpush1.msra.mxu0 %v1473
      %1475 = vmatprep.subr.mxu0 0.0
      %v1476 = vand.u32 %v987, 4294901760
      %v1477 = vsub.f32 %v987, %v1476
      %v1478 = vand.u32 %v1477, 4294901760
      %1479 = vmatpush1.msra.mxu0 %v1478
      %1480 = vmatprep.subr.mxu0 0.0
      %v1481 = vand.u32 %v988, 4294901760
      %v1482 = vsub.f32 %v988, %v1481
      %v1483 = vand.u32 %v1482, 4294901760
      %1484 = vmatpush1.msra.mxu0 %v1483
      %1485 = vmatprep.subr.mxu0 0.0
      %1486 = vmatpush1.msra.mxu0 0.0
      %1487 = vmatprep.subr.mxu0 0.0
      %1488 = vmatpush1.msra.mxu0 0.0
      %1489 = vmatprep.subr.mxu0 0.0
      %1490 = vmatpush1.msra.mxu0 0.0
      %1491 = vmatprep.subr.mxu0 0.0
      %1492 = vmatpush1.msra.mxu0 0.0
      %1493 = vmatprep.subr.mxu0 0.0
      %1494 = vmatpush1.msra.mxu0 0.0
      %1495 = vmatprep.subr.mxu0 0.0
      %1496 = vmatpush1.msra.mxu0 0.0
      %1497 = vmatprep.subr.mxu0 0.0
      %1498 = vmatpush1.msra.mxu0 0.0
      %1499 = vmatprep.subr.mxu0 0.0
      %1500 = vmatpush1.msra.mxu0 0.0
      %1501 = vmatprep.subr.mxu0 0.0
      %1502 = vmatpush1.msra.mxu0 0.0
      %1503 = vmatprep.subr.mxu0 0.0
      %1504 = vmatpush1.msra.mxu0 0.0
      %1505 = vmatprep.subr.mxu0 0.0
      %1506 = vmatpush1.msra.mxu0 0.0
      %1507 = vmatprep.subr.mxu0 0.0
      %1508 = vmatpush1.msra.mxu0 0.0
      %1509 = vmatprep.subr.mxu0 0.0
      %1510 = vmatpush1.msra.mxu0 0.0
      %1511 = vmatprep.subr.mxu0 0.0
      %1512 = vmatpush1.msra.mxu0 0.0
      %1513 = vmatprep.subr.mxu0 0.0
      %1514 = vmatpush1.msra.mxu0 0.0
      %1515 = vmatprep.subr.mxu0 0.0
      %1516 = vmatpush1.msra.mxu0 0.0
      %1517 = vmatprep.subr.mxu0 0.0
      %1518 = vmatpush1.msra.mxu0 0.0
      %1519 = vmatprep.subr.mxu0 0.0
      %1520 = vmatpush1.msra.mxu0 0.0
      %1521 = vmatprep.subr.mxu0 0.0
      %1522 = vmatpush1.msra.mxu0 0.0
      %1523 = vmatprep.subr.mxu0 0.0
      %1524 = vmatpush1.msra.mxu0 0.0
      %1525 = vmatprep.subr.mxu0 0.0
      %1526 = vmatpush1.msra.mxu0 0.0
      %1527 = vmatprep.subr.mxu0 0.0
      %1528 = vmatpush1.msra.mxu0 0.0
      %1529 = vmatprep.subr.mxu0 0.0
      %1530 = vmatpush1.msra.mxu0 0.0
      %1531 = vmatprep.subr.mxu0 0.0
      %1532 = vmatpush1.msra.mxu0 0.0
      %1533 = vmatprep.mubr.f32.mxu0 0.0
      %v1534 = vand.u32 %v280, 4294901760
      %1535 = vmatmul.mubr.f32.gmra.mrb[0].mxu0 %v1534
      %v1536 = vpop.f32.mrb[0].mxu0
      %v1537 = vadd.f32 %v1418, %v1536
      %v1538 = vpop.f32.mrb[0].mxu0
      %1539 = vmatprep.mubr.f32.mxu0 0.0
      %v1540 = vand.u32 %v283, 4294901760
      %1541 = vmatmul.mubr.f32.gmra.mrb[0].mxu0 %v1540
      %v1542 = vpop.f32.mrb[0].mxu0
      %v1543 = vadd.f32 %v1426, %v1542
      %v1544 = vpop.f32.mrb[0].mxu0
      %1545 = vmatprep.mubr.f32.mxu0 0.0
      %v1546 = vand.u32 %v286, 4294901760
      %1547 = vmatmul.mubr.f32.gmra.mrb[0].mxu0 %v1546
      %v1548 = vpop.f32.mrb[0].mxu0
      %v1549 = vadd.f32 %v1434, %v1548
      %v1550 = vpop.f32.mrb[0].mxu0
      %1551 = vmatprep.mubr.f32.mxu0 0.0
      %v1552 = vand.u32 %v289, 4294901760
      %1553 = vmatmul.mubr.f32.gmra.mrb[0].mxu0 %v1552
      %v1554 = vpop.f32.mrb[0].mxu0
      %v1555 = vadd.f32 %v1442, %v1554
      %v1556 = vpop.f32.mrb[0].mxu0
      %1557 = vdwg.mxu0
      %1558 = vmatprep.subr.mxu0 0.0
      %v1559 = vand.u32 %v981, 4294901760
      %1560 = vmatpush1.msra.mxu0 %v1559
      %1561 = vmatprep.subr.mxu0 0.0
      %v1562 = vand.u32 %v982, 4294901760
      %1563 = vmatpush1.msra.mxu0 %v1562
      %1564 = vmatprep.subr.mxu0 0.0
      %v1565 = vand.u32 %v983, 4294901760
      %1566 = vmatpush1.msra.mxu0 %v1565
      %1567 = vmatprep.subr.mxu0 0.0
      %v1568 = vand.u32 %v984, 4294901760
      %1569 = vmatpush1.msra.mxu0 %v1568
      %1570 = vmatprep.subr.mxu0 0.0
      %v1571 = vand.u32 %v985, 4294901760
      %1572 = vmatpush1.msra.mxu0 %v1571
      %1573 = vmatprep.subr.mxu0 0.0
      %v1574 = vand.u32 %v986, 4294901760
      %1575 = vmatpush1.msra.mxu0 %v1574
      %1576 = vmatprep.subr.mxu0 0.0
      %v1577 = vand.u32 %v987, 4294901760
      %1578 = vmatpush1.msra.mxu0 %v1577
      %1579 = vmatprep.subr.mxu0 0.0
      %v1580 = vand.u32 %v988, 4294901760
      %1581 = vmatpush1.msra.mxu0 %v1580
      %1582 = vmatprep.subr.mxu0 0.0
      %1583 = vmatpush1.msra.mxu0 0.0
      %1584 = vmatprep.subr.mxu0 0.0
      %1585 = vmatpush1.msra.mxu0 0.0
      %1586 = vmatprep.subr.mxu0 0.0
      %1587 = vmatpush1.msra.mxu0 0.0
      %1588 = vmatprep.subr.mxu0 0.0
      %1589 = vmatpush1.msra.mxu0 0.0
      %1590 = vmatprep.subr.mxu0 0.0
      %1591 = vmatpush1.msra.mxu0 0.0
      %1592 = vmatprep.subr.mxu0 0.0
      %1593 = vmatpush1.msra.mxu0 0.0
      %1594 = vmatprep.subr.mxu0 0.0
      %1595 = vmatpush1.msra.mxu0 0.0
      %1596 = vmatprep.subr.mxu0 0.0
      %1597 = vmatpush1.msra.mxu0 0.0
      %1598 = vmatprep.subr.mxu0 0.0
      %1599 = vmatpush1.msra.mxu0 0.0
      %1600 = vmatprep.subr.mxu0 0.0
      %1601 = vmatpush1.msra.mxu0 0.0
      %1602 = vmatprep.subr.mxu0 0.0
      %1603 = vmatpush1.msra.mxu0 0.0
      %1604 = vmatprep.subr.mxu0 0.0
      %1605 = vmatpush1.msra.mxu0 0.0
      %1606 = vmatprep.subr.mxu0 0.0
      %1607 = vmatpush1.msra.mxu0 0.0
      %1608 = vmatprep.subr.mxu0 0.0
      %1609 = vmatpush1.msra.mxu0 0.0
      %1610 = vmatprep.subr.mxu0 0.0
      %1611 = vmatpush1.msra.mxu0 0.0
      %1612 = vmatprep.subr.mxu0 0.0
      %1613 = vmatpush1.msra.mxu0 0.0
      %1614 = vmatprep.subr.mxu0 0.0
      %1615 = vmatpush1.msra.mxu0 0.0
      %1616 = vmatprep.subr.mxu0 0.0
      %1617 = vmatpush1.msra.mxu0 0.0
      %1618 = vmatprep.subr.mxu0 0.0
      %1619 = vmatpush1.msra.mxu0 0.0
      %1620 = vmatprep.subr.mxu0 0.0
      %1621 = vmatpush1.msra.mxu0 0.0
      %1622 = vmatprep.subr.mxu0 0.0
      %1623 = vmatpush1.msra.mxu0 0.0
      %1624 = vmatprep.subr.mxu0 0.0
      %1625 = vmatpush1.msra.mxu0 0.0
      %1626 = vmatprep.subr.mxu0 0.0
      %1627 = vmatpush1.msra.mxu0 0.0
      %1628 = vmatprep.subr.mxu0 0.0
      %1629 = vmatpush1.msra.mxu0 0.0
      %1630 = vmatprep.mubr.f32.mxu0 0.0
      %v1631 = vand.u32 %v280, 4294901760
      %1632 = vmatmul.mubr.f32.gmra.mrb[0].mxu0 %v1631
      %v1633 = vpop.f32.mrb[0].mxu0
      %v1634 = vadd.f32 %v1537, %v1633
      %v1635 = vpop.f32.mrb[0].mxu0
      %1636 = vmatprep.mubr.f32.mxu0 0.0
      %v1637 = vand.u32 %v283, 4294901760
      %1638 = vmatmul.mubr.f32.gmra.mrb[0].mxu0 %v1637
      %v1639 = vpop.f32.mrb[0].mxu0
      %v1640 = vadd.f32 %v1543, %v1639
      %v1641 = vpop.f32.mrb[0].mxu0
      %1642 = vmatprep.mubr.f32.mxu0 0.0
      %v1643 = vand.u32 %v286, 4294901760
      %1644 = vmatmul.mubr.f32.gmra.mrb[0].mxu0 %v1643
      %v1645 = vpop.f32.mrb[0].mxu0
      %v1646 = vadd.f32 %v1549, %v1645
      %v1647 = vpop.f32.mrb[0].mxu0
      %1648 = vmatprep.mubr.f32.mxu0 0.0
      %v1649 = vand.u32 %v289, 4294901760
      %1650 = vmatmul.mubr.f32.gmra.mrb[0].mxu0 %v1649
      %v1651 = vpop.f32.mrb[0].mxu0
      %v1652 = vadd.f32 %v1555, %v1651
      %v1653 = vpop.f32.mrb[0].mxu0
      %1654 = vdwg.mxu0
      %s1655 = scalar_lea.vmem %s176, 32
      %1656 = vst.msk [vmem:[%s1655] sm:$0xff] %vm193, %v1634
      %1657 = vst.msk [vmem:[%s1655 + $0x8] sm:$0xff] %vm193, %v1640
      %1658 = vst.msk [vmem:[%s1655 + $0x10] sm:$0xff] %vm193, %v1646
      %1659 = vst.msk [vmem:[%s1655 + $0x18] sm:$0xff] %vm193, %v1652
      %v1660 = vlaneseq
      %v1661 = vshrl.u32 %v1660, 7
      %v1662 = vsub.s32 2, %v1661
      %v1663 = vrot.slane %v182, %v1662
      %vm1664 = vcmp.eq.s32.totalorder %v1663, %v242
      %vm1665 = vcmp.eq.s32.totalorder %v1663, %v243
      %vm1666 = vcmp.eq.s32.totalorder %v1663, %v244
      %vm1667 = vcmp.eq.s32.totalorder %v1663, %v245
      %vm1668 = vcmp.eq.s32.totalorder %v1663, %v246
      %vm1669 = vcmp.eq.s32.totalorder %v1663, %v247
      %vm1670 = vcmp.eq.s32.totalorder %v1663, %v248
      %vm1671 = vcmp.eq.s32.totalorder %v1663, %v249
      %v1672 = vsel %vm1664, 1, 0
      %v1673 = vsel %vm1665, 1, 0
      %v1674 = vsel %vm1666, 1, 0
      %v1675 = vsel %vm1667, 1, 0
      %v1676 = vsel %vm1668, 1, 0
      %v1677 = vsel %vm1669, 1, 0
      %v1678 = vsel %vm1670, 1, 0
      %v1679 = vsel %vm1671, 1, 0
      %v1680 = vcvt.s32.f32 %v1672
      %v1681 = vcvt.s32.f32 %v1673
      %v1682 = vcvt.s32.f32 %v1674
      %v1683 = vcvt.s32.f32 %v1675
      %v1684 = vcvt.s32.f32 %v1676
      %v1685 = vcvt.s32.f32 %v1677
      %v1686 = vcvt.s32.f32 %v1678
      %v1687 = vcvt.s32.f32 %v1679
      %1688 = vmatprep.subr.mxu0 0.0
      %v1689 = vand.u32 %v1680, 4294901760
      %1690 = vmatpush1.msra.mxu0 %v1689
      %1691 = vmatprep.subr.mxu0 0.0
      %v1692 = vand.u32 %v1681, 4294901760
      %1693 = vmatpush1.msra.mxu0 %v1692
      %1694 = vmatprep.subr.mxu0 0.0
      %v1695 = vand.u32 %v1682, 4294901760
      %1696 = vmatpush1.msra.mxu0 %v1695
      %1697 = vmatprep.subr.mxu0 0.0
      %v1698 = vand.u32 %v1683, 4294901760
      %1699 = vmatpush1.msra.mxu0 %v1698
      %1700 = vmatprep.subr.mxu0 0.0
      %v1701 = vand.u32 %v1684, 4294901760
      %1702 = vmatpush1.msra.mxu0 %v1701
      %1703 = vmatprep.subr.mxu0 0.0
      %v1704 = vand.u32 %v1685, 4294901760
      %1705 = vmatpush1.msra.mxu0 %v1704
      %1706 = vmatprep.subr.mxu0 0.0
      %v1707 = vand.u32 %v1686, 4294901760
      %1708 = vmatpush1.msra.mxu0 %v1707
      %1709 = vmatprep.subr.mxu0 0.0
      %v1710 = vand.u32 %v1687, 4294901760
      %1711 = vmatpush1.msra.mxu0 %v1710
      %1712 = vmatprep.subr.mxu0 0.0
      %1713 = vmatpush1.msra.mxu0 0.0
      %1714 = vmatprep.subr.mxu0 0.0
      %1715 = vmatpush1.msra.mxu0 0.0
      %1716 = vmatprep.subr.mxu0 0.0
      %1717 = vmatpush1.msra.mxu0 0.0
      %1718 = vmatprep.subr.mxu0 0.0
      %1719 = vmatpush1.msra.mxu0 0.0
      %1720 = vmatprep.subr.mxu0 0.0
      %1721 = vmatpush1.msra.mxu0 0.0
      %1722 = vmatprep.subr.mxu0 0.0
      %1723 = vmatpush1.msra.mxu0 0.0
      %1724 = vmatprep.subr.mxu0 0.0
      %1725 = vmatpush1.msra.mxu0 0.0
      %1726 = vmatprep.subr.mxu0 0.0
      %1727 = vmatpush1.msra.mxu0 0.0
      %1728 = vmatprep.subr.mxu0 0.0
      %1729 = vmatpush1.msra.mxu0 0.0
      %1730 = vmatprep.subr.mxu0 0.0
      %1731 = vmatpush1.msra.mxu0 0.0
      %1732 = vmatprep.subr.mxu0 0.0
      %1733 = vmatpush1.msra.mxu0 0.0
      %1734 = vmatprep.subr.mxu0 0.0
      %1735 = vmatpush1.msra.mxu0 0.0
      %1736 = vmatprep.subr.mxu0 0.0
      %1737 = vmatpush1.msra.mxu0 0.0
      %1738 = vmatprep.subr.mxu0 0.0
      %1739 = vmatpush1.msra.mxu0 0.0
      %1740 = vmatprep.subr.mxu0 0.0
      %1741 = vmatpush1.msra.mxu0 0.0
      %1742 = vmatprep.subr.mxu0 0.0
      %1743 = vmatpush1.msra.mxu0 0.0
      %1744 = vmatprep.subr.mxu0 0.0
      %1745 = vmatpush1.msra.mxu0 0.0
      %1746 = vmatprep.subr.mxu0 0.0
      %1747 = vmatpush1.msra.mxu0 0.0
      %1748 = vmatprep.subr.mxu0 0.0
      %1749 = vmatpush1.msra.mxu0 0.0
      %1750 = vmatprep.subr.mxu0 0.0
      %1751 = vmatpush1.msra.mxu0 0.0
      %1752 = vmatprep.subr.mxu0 0.0
      %1753 = vmatpush1.msra.mxu0 0.0
      %1754 = vmatprep.subr.mxu0 0.0
      %1755 = vmatpush1.msra.mxu0 0.0
      %1756 = vmatprep.subr.mxu0 0.0
      %1757 = vmatpush1.msra.mxu0 0.0
      %1758 = vmatprep.subr.mxu0 0.0
      %1759 = vmatpush1.msra.mxu0 0.0
      %1760 = vmatprep.mubr.f32.mxu0 0.0
      %v1761 = vand.u32 %v280, 4294901760
      %v1762 = vsub.f32 %v280, %v1761
      %v1763 = vand.u32 %v1762, 4294901760
      %v1764 = vsub.f32 %v1762, %v1763
      %v1765 = vand.u32 %v1764, 4294901760
      %1766 = vmatmul.mubr.f32.gmra.mrb[0].mxu0 %v1765
      %v1767 = vpop.f32.mrb[0].mxu0
      %v1768 = vadd.f32 0.0, %v1767
      %v1769 = vpop.f32.mrb[0].mxu0
      %1770 = vmatprep.mubr.f32.mxu0 0.0
      %v1771 = vand.u32 %v283, 4294901760
      %v1772 = vsub.f32 %v283, %v1771
      %v1773 = vand.u32 %v1772, 4294901760
      %v1774 = vsub.f32 %v1772, %v1773
      %v1775 = vand.u32 %v1774, 4294901760
      %1776 = vmatmul.mubr.f32.gmra.mrb[0].mxu0 %v1775
      %v1777 = vpop.f32.mrb[0].mxu0
      %v1778 = vadd.f32 0.0, %v1777
      %v1779 = vpop.f32.mrb[0].mxu0
      %1780 = vmatprep.mubr.f32.mxu0 0.0
      %v1781 = vand.u32 %v286, 4294901760
      %v1782 = vsub.f32 %v286, %v1781
      %v1783 = vand.u32 %v1782, 4294901760
      %v1784 = vsub.f32 %v1782, %v1783
      %v1785 = vand.u32 %v1784, 4294901760
      %1786 = vmatmul.mubr.f32.gmra.mrb[0].mxu0 %v1785
      %v1787 = vpop.f32.mrb[0].mxu0
      %v1788 = vadd.f32 0.0, %v1787
      %v1789 = vpop.f32.mrb[0].mxu0
      %1790 = vmatprep.mubr.f32.mxu0 0.0
      %v1791 = vand.u32 %v289, 4294901760
      %v1792 = vsub.f32 %v289, %v1791
      %v1793 = vand.u32 %v1792, 4294901760
      %v1794 = vsub.f32 %v1792, %v1793
      %v1795 = vand.u32 %v1794, 4294901760
      %1796 = vmatmul.mubr.f32.gmra.mrb[0].mxu0 %v1795
      %v1797 = vpop.f32.mrb[0].mxu0
      %v1798 = vadd.f32 0.0, %v1797
      %v1799 = vpop.f32.mrb[0].mxu0
      %1800 = vdwg.mxu0
      %1801 = vmatprep.subr.mxu0 0.0
      %v1802 = vand.u32 %v1680, 4294901760
      %v1803 = vsub.f32 %v1680, %v1802
      %v1804 = vand.u32 %v1803, 4294901760
      %v1805 = vsub.f32 %v1803, %v1804
      %v1806 = vand.u32 %v1805, 4294901760
      %1807 = vmatpush1.msra.mxu0 %v1806
      %1808 = vmatprep.subr.mxu0 0.0
      %v1809 = vand.u32 %v1681, 4294901760
      %v1810 = vsub.f32 %v1681, %v1809
      %v1811 = vand.u32 %v1810, 4294901760
      %v1812 = vsub.f32 %v1810, %v1811
      %v1813 = vand.u32 %v1812, 4294901760
      %1814 = vmatpush1.msra.mxu0 %v1813
      %1815 = vmatprep.subr.mxu0 0.0
      %v1816 = vand.u32 %v1682, 4294901760
      %v1817 = vsub.f32 %v1682, %v1816
      %v1818 = vand.u32 %v1817, 4294901760
      %v1819 = vsub.f32 %v1817, %v1818
      %v1820 = vand.u32 %v1819, 4294901760
      %1821 = vmatpush1.msra.mxu0 %v1820
      %1822 = vmatprep.subr.mxu0 0.0
      %v1823 = vand.u32 %v1683, 4294901760
      %v1824 = vsub.f32 %v1683, %v1823
      %v1825 = vand.u32 %v1824, 4294901760
      %v1826 = vsub.f32 %v1824, %v1825
      %v1827 = vand.u32 %v1826, 4294901760
      %1828 = vmatpush1.msra.mxu0 %v1827
      %1829 = vmatprep.subr.mxu0 0.0
      %v1830 = vand.u32 %v1684, 4294901760
      %v1831 = vsub.f32 %v1684, %v1830
      %v1832 = vand.u32 %v1831, 4294901760
      %v1833 = vsub.f32 %v1831, %v1832
      %v1834 = vand.u32 %v1833, 4294901760
      %1835 = vmatpush1.msra.mxu0 %v1834
      %1836 = vmatprep.subr.mxu0 0.0
      %v1837 = vand.u32 %v1685, 4294901760
      %v1838 = vsub.f32 %v1685, %v1837
      %v1839 = vand.u32 %v1838, 4294901760
      %v1840 = vsub.f32 %v1838, %v1839
      %v1841 = vand.u32 %v1840, 4294901760
      %1842 = vmatpush1.msra.mxu0 %v1841
      %1843 = vmatprep.subr.mxu0 0.0
      %v1844 = vand.u32 %v1686, 4294901760
      %v1845 = vsub.f32 %v1686, %v1844
      %v1846 = vand.u32 %v1845, 4294901760
      %v1847 = vsub.f32 %v1845, %v1846
      %v1848 = vand.u32 %v1847, 4294901760
      %1849 = vmatpush1.msra.mxu0 %v1848
      %1850 = vmatprep.subr.mxu0 0.0
      %v1851 = vand.u32 %v1687, 4294901760
      %v1852 = vsub.f32 %v1687, %v1851
      %v1853 = vand.u32 %v1852, 4294901760
      %v1854 = vsub.f32 %v1852, %v1853
      %v1855 = vand.u32 %v1854, 4294901760
      %1856 = vmatpush1.msra.mxu0 %v1855
      %1857 = vmatprep.subr.mxu0 0.0
      %1858 = vmatpush1.msra.mxu0 0.0
      %1859 = vmatprep.subr.mxu0 0.0
      %1860 = vmatpush1.msra.mxu0 0.0
      %1861 = vmatprep.subr.mxu0 0.0
      %1862 = vmatpush1.msra.mxu0 0.0
      %1863 = vmatprep.subr.mxu0 0.0
      %1864 = vmatpush1.msra.mxu0 0.0
      %1865 = vmatprep.subr.mxu0 0.0
      %1866 = vmatpush1.msra.mxu0 0.0
      %1867 = vmatprep.subr.mxu0 0.0
      %1868 = vmatpush1.msra.mxu0 0.0
      %1869 = vmatprep.subr.mxu0 0.0
      %1870 = vmatpush1.msra.mxu0 0.0
      %1871 = vmatprep.subr.mxu0 0.0
      %1872 = vmatpush1.msra.mxu0 0.0
      %1873 = vmatprep.subr.mxu0 0.0
      %1874 = vmatpush1.msra.mxu0 0.0
      %1875 = vmatprep.subr.mxu0 0.0
      %1876 = vmatpush1.msra.mxu0 0.0
      %1877 = vmatprep.subr.mxu0 0.0
      %1878 = vmatpush1.msra.mxu0 0.0
      %1879 = vmatprep.subr.mxu0 0.0
      %1880 = vmatpush1.msra.mxu0 0.0
      %1881 = vmatprep.subr.mxu0 0.0
      %1882 = vmatpush1.msra.mxu0 0.0
      %1883 = vmatprep.subr.mxu0 0.0
      %1884 = vmatpush1.msra.mxu0 0.0
      %1885 = vmatprep.subr.mxu0 0.0
      %1886 = vmatpush1.msra.mxu0 0.0
      %1887 = vmatprep.subr.mxu0 0.0
      %1888 = vmatpush1.msra.mxu0 0.0
      %1889 = vmatprep.subr.mxu0 0.0
      %1890 = vmatpush1.msra.mxu0 0.0
      %1891 = vmatprep.subr.mxu0 0.0
      %1892 = vmatpush1.msra.mxu0 0.0
      %1893 = vmatprep.subr.mxu0 0.0
      %1894 = vmatpush1.msra.mxu0 0.0
      %1895 = vmatprep.subr.mxu0 0.0
      %1896 = vmatpush1.msra.mxu0 0.0
      %1897 = vmatprep.subr.mxu0 0.0
      %1898 = vmatpush1.msra.mxu0 0.0
      %1899 = vmatprep.subr.mxu0 0.0
      %1900 = vmatpush1.msra.mxu0 0.0
      %1901 = vmatprep.subr.mxu0 0.0
      %1902 = vmatpush1.msra.mxu0 0.0
      %1903 = vmatprep.subr.mxu0 0.0
      %1904 = vmatpush1.msra.mxu0 0.0
      %1905 = vmatprep.mubr.f32.mxu0 0.0
      %v1906 = vand.u32 %v280, 4294901760
      %1907 = vmatmul.mubr.f32.gmra.mrb[0].mxu0 %v1906
      %v1908 = vpop.f32.mrb[0].mxu0
      %v1909 = vadd.f32 %v1768, %v1908
      %v1910 = vpop.f32.mrb[0].mxu0
      %1911 = vmatprep.mubr.f32.mxu0 0.0
      %v1912 = vand.u32 %v283, 4294901760
      %1913 = vmatmul.mubr.f32.gmra.mrb[0].mxu0 %v1912
      %v1914 = vpop.f32.mrb[0].mxu0
      %v1915 = vadd.f32 %v1778, %v1914
      %v1916 = vpop.f32.mrb[0].mxu0
      %1917 = vmatprep.mubr.f32.mxu0 0.0
      %v1918 = vand.u32 %v286, 4294901760
      %1919 = vmatmul.mubr.f32.gmra.mrb[0].mxu0 %v1918
      %v1920 = vpop.f32.mrb[0].mxu0
      %v1921 = vadd.f32 %v1788, %v1920
      %v1922 = vpop.f32.mrb[0].mxu0
      %1923 = vmatprep.mubr.f32.mxu0 0.0
      %v1924 = vand.u32 %v289, 4294901760
      %1925 = vmatmul.mubr.f32.gmra.mrb[0].mxu0 %v1924
      %v1926 = vpop.f32.mrb[0].mxu0
      %v1927 = vadd.f32 %v1798, %v1926
      %v1928 = vpop.f32.mrb[0].mxu0
      %1929 = vdwg.mxu0
      %1930 = vmatprep.subr.mxu0 0.0
      %v1931 = vand.u32 %v1680, 4294901760
      %v1932 = vsub.f32 %v1680, %v1931
      %1933 = vmatpush1.msra.mxu0 %v1932
      %1934 = vmatprep.subr.mxu0 0.0
      %v1935 = vand.u32 %v1681, 4294901760
      %v1936 = vsub.f32 %v1681, %v1935
      %1937 = vmatpush1.msra.mxu0 %v1936
      %1938 = vmatprep.subr.mxu0 0.0
      %v1939 = vand.u32 %v1682, 4294901760
      %v1940 = vsub.f32 %v1682, %v1939
      %1941 = vmatpush1.msra.mxu0 %v1940
      %1942 = vmatprep.subr.mxu0 0.0
      %v1943 = vand.u32 %v1683, 4294901760
      %v1944 = vsub.f32 %v1683, %v1943
      %1945 = vmatpush1.msra.mxu0 %v1944
      %1946 = vmatprep.subr.mxu0 0.0
      %v1947 = vand.u32 %v1684, 4294901760
      %v1948 = vsub.f32 %v1684, %v1947
      %1949 = vmatpush1.msra.mxu0 %v1948
      %1950 = vmatprep.subr.mxu0 0.0
      %v1951 = vand.u32 %v1685, 4294901760
      %v1952 = vsub.f32 %v1685, %v1951
      %1953 = vmatpush1.msra.mxu0 %v1952
      %1954 = vmatprep.subr.mxu0 0.0
      %v1955 = vand.u32 %v1686, 4294901760
      %v1956 = vsub.f32 %v1686, %v1955
      %1957 = vmatpush1.msra.mxu0 %v1956
      %1958 = vmatprep.subr.mxu0 0.0
      %v1959 = vand.u32 %v1687, 4294901760
      %v1960 = vsub.f32 %v1687, %v1959
      %1961 = vmatpush1.msra.mxu0 %v1960
      %1962 = vmatprep.subr.mxu0 0.0
      %1963 = vmatpush1.msra.mxu0 0.0
      %1964 = vmatprep.subr.mxu0 0.0
      %1965 = vmatpush1.msra.mxu0 0.0
      %1966 = vmatprep.subr.mxu0 0.0
      %1967 = vmatpush1.msra.mxu0 0.0
      %1968 = vmatprep.subr.mxu0 0.0
      %1969 = vmatpush1.msra.mxu0 0.0
      %1970 = vmatprep.subr.mxu0 0.0
      %1971 = vmatpush1.msra.mxu0 0.0
      %1972 = vmatprep.subr.mxu0 0.0
      %1973 = vmatpush1.msra.mxu0 0.0
      %1974 = vmatprep.subr.mxu0 0.0
      %1975 = vmatpush1.msra.mxu0 0.0
      %1976 = vmatprep.subr.mxu0 0.0
      %1977 = vmatpush1.msra.mxu0 0.0
      %1978 = vmatprep.subr.mxu0 0.0
      %1979 = vmatpush1.msra.mxu0 0.0
      %1980 = vmatprep.subr.mxu0 0.0
      %1981 = vmatpush1.msra.mxu0 0.0
      %1982 = vmatprep.subr.mxu0 0.0
      %1983 = vmatpush1.msra.mxu0 0.0
      %1984 = vmatprep.subr.mxu0 0.0
      %1985 = vmatpush1.msra.mxu0 0.0
      %1986 = vmatprep.subr.mxu0 0.0
      %1987 = vmatpush1.msra.mxu0 0.0
      %1988 = vmatprep.subr.mxu0 0.0
      %1989 = vmatpush1.msra.mxu0 0.0
      %1990 = vmatprep.subr.mxu0 0.0
      %1991 = vmatpush1.msra.mxu0 0.0
      %1992 = vmatprep.subr.mxu0 0.0
      %1993 = vmatpush1.msra.mxu0 0.0
      %1994 = vmatprep.subr.mxu0 0.0
      %1995 = vmatpush1.msra.mxu0 0.0
      %1996 = vmatprep.subr.mxu0 0.0
      %1997 = vmatpush1.msra.mxu0 0.0
      %1998 = vmatprep.subr.mxu0 0.0
      %1999 = vmatpush1.msra.mxu0 0.0
      %2000 = vmatprep.subr.mxu0 0.0
      %2001 = vmatpush1.msra.mxu0 0.0
      %2002 = vmatprep.subr.mxu0 0.0
      %2003 = vmatpush1.msra.mxu0 0.0
      %2004 = vmatprep.subr.mxu0 0.0
      %2005 = vmatpush1.msra.mxu0 0.0
      %2006 = vmatprep.subr.mxu0 0.0
      %2007 = vmatpush1.msra.mxu0 0.0
      %2008 = vmatprep.subr.mxu0 0.0
      %2009 = vmatpush1.msra.mxu0 0.0
      %2010 = vmatprep.mubr.f32.mxu0 0.0
      %v2011 = vand.u32 %v280, 4294901760
      %v2012 = vsub.f32 %v280, %v2011
      %2013 = vmatmul.mubr.f32.gmra.mrb[0].mxu0 %v2012
      %v2014 = vpop.f32.mrb[0].mxu0
      %v2015 = vadd.f32 %v1909, %v2014
      %v2016 = vpop.f32.mrb[0].mxu0
      %2017 = vmatprep.mubr.f32.mxu0 0.0
      %v2018 = vand.u32 %v283, 4294901760
      %v2019 = vsub.f32 %v283, %v2018
      %2020 = vmatmul.mubr.f32.gmra.mrb[0].mxu0 %v2019
      %v2021 = vpop.f32.mrb[0].mxu0
      %v2022 = vadd.f32 %v1915, %v2021
      %v2023 = vpop.f32.mrb[0].mxu0
      %2024 = vmatprep.mubr.f32.mxu0 0.0
      %v2025 = vand.u32 %v286, 4294901760
      %v2026 = vsub.f32 %v286, %v2025
      %2027 = vmatmul.mubr.f32.gmra.mrb[0].mxu0 %v2026
      %v2028 = vpop.f32.mrb[0].mxu0
      %v2029 = vadd.f32 %v1921, %v2028
      %v2030 = vpop.f32.mrb[0].mxu0
      %2031 = vmatprep.mubr.f32.mxu0 0.0
      %v2032 = vand.u32 %v289, 4294901760
      %v2033 = vsub.f32 %v289, %v2032
      %2034 = vmatmul.mubr.f32.gmra.mrb[0].mxu0 %v2033
      %v2035 = vpop.f32.mrb[0].mxu0
      %v2036 = vadd.f32 %v1927, %v2035
      %v2037 = vpop.f32.mrb[0].mxu0
      %2038 = vdwg.mxu0
      %2039 = vmatprep.subr.mxu0 0.0
      %v2040 = vand.u32 %v1680, 4294901760
      %2041 = vmatpush1.msra.mxu0 %v2040
      %2042 = vmatprep.subr.mxu0 0.0
      %v2043 = vand.u32 %v1681, 4294901760
      %2044 = vmatpush1.msra.mxu0 %v2043
      %2045 = vmatprep.subr.mxu0 0.0
      %v2046 = vand.u32 %v1682, 4294901760
      %2047 = vmatpush1.msra.mxu0 %v2046
      %2048 = vmatprep.subr.mxu0 0.0
      %v2049 = vand.u32 %v1683, 4294901760
      %2050 = vmatpush1.msra.mxu0 %v2049
      %2051 = vmatprep.subr.mxu0 0.0
      %v2052 = vand.u32 %v1684, 4294901760
      %2053 = vmatpush1.msra.mxu0 %v2052
      %2054 = vmatprep.subr.mxu0 0.0
      %v2055 = vand.u32 %v1685, 4294901760
      %2056 = vmatpush1.msra.mxu0 %v2055
      %2057 = vmatprep.subr.mxu0 0.0
      %v2058 = vand.u32 %v1686, 4294901760
      %2059 = vmatpush1.msra.mxu0 %v2058
      %2060 = vmatprep.subr.mxu0 0.0
      %v2061 = vand.u32 %v1687, 4294901760
      %2062 = vmatpush1.msra.mxu0 %v2061
      %2063 = vmatprep.subr.mxu0 0.0
      %2064 = vmatpush1.msra.mxu0 0.0
      %2065 = vmatprep.subr.mxu0 0.0
      %2066 = vmatpush1.msra.mxu0 0.0
      %2067 = vmatprep.subr.mxu0 0.0
      %2068 = vmatpush1.msra.mxu0 0.0
      %2069 = vmatprep.subr.mxu0 0.0
      %2070 = vmatpush1.msra.mxu0 0.0
      %2071 = vmatprep.subr.mxu0 0.0
      %2072 = vmatpush1.msra.mxu0 0.0
      %2073 = vmatprep.subr.mxu0 0.0
      %2074 = vmatpush1.msra.mxu0 0.0
      %2075 = vmatprep.subr.mxu0 0.0
      %2076 = vmatpush1.msra.mxu0 0.0
      %2077 = vmatprep.subr.mxu0 0.0
      %2078 = vmatpush1.msra.mxu0 0.0
      %2079 = vmatprep.subr.mxu0 0.0
      %2080 = vmatpush1.msra.mxu0 0.0
      %2081 = vmatprep.subr.mxu0 0.0
      %2082 = vmatpush1.msra.mxu0 0.0
      %2083 = vmatprep.subr.mxu0 0.0
      %2084 = vmatpush1.msra.mxu0 0.0
      %2085 = vmatprep.subr.mxu0 0.0
      %2086 = vmatpush1.msra.mxu0 0.0
      %2087 = vmatprep.subr.mxu0 0.0
      %2088 = vmatpush1.msra.mxu0 0.0
      %2089 = vmatprep.subr.mxu0 0.0
      %2090 = vmatpush1.msra.mxu0 0.0
      %2091 = vmatprep.subr.mxu0 0.0
      %2092 = vmatpush1.msra.mxu0 0.0
      %2093 = vmatprep.subr.mxu0 0.0
      %2094 = vmatpush1.msra.mxu0 0.0
      %2095 = vmatprep.subr.mxu0 0.0
      %2096 = vmatpush1.msra.mxu0 0.0
      %2097 = vmatprep.subr.mxu0 0.0
      %2098 = vmatpush1.msra.mxu0 0.0
      %2099 = vmatprep.subr.mxu0 0.0
      %2100 = vmatpush1.msra.mxu0 0.0
      %2101 = vmatprep.subr.mxu0 0.0
      %2102 = vmatpush1.msra.mxu0 0.0
      %2103 = vmatprep.subr.mxu0 0.0
      %2104 = vmatpush1.msra.mxu0 0.0
      %2105 = vmatprep.subr.mxu0 0.0
      %2106 = vmatpush1.msra.mxu0 0.0
      %2107 = vmatprep.subr.mxu0 0.0
      %2108 = vmatpush1.msra.mxu0 0.0
      %2109 = vmatprep.subr.mxu0 0.0
      %2110 = vmatpush1.msra.mxu0 0.0
      %2111 = vmatprep.mubr.f32.mxu0 0.0
      %v2112 = vand.u32 %v280, 4294901760
      %v2113 = vsub.f32 %v280, %v2112
      %v2114 = vand.u32 %v2113, 4294901760
      %2115 = vmatmul.mubr.f32.gmra.mrb[0].mxu0 %v2114
      %v2116 = vpop.f32.mrb[0].mxu0
      %v2117 = vadd.f32 %v2015, %v2116
      %v2118 = vpop.f32.mrb[0].mxu0
      %2119 = vmatprep.mubr.f32.mxu0 0.0
      %v2120 = vand.u32 %v283, 4294901760
      %v2121 = vsub.f32 %v283, %v2120
      %v2122 = vand.u32 %v2121, 4294901760
      %2123 = vmatmul.mubr.f32.gmra.mrb[0].mxu0 %v2122
      %v2124 = vpop.f32.mrb[0].mxu0
      %v2125 = vadd.f32 %v2022, %v2124
      %v2126 = vpop.f32.mrb[0].mxu0
      %2127 = vmatprep.mubr.f32.mxu0 0.0
      %v2128 = vand.u32 %v286, 4294901760
      %v2129 = vsub.f32 %v286, %v2128
      %v2130 = vand.u32 %v2129, 4294901760
      %2131 = vmatmul.mubr.f32.gmra.mrb[0].mxu0 %v2130
      %v2132 = vpop.f32.mrb[0].mxu0
      %v2133 = vadd.f32 %v2029, %v2132
      %v2134 = vpop.f32.mrb[0].mxu0
      %2135 = vmatprep.mubr.f32.mxu0 0.0
      %v2136 = vand.u32 %v289, 4294901760
      %v2137 = vsub.f32 %v289, %v2136
      %v2138 = vand.u32 %v2137, 4294901760
      %2139 = vmatmul.mubr.f32.gmra.mrb[0].mxu0 %v2138
      %v2140 = vpop.f32.mrb[0].mxu0
      %v2141 = vadd.f32 %v2036, %v2140
      %v2142 = vpop.f32.mrb[0].mxu0
      %2143 = vdwg.mxu0
      %2144 = vmatprep.subr.mxu0 0.0
      %v2145 = vand.u32 %v1680, 4294901760
      %v2146 = vsub.f32 %v1680, %v2145
      %v2147 = vand.u32 %v2146, 4294901760
      %2148 = vmatpush1.msra.mxu0 %v2147
      %2149 = vmatprep.subr.mxu0 0.0
      %v2150 = vand.u32 %v1681, 4294901760
      %v2151 = vsub.f32 %v1681, %v2150
      %v2152 = vand.u32 %v2151, 4294901760
      %2153 = vmatpush1.msra.mxu0 %v2152
      %2154 = vmatprep.subr.mxu0 0.0
      %v2155 = vand.u32 %v1682, 4294901760
      %v2156 = vsub.f32 %v1682, %v2155
      %v2157 = vand.u32 %v2156, 4294901760
      %2158 = vmatpush1.msra.mxu0 %v2157
      %2159 = vmatprep.subr.mxu0 0.0
      %v2160 = vand.u32 %v1683, 4294901760
      %v2161 = vsub.f32 %v1683, %v2160
      %v2162 = vand.u32 %v2161, 4294901760
      %2163 = vmatpush1.msra.mxu0 %v2162
      %2164 = vmatprep.subr.mxu0 0.0
      %v2165 = vand.u32 %v1684, 4294901760
      %v2166 = vsub.f32 %v1684, %v2165
      %v2167 = vand.u32 %v2166, 4294901760
      %2168 = vmatpush1.msra.mxu0 %v2167
      %2169 = vmatprep.subr.mxu0 0.0
      %v2170 = vand.u32 %v1685, 4294901760
      %v2171 = vsub.f32 %v1685, %v2170
      %v2172 = vand.u32 %v2171, 4294901760
      %2173 = vmatpush1.msra.mxu0 %v2172
      %2174 = vmatprep.subr.mxu0 0.0
      %v2175 = vand.u32 %v1686, 4294901760
      %v2176 = vsub.f32 %v1686, %v2175
      %v2177 = vand.u32 %v2176, 4294901760
      %2178 = vmatpush1.msra.mxu0 %v2177
      %2179 = vmatprep.subr.mxu0 0.0
      %v2180 = vand.u32 %v1687, 4294901760
      %v2181 = vsub.f32 %v1687, %v2180
      %v2182 = vand.u32 %v2181, 4294901760
      %2183 = vmatpush1.msra.mxu0 %v2182
      %2184 = vmatprep.subr.mxu0 0.0
      %2185 = vmatpush1.msra.mxu0 0.0
      %2186 = vmatprep.subr.mxu0 0.0
      %2187 = vmatpush1.msra.mxu0 0.0
      %2188 = vmatprep.subr.mxu0 0.0
      %2189 = vmatpush1.msra.mxu0 0.0
      %2190 = vmatprep.subr.mxu0 0.0
      %2191 = vmatpush1.msra.mxu0 0.0
      %2192 = vmatprep.subr.mxu0 0.0
      %2193 = vmatpush1.msra.mxu0 0.0
      %2194 = vmatprep.subr.mxu0 0.0
      %2195 = vmatpush1.msra.mxu0 0.0
      %2196 = vmatprep.subr.mxu0 0.0
      %2197 = vmatpush1.msra.mxu0 0.0
      %2198 = vmatprep.subr.mxu0 0.0
      %2199 = vmatpush1.msra.mxu0 0.0
      %2200 = vmatprep.subr.mxu0 0.0
      %2201 = vmatpush1.msra.mxu0 0.0
      %2202 = vmatprep.subr.mxu0 0.0
      %2203 = vmatpush1.msra.mxu0 0.0
      %2204 = vmatprep.subr.mxu0 0.0
      %2205 = vmatpush1.msra.mxu0 0.0
      %2206 = vmatprep.subr.mxu0 0.0
      %2207 = vmatpush1.msra.mxu0 0.0
      %2208 = vmatprep.subr.mxu0 0.0
      %2209 = vmatpush1.msra.mxu0 0.0
      %2210 = vmatprep.subr.mxu0 0.0
      %2211 = vmatpush1.msra.mxu0 0.0
      %2212 = vmatprep.subr.mxu0 0.0
      %2213 = vmatpush1.msra.mxu0 0.0
      %2214 = vmatprep.subr.mxu0 0.0
      %2215 = vmatpush1.msra.mxu0 0.0
      %2216 = vmatprep.subr.mxu0 0.0
      %2217 = vmatpush1.msra.mxu0 0.0
      %2218 = vmatprep.subr.mxu0 0.0
      %2219 = vmatpush1.msra.mxu0 0.0
      %2220 = vmatprep.subr.mxu0 0.0
      %2221 = vmatpush1.msra.mxu0 0.0
      %2222 = vmatprep.subr.mxu0 0.0
      %2223 = vmatpush1.msra.mxu0 0.0
      %2224 = vmatprep.subr.mxu0 0.0
      %2225 = vmatpush1.msra.mxu0 0.0
      %2226 = vmatprep.subr.mxu0 0.0
      %2227 = vmatpush1.msra.mxu0 0.0
      %2228 = vmatprep.subr.mxu0 0.0
      %2229 = vmatpush1.msra.mxu0 0.0
      %2230 = vmatprep.subr.mxu0 0.0
      %2231 = vmatpush1.msra.mxu0 0.0
      %2232 = vmatprep.mubr.f32.mxu0 0.0
      %v2233 = vand.u32 %v280, 4294901760
      %2234 = vmatmul.mubr.f32.gmra.mrb[0].mxu0 %v2233
      %v2235 = vpop.f32.mrb[0].mxu0
      %v2236 = vadd.f32 %v2117, %v2235
      %v2237 = vpop.f32.mrb[0].mxu0
      %2238 = vmatprep.mubr.f32.mxu0 0.0
      %v2239 = vand.u32 %v283, 4294901760
      %2240 = vmatmul.mubr.f32.gmra.mrb[0].mxu0 %v2239
      %v2241 = vpop.f32.mrb[0].mxu0
      %v2242 = vadd.f32 %v2125, %v2241
      %v2243 = vpop.f32.mrb[0].mxu0
      %2244 = vmatprep.mubr.f32.mxu0 0.0
      %v2245 = vand.u32 %v286, 4294901760
      %2246 = vmatmul.mubr.f32.gmra.mrb[0].mxu0 %v2245
      %v2247 = vpop.f32.mrb[0].mxu0
      %v2248 = vadd.f32 %v2133, %v2247
      %v2249 = vpop.f32.mrb[0].mxu0
      %2250 = vmatprep.mubr.f32.mxu0 0.0
      %v2251 = vand.u32 %v289, 4294901760
      %2252 = vmatmul.mubr.f32.gmra.mrb[0].mxu0 %v2251
      %v2253 = vpop.f32.mrb[0].mxu0
      %v2254 = vadd.f32 %v2141, %v2253
      %v2255 = vpop.f32.mrb[0].mxu0
      %2256 = vdwg.mxu0
      %2257 = vmatprep.subr.mxu0 0.0
      %v2258 = vand.u32 %v1680, 4294901760
      %2259 = vmatpush1.msra.mxu0 %v2258
      %2260 = vmatprep.subr.mxu0 0.0
      %v2261 = vand.u32 %v1681, 4294901760
      %2262 = vmatpush1.msra.mxu0 %v2261
      %2263 = vmatprep.subr.mxu0 0.0
      %v2264 = vand.u32 %v1682, 4294901760
      %2265 = vmatpush1.msra.mxu0 %v2264
      %2266 = vmatprep.subr.mxu0 0.0
      %v2267 = vand.u32 %v1683, 4294901760
      %2268 = vmatpush1.msra.mxu0 %v2267
      %2269 = vmatprep.subr.mxu0 0.0
      %v2270 = vand.u32 %v1684, 4294901760
      %2271 = vmatpush1.msra.mxu0 %v2270
      %2272 = vmatprep.subr.mxu0 0.0
      %v2273 = vand.u32 %v1685, 4294901760
      %2274 = vmatpush1.msra.mxu0 %v2273
      %2275 = vmatprep.subr.mxu0 0.0
      %v2276 = vand.u32 %v1686, 4294901760
      %2277 = vmatpush1.msra.mxu0 %v2276
      %2278 = vmatprep.subr.mxu0 0.0
      %v2279 = vand.u32 %v1687, 4294901760
      %2280 = vmatpush1.msra.mxu0 %v2279
      %2281 = vmatprep.subr.mxu0 0.0
      %2282 = vmatpush1.msra.mxu0 0.0
      %2283 = vmatprep.subr.mxu0 0.0
      %2284 = vmatpush1.msra.mxu0 0.0
      %2285 = vmatprep.subr.mxu0 0.0
      %2286 = vmatpush1.msra.mxu0 0.0
      %2287 = vmatprep.subr.mxu0 0.0
      %2288 = vmatpush1.msra.mxu0 0.0
      %2289 = vmatprep.subr.mxu0 0.0
      %2290 = vmatpush1.msra.mxu0 0.0
      %2291 = vmatprep.subr.mxu0 0.0
      %2292 = vmatpush1.msra.mxu0 0.0
      %2293 = vmatprep.subr.mxu0 0.0
      %2294 = vmatpush1.msra.mxu0 0.0
      %2295 = vmatprep.subr.mxu0 0.0
      %2296 = vmatpush1.msra.mxu0 0.0
      %2297 = vmatprep.subr.mxu0 0.0
      %2298 = vmatpush1.msra.mxu0 0.0
      %2299 = vmatprep.subr.mxu0 0.0
      %2300 = vmatpush1.msra.mxu0 0.0
      %2301 = vmatprep.subr.mxu0 0.0
      %2302 = vmatpush1.msra.mxu0 0.0
      %2303 = vmatprep.subr.mxu0 0.0
      %2304 = vmatpush1.msra.mxu0 0.0
      %2305 = vmatprep.subr.mxu0 0.0
      %2306 = vmatpush1.msra.mxu0 0.0
      %2307 = vmatprep.subr.mxu0 0.0
      %2308 = vmatpush1.msra.mxu0 0.0
      %2309 = vmatprep.subr.mxu0 0.0
      %2310 = vmatpush1.msra.mxu0 0.0
      %2311 = vmatprep.subr.mxu0 0.0
      %2312 = vmatpush1.msra.mxu0 0.0
      %2313 = vmatprep.subr.mxu0 0.0
      %2314 = vmatpush1.msra.mxu0 0.0
      %2315 = vmatprep.subr.mxu0 0.0
      %2316 = vmatpush1.msra.mxu0 0.0
      %2317 = vmatprep.subr.mxu0 0.0
      %2318 = vmatpush1.msra.mxu0 0.0
      %2319 = vmatprep.subr.mxu0 0.0
      %2320 = vmatpush1.msra.mxu0 0.0
      %2321 = vmatprep.subr.mxu0 0.0
      %2322 = vmatpush1.msra.mxu0 0.0
      %2323 = vmatprep.subr.mxu0 0.0
      %2324 = vmatpush1.msra.mxu0 0.0
      %2325 = vmatprep.subr.mxu0 0.0
      %2326 = vmatpush1.msra.mxu0 0.0
      %2327 = vmatprep.subr.mxu0 0.0
      %2328 = vmatpush1.msra.mxu0 0.0
      %2329 = vmatprep.mubr.f32.mxu0 0.0
      %v2330 = vand.u32 %v280, 4294901760
      %2331 = vmatmul.mubr.f32.gmra.mrb[0].mxu0 %v2330
      %v2332 = vpop.f32.mrb[0].mxu0
      %v2333 = vadd.f32 %v2236, %v2332
      %v2334 = vpop.f32.mrb[0].mxu0
      %2335 = vmatprep.mubr.f32.mxu0 0.0
      %v2336 = vand.u32 %v283, 4294901760
      %2337 = vmatmul.mubr.f32.gmra.mrb[0].mxu0 %v2336
      %v2338 = vpop.f32.mrb[0].mxu0
      %v2339 = vadd.f32 %v2242, %v2338
      %v2340 = vpop.f32.mrb[0].mxu0
      %2341 = vmatprep.mubr.f32.mxu0 0.0
      %v2342 = vand.u32 %v286, 4294901760
      %2343 = vmatmul.mubr.f32.gmra.mrb[0].mxu0 %v2342
      %v2344 = vpop.f32.mrb[0].mxu0
      %v2345 = vadd.f32 %v2248, %v2344
      %v2346 = vpop.f32.mrb[0].mxu0
      %2347 = vmatprep.mubr.f32.mxu0 0.0
      %v2348 = vand.u32 %v289, 4294901760
      %2349 = vmatmul.mubr.f32.gmra.mrb[0].mxu0 %v2348
      %v2350 = vpop.f32.mrb[0].mxu0
      %v2351 = vadd.f32 %v2254, %v2350
      %v2352 = vpop.f32.mrb[0].mxu0
      %2353 = vdwg.mxu0
      %s2354 = scalar_lea.vmem %s176, 64
      %2355 = vst.msk [vmem:[%s2354] sm:$0xff] %vm193, %v2333
      %2356 = vst.msk [vmem:[%s2354 + $0x8] sm:$0xff] %vm193, %v2339
      %2357 = vst.msk [vmem:[%s2354 + $0x10] sm:$0xff] %vm193, %v2345
      %2358 = vst.msk [vmem:[%s2354 + $0x18] sm:$0xff] %vm193, %v2351
      %v2359 = vlaneseq
      %v2360 = vshrl.u32 %v2359, 7
      %v2361 = vsub.s32 3, %v2360
      %v2362 = vrot.slane %v182, %v2361
      %vm2363 = vcmp.eq.s32.totalorder %v2362, %v242
      %vm2364 = vcmp.eq.s32.totalorder %v2362, %v243
      %vm2365 = vcmp.eq.s32.totalorder %v2362, %v244
      %vm2366 = vcmp.eq.s32.totalorder %v2362, %v245
      %vm2367 = vcmp.eq.s32.totalorder %v2362, %v246
      %vm2368 = vcmp.eq.s32.totalorder %v2362, %v247
      %vm2369 = vcmp.eq.s32.totalorder %v2362, %v248
      %vm2370 = vcmp.eq.s32.totalorder %v2362, %v249
      %v2371 = vsel %vm2363, 1, 0
      %v2372 = vsel %vm2364, 1, 0
      %v2373 = vsel %vm2365, 1, 0
      %v2374 = vsel %vm2366, 1, 0
      %v2375 = vsel %vm2367, 1, 0
      %v2376 = vsel %vm2368, 1, 0
      %v2377 = vsel %vm2369, 1, 0
      %v2378 = vsel %vm2370, 1, 0
      %v2379 = vcvt.s32.f32 %v2371
      %v2380 = vcvt.s32.f32 %v2372
      %v2381 = vcvt.s32.f32 %v2373
      %v2382 = vcvt.s32.f32 %v2374
      %v2383 = vcvt.s32.f32 %v2375
      %v2384 = vcvt.s32.f32 %v2376
      %v2385 = vcvt.s32.f32 %v2377
      %v2386 = vcvt.s32.f32 %v2378
      %2387 = vmatprep.subr.mxu0 0.0
      %v2388 = vand.u32 %v2379, 4294901760
      %2389 = vmatpush1.msra.mxu0 %v2388
      %2390 = vmatprep.subr.mxu0 0.0
      %v2391 = vand.u32 %v2380, 4294901760
      %2392 = vmatpush1.msra.mxu0 %v2391
      %2393 = vmatprep.subr.mxu0 0.0
      %v2394 = vand.u32 %v2381, 4294901760
      %2395 = vmatpush1.msra.mxu0 %v2394
      %2396 = vmatprep.subr.mxu0 0.0
      %v2397 = vand.u32 %v2382, 4294901760
      %2398 = vmatpush1.msra.mxu0 %v2397
      %2399 = vmatprep.subr.mxu0 0.0
      %v2400 = vand.u32 %v2383, 4294901760
      %2401 = vmatpush1.msra.mxu0 %v2400
      %2402 = vmatprep.subr.mxu0 0.0
      %v2403 = vand.u32 %v2384, 4294901760
      %2404 = vmatpush1.msra.mxu0 %v2403
      %2405 = vmatprep.subr.mxu0 0.0
      %v2406 = vand.u32 %v2385, 4294901760
      %2407 = vmatpush1.msra.mxu0 %v2406
      %2408 = vmatprep.subr.mxu0 0.0
      %v2409 = vand.u32 %v2386, 4294901760
      %2410 = vmatpush1.msra.mxu0 %v2409
      %2411 = vmatprep.subr.mxu0 0.0
      %2412 = vmatpush1.msra.mxu0 0.0
      %2413 = vmatprep.subr.mxu0 0.0
      %2414 = vmatpush1.msra.mxu0 0.0
      %2415 = vmatprep.subr.mxu0 0.0
      %2416 = vmatpush1.msra.mxu0 0.0
      %2417 = vmatprep.subr.mxu0 0.0
      %2418 = vmatpush1.msra.mxu0 0.0
      %2419 = vmatprep.subr.mxu0 0.0
      %2420 = vmatpush1.msra.mxu0 0.0
      %2421 = vmatprep.subr.mxu0 0.0
      %2422 = vmatpush1.msra.mxu0 0.0
      %2423 = vmatprep.subr.mxu0 0.0
      %2424 = vmatpush1.msra.mxu0 0.0
      %2425 = vmatprep.subr.mxu0 0.0
      %2426 = vmatpush1.msra.mxu0 0.0
      %2427 = vmatprep.subr.mxu0 0.0
      %2428 = vmatpush1.msra.mxu0 0.0
      %2429 = vmatprep.subr.mxu0 0.0
      %2430 = vmatpush1.msra.mxu0 0.0
      %2431 = vmatprep.subr.mxu0 0.0
      %2432 = vmatpush1.msra.mxu0 0.0
      %2433 = vmatprep.subr.mxu0 0.0
      %2434 = vmatpush1.msra.mxu0 0.0
      %2435 = vmatprep.subr.mxu0 0.0
      %2436 = vmatpush1.msra.mxu0 0.0
      %2437 = vmatprep.subr.mxu0 0.0
      %2438 = vmatpush1.msra.mxu0 0.0
      %2439 = vmatprep.subr.mxu0 0.0
      %2440 = vmatpush1.msra.mxu0 0.0
      %2441 = vmatprep.subr.mxu0 0.0
      %2442 = vmatpush1.msra.mxu0 0.0
      %2443 = vmatprep.subr.mxu0 0.0
      %2444 = vmatpush1.msra.mxu0 0.0
      %2445 = vmatprep.subr.mxu0 0.0
      %2446 = vmatpush1.msra.mxu0 0.0
      %2447 = vmatprep.subr.mxu0 0.0
      %2448 = vmatpush1.msra.mxu0 0.0
      %2449 = vmatprep.subr.mxu0 0.0
      %2450 = vmatpush1.msra.mxu0 0.0
      %2451 = vmatprep.subr.mxu0 0.0
      %2452 = vmatpush1.msra.mxu0 0.0
      %2453 = vmatprep.subr.mxu0 0.0
      %2454 = vmatpush1.msra.mxu0 0.0
      %2455 = vmatprep.subr.mxu0 0.0
      %2456 = vmatpush1.msra.mxu0 0.0
      %2457 = vmatprep.subr.mxu0 0.0
      %2458 = vmatpush1.msra.mxu0 0.0
      %2459 = vmatprep.mubr.f32.mxu0 0.0
      %v2460 = vand.u32 %v280, 4294901760
      %v2461 = vsub.f32 %v280, %v2460
      %v2462 = vand.u32 %v2461, 4294901760
      %v2463 = vsub.f32 %v2461, %v2462
      %v2464 = vand.u32 %v2463, 4294901760
      %2465 = vmatmul.mubr.f32.gmra.mrb[0].mxu0 %v2464
      %v2466 = vpop.f32.mrb[0].mxu0
      %v2467 = vadd.f32 0.0, %v2466
      %v2468 = vpop.f32.mrb[0].mxu0
      %2469 = vmatprep.mubr.f32.mxu0 0.0
      %v2470 = vand.u32 %v283, 4294901760
      %v2471 = vsub.f32 %v283, %v2470
      %v2472 = vand.u32 %v2471, 4294901760
      %v2473 = vsub.f32 %v2471, %v2472
      %v2474 = vand.u32 %v2473, 4294901760
      %2475 = vmatmul.mubr.f32.gmra.mrb[0].mxu0 %v2474
      %v2476 = vpop.f32.mrb[0].mxu0
      %v2477 = vadd.f32 0.0, %v2476
      %v2478 = vpop.f32.mrb[0].mxu0
      %2479 = vmatprep.mubr.f32.mxu0 0.0
      %v2480 = vand.u32 %v286, 4294901760
      %v2481 = vsub.f32 %v286, %v2480
      %v2482 = vand.u32 %v2481, 4294901760
      %v2483 = vsub.f32 %v2481, %v2482
      %v2484 = vand.u32 %v2483, 4294901760
      %2485 = vmatmul.mubr.f32.gmra.mrb[0].mxu0 %v2484
      %v2486 = vpop.f32.mrb[0].mxu0
      %v2487 = vadd.f32 0.0, %v2486
      %v2488 = vpop.f32.mrb[0].mxu0
      %2489 = vmatprep.mubr.f32.mxu0 0.0
      %v2490 = vand.u32 %v289, 4294901760
      %v2491 = vsub.f32 %v289, %v2490
      %v2492 = vand.u32 %v2491, 4294901760
      %v2493 = vsub.f32 %v2491, %v2492
      %v2494 = vand.u32 %v2493, 4294901760
      %2495 = vmatmul.mubr.f32.gmra.mrb[0].mxu0 %v2494
      %v2496 = vpop.f32.mrb[0].mxu0
      %v2497 = vadd.f32 0.0, %v2496
      %v2498 = vpop.f32.mrb[0].mxu0
      %2499 = vdwg.mxu0
      %2500 = vmatprep.subr.mxu0 0.0
      %v2501 = vand.u32 %v2379, 4294901760
      %v2502 = vsub.f32 %v2379, %v2501
      %v2503 = vand.u32 %v2502, 4294901760
      %v2504 = vsub.f32 %v2502, %v2503
      %v2505 = vand.u32 %v2504, 4294901760
      %2506 = vmatpush1.msra.mxu0 %v2505
      %2507 = vmatprep.subr.mxu0 0.0
      %v2508 = vand.u32 %v2380, 4294901760
      %v2509 = vsub.f32 %v2380, %v2508
      %v2510 = vand.u32 %v2509, 4294901760
      %v2511 = vsub.f32 %v2509, %v2510
      %v2512 = vand.u32 %v2511, 4294901760
      %2513 = vmatpush1.msra.mxu0 %v2512
      %2514 = vmatprep.subr.mxu0 0.0
      %v2515 = vand.u32 %v2381, 4294901760
      %v2516 = vsub.f32 %v2381, %v2515
      %v2517 = vand.u32 %v2516, 4294901760
      %v2518 = vsub.f32 %v2516, %v2517
      %v2519 = vand.u32 %v2518, 4294901760
      %2520 = vmatpush1.msra.mxu0 %v2519
      %2521 = vmatprep.subr.mxu0 0.0
      %v2522 = vand.u32 %v2382, 4294901760
      %v2523 = vsub.f32 %v2382, %v2522
      %v2524 = vand.u32 %v2523, 4294901760
      %v2525 = vsub.f32 %v2523, %v2524
      %v2526 = vand.u32 %v2525, 4294901760
      %2527 = vmatpush1.msra.mxu0 %v2526
      %2528 = vmatprep.subr.mxu0 0.0
      %v2529 = vand.u32 %v2383, 4294901760
      %v2530 = vsub.f32 %v2383, %v2529
      %v2531 = vand.u32 %v2530, 4294901760
      %v2532 = vsub.f32 %v2530, %v2531
      %v2533 = vand.u32 %v2532, 4294901760
      %2534 = vmatpush1.msra.mxu0 %v2533
      %2535 = vmatprep.subr.mxu0 0.0
      %v2536 = vand.u32 %v2384, 4294901760
      %v2537 = vsub.f32 %v2384, %v2536
      %v2538 = vand.u32 %v2537, 4294901760
      %v2539 = vsub.f32 %v2537, %v2538
      %v2540 = vand.u32 %v2539, 4294901760
      %2541 = vmatpush1.msra.mxu0 %v2540
      %2542 = vmatprep.subr.mxu0 0.0
      %v2543 = vand.u32 %v2385, 4294901760
      %v2544 = vsub.f32 %v2385, %v2543
      %v2545 = vand.u32 %v2544, 4294901760
      %v2546 = vsub.f32 %v2544, %v2545
      %v2547 = vand.u32 %v2546, 4294901760
      %2548 = vmatpush1.msra.mxu0 %v2547
      %2549 = vmatprep.subr.mxu0 0.0
      %v2550 = vand.u32 %v2386, 4294901760
      %v2551 = vsub.f32 %v2386, %v2550
      %v2552 = vand.u32 %v2551, 4294901760
      %v2553 = vsub.f32 %v2551, %v2552
      %v2554 = vand.u32 %v2553, 4294901760
      %2555 = vmatpush1.msra.mxu0 %v2554
      %2556 = vmatprep.subr.mxu0 0.0
      %2557 = vmatpush1.msra.mxu0 0.0
      %2558 = vmatprep.subr.mxu0 0.0
      %2559 = vmatpush1.msra.mxu0 0.0
      %2560 = vmatprep.subr.mxu0 0.0
      %2561 = vmatpush1.msra.mxu0 0.0
      %2562 = vmatprep.subr.mxu0 0.0
      %2563 = vmatpush1.msra.mxu0 0.0
      %2564 = vmatprep.subr.mxu0 0.0
      %2565 = vmatpush1.msra.mxu0 0.0
      %2566 = vmatprep.subr.mxu0 0.0
      %2567 = vmatpush1.msra.mxu0 0.0
      %2568 = vmatprep.subr.mxu0 0.0
      %2569 = vmatpush1.msra.mxu0 0.0
      %2570 = vmatprep.subr.mxu0 0.0
      %2571 = vmatpush1.msra.mxu0 0.0
      %2572 = vmatprep.subr.mxu0 0.0
      %2573 = vmatpush1.msra.mxu0 0.0
      %2574 = vmatprep.subr.mxu0 0.0
      %2575 = vmatpush1.msra.mxu0 0.0
      %2576 = vmatprep.subr.mxu0 0.0
      %2577 = vmatpush1.msra.mxu0 0.0
      %2578 = vmatprep.subr.mxu0 0.0
      %2579 = vmatpush1.msra.mxu0 0.0
      %2580 = vmatprep.subr.mxu0 0.0
      %2581 = vmatpush1.msra.mxu0 0.0
      %2582 = vmatprep.subr.mxu0 0.0
      %2583 = vmatpush1.msra.mxu0 0.0
      %2584 = vmatprep.subr.mxu0 0.0
      %2585 = vmatpush1.msra.mxu0 0.0
      %2586 = vmatprep.subr.mxu0 0.0
      %2587 = vmatpush1.msra.mxu0 0.0
      %2588 = vmatprep.subr.mxu0 0.0
      %2589 = vmatpush1.msra.mxu0 0.0
      %2590 = vmatprep.subr.mxu0 0.0
      %2591 = vmatpush1.msra.mxu0 0.0
      %2592 = vmatprep.subr.mxu0 0.0
      %2593 = vmatpush1.msra.mxu0 0.0
      %2594 = vmatprep.subr.mxu0 0.0
      %2595 = vmatpush1.msra.mxu0 0.0
      %2596 = vmatprep.subr.mxu0 0.0
      %2597 = vmatpush1.msra.mxu0 0.0
      %2598 = vmatprep.subr.mxu0 0.0
      %2599 = vmatpush1.msra.mxu0 0.0
      %2600 = vmatprep.subr.mxu0 0.0
      %2601 = vmatpush1.msra.mxu0 0.0
      %2602 = vmatprep.subr.mxu0 0.0
      %2603 = vmatpush1.msra.mxu0 0.0
      %2604 = vmatprep.mubr.f32.mxu0 0.0
      %v2605 = vand.u32 %v280, 4294901760
      %2606 = vmatmul.mubr.f32.gmra.mrb[0].mxu0 %v2605
      %v2607 = vpop.f32.mrb[0].mxu0
      %v2608 = vadd.f32 %v2467, %v2607
      %v2609 = vpop.f32.mrb[0].mxu0
      %2610 = vmatprep.mubr.f32.mxu0 0.0
      %v2611 = vand.u32 %v283, 4294901760
      %2612 = vmatmul.mubr.f32.gmra.mrb[0].mxu0 %v2611
      %v2613 = vpop.f32.mrb[0].mxu0
      %v2614 = vadd.f32 %v2477, %v2613
      %v2615 = vpop.f32.mrb[0].mxu0
      %2616 = vmatprep.mubr.f32.mxu0 0.0
      %v2617 = vand.u32 %v286, 4294901760
      %2618 = vmatmul.mubr.f32.gmra.mrb[0].mxu0 %v2617
      %v2619 = vpop.f32.mrb[0].mxu0
      %v2620 = vadd.f32 %v2487, %v2619
      %v2621 = vpop.f32.mrb[0].mxu0
      %2622 = vmatprep.mubr.f32.mxu0 0.0
      %v2623 = vand.u32 %v289, 4294901760
      %2624 = vmatmul.mubr.f32.gmra.mrb[0].mxu0 %v2623
      %v2625 = vpop.f32.mrb[0].mxu0
      %v2626 = vadd.f32 %v2497, %v2625
      %v2627 = vpop.f32.mrb[0].mxu0
      %2628 = vdwg.mxu0
      %2629 = vmatprep.subr.mxu0 0.0
      %v2630 = vand.u32 %v2379, 4294901760
      %v2631 = vsub.f32 %v2379, %v2630
      %2632 = vmatpush1.msra.mxu0 %v2631
      %2633 = vmatprep.subr.mxu0 0.0
      %v2634 = vand.u32 %v2380, 4294901760
      %v2635 = vsub.f32 %v2380, %v2634
      %2636 = vmatpush1.msra.mxu0 %v2635
      %2637 = vmatprep.subr.mxu0 0.0
      %v2638 = vand.u32 %v2381, 4294901760
      %v2639 = vsub.f32 %v2381, %v2638
      %2640 = vmatpush1.msra.mxu0 %v2639
      %2641 = vmatprep.subr.mxu0 0.0
      %v2642 = vand.u32 %v2382, 4294901760
      %v2643 = vsub.f32 %v2382, %v2642
      %2644 = vmatpush1.msra.mxu0 %v2643
      %2645 = vmatprep.subr.mxu0 0.0
      %v2646 = vand.u32 %v2383, 4294901760
      %v2647 = vsub.f32 %v2383, %v2646
      %2648 = vmatpush1.msra.mxu0 %v2647
      %2649 = vmatprep.subr.mxu0 0.0
      %v2650 = vand.u32 %v2384, 4294901760
      %v2651 = vsub.f32 %v2384, %v2650
      %2652 = vmatpush1.msra.mxu0 %v2651
      %2653 = vmatprep.subr.mxu0 0.0
      %v2654 = vand.u32 %v2385, 4294901760
      %v2655 = vsub.f32 %v2385, %v2654
      %2656 = vmatpush1.msra.mxu0 %v2655
      %2657 = vmatprep.subr.mxu0 0.0
      %v2658 = vand.u32 %v2386, 4294901760
      %v2659 = vsub.f32 %v2386, %v2658
      %2660 = vmatpush1.msra.mxu0 %v2659
      %2661 = vmatprep.subr.mxu0 0.0
      %2662 = vmatpush1.msra.mxu0 0.0
      %2663 = vmatprep.subr.mxu0 0.0
      %2664 = vmatpush1.msra.mxu0 0.0
      %2665 = vmatprep.subr.mxu0 0.0
      %2666 = vmatpush1.msra.mxu0 0.0
      %2667 = vmatprep.subr.mxu0 0.0
      %2668 = vmatpush1.msra.mxu0 0.0
      %2669 = vmatprep.subr.mxu0 0.0
      %2670 = vmatpush1.msra.mxu0 0.0
      %2671 = vmatprep.subr.mxu0 0.0
      %2672 = vmatpush1.msra.mxu0 0.0
      %2673 = vmatprep.subr.mxu0 0.0
      %2674 = vmatpush1.msra.mxu0 0.0
      %2675 = vmatprep.subr.mxu0 0.0
      %2676 = vmatpush1.msra.mxu0 0.0
      %2677 = vmatprep.subr.mxu0 0.0
      %2678 = vmatpush1.msra.mxu0 0.0
      %2679 = vmatprep.subr.mxu0 0.0
      %2680 = vmatpush1.msra.mxu0 0.0
      %2681 = vmatprep.subr.mxu0 0.0
      %2682 = vmatpush1.msra.mxu0 0.0
      %2683 = vmatprep.subr.mxu0 0.0
      %2684 = vmatpush1.msra.mxu0 0.0
      %2685 = vmatprep.subr.mxu0 0.0
      %2686 = vmatpush1.msra.mxu0 0.0
      %2687 = vmatprep.subr.mxu0 0.0
      %2688 = vmatpush1.msra.mxu0 0.0
      %2689 = vmatprep.subr.mxu0 0.0
      %2690 = vmatpush1.msra.mxu0 0.0
      %2691 = vmatprep.subr.mxu0 0.0
      %2692 = vmatpush1.msra.mxu0 0.0
      %2693 = vmatprep.subr.mxu0 0.0
      %2694 = vmatpush1.msra.mxu0 0.0
      %2695 = vmatprep.subr.mxu0 0.0
      %2696 = vmatpush1.msra.mxu0 0.0
      %2697 = vmatprep.subr.mxu0 0.0
      %2698 = vmatpush1.msra.mxu0 0.0
      %2699 = vmatprep.subr.mxu0 0.0
      %2700 = vmatpush1.msra.mxu0 0.0
      %2701 = vmatprep.subr.mxu0 0.0
      %2702 = vmatpush1.msra.mxu0 0.0
      %2703 = vmatprep.subr.mxu0 0.0
      %2704 = vmatpush1.msra.mxu0 0.0
      %2705 = vmatprep.subr.mxu0 0.0
      %2706 = vmatpush1.msra.mxu0 0.0
      %2707 = vmatprep.subr.mxu0 0.0
      %2708 = vmatpush1.msra.mxu0 0.0
      %2709 = vmatprep.mubr.f32.mxu0 0.0
      %v2710 = vand.u32 %v280, 4294901760
      %v2711 = vsub.f32 %v280, %v2710
      %2712 = vmatmul.mubr.f32.gmra.mrb[0].mxu0 %v2711
      %v2713 = vpop.f32.mrb[0].mxu0
      %v2714 = vadd.f32 %v2608, %v2713
      %v2715 = vpop.f32.mrb[0].mxu0
      %2716 = vmatprep.mubr.f32.mxu0 0.0
      %v2717 = vand.u32 %v283, 4294901760
      %v2718 = vsub.f32 %v283, %v2717
      %2719 = vmatmul.mubr.f32.gmra.mrb[0].mxu0 %v2718
      %v2720 = vpop.f32.mrb[0].mxu0
      %v2721 = vadd.f32 %v2614, %v2720
      %v2722 = vpop.f32.mrb[0].mxu0
      %2723 = vmatprep.mubr.f32.mxu0 0.0
      %v2724 = vand.u32 %v286, 4294901760
      %v2725 = vsub.f32 %v286, %v2724
      %2726 = vmatmul.mubr.f32.gmra.mrb[0].mxu0 %v2725
      %v2727 = vpop.f32.mrb[0].mxu0
      %v2728 = vadd.f32 %v2620, %v2727
      %v2729 = vpop.f32.mrb[0].mxu0
      %2730 = vmatprep.mubr.f32.mxu0 0.0
      %v2731 = vand.u32 %v289, 4294901760
      %v2732 = vsub.f32 %v289, %v2731
      %2733 = vmatmul.mubr.f32.gmra.mrb[0].mxu0 %v2732
      %v2734 = vpop.f32.mrb[0].mxu0
      %v2735 = vadd.f32 %v2626, %v2734
      %v2736 = vpop.f32.mrb[0].mxu0
      %2737 = vdwg.mxu0
      %2738 = vmatprep.subr.mxu0 0.0
      %v2739 = vand.u32 %v2379, 4294901760
      %2740 = vmatpush1.msra.mxu0 %v2739
      %2741 = vmatprep.subr.mxu0 0.0
      %v2742 = vand.u32 %v2380, 4294901760
      %2743 = vmatpush1.msra.mxu0 %v2742
      %2744 = vmatprep.subr.mxu0 0.0
      %v2745 = vand.u32 %v2381, 4294901760
      %2746 = vmatpush1.msra.mxu0 %v2745
      %2747 = vmatprep.subr.mxu0 0.0
      %v2748 = vand.u32 %v2382, 4294901760
      %2749 = vmatpush1.msra.mxu0 %v2748
      %2750 = vmatprep.subr.mxu0 0.0
      %v2751 = vand.u32 %v2383, 4294901760
      %2752 = vmatpush1.msra.mxu0 %v2751
      %2753 = vmatprep.subr.mxu0 0.0
      %v2754 = vand.u32 %v2384, 4294901760
      %2755 = vmatpush1.msra.mxu0 %v2754
      %2756 = vmatprep.subr.mxu0 0.0
      %v2757 = vand.u32 %v2385, 4294901760
      %2758 = vmatpush1.msra.mxu0 %v2757
      %2759 = vmatprep.subr.mxu0 0.0
      %v2760 = vand.u32 %v2386, 4294901760
      %2761 = vmatpush1.msra.mxu0 %v2760
      %2762 = vmatprep.subr.mxu0 0.0
      %2763 = vmatpush1.msra.mxu0 0.0
      %2764 = vmatprep.subr.mxu0 0.0
      %2765 = vmatpush1.msra.mxu0 0.0
      %2766 = vmatprep.subr.mxu0 0.0
      %2767 = vmatpush1.msra.mxu0 0.0
      %2768 = vmatprep.subr.mxu0 0.0
      %2769 = vmatpush1.msra.mxu0 0.0
      %2770 = vmatprep.subr.mxu0 0.0
      %2771 = vmatpush1.msra.mxu0 0.0
      %2772 = vmatprep.subr.mxu0 0.0
      %2773 = vmatpush1.msra.mxu0 0.0
      %2774 = vmatprep.subr.mxu0 0.0
      %2775 = vmatpush1.msra.mxu0 0.0
      %2776 = vmatprep.subr.mxu0 0.0
      %2777 = vmatpush1.msra.mxu0 0.0
      %2778 = vmatprep.subr.mxu0 0.0
      %2779 = vmatpush1.msra.mxu0 0.0
      %2780 = vmatprep.subr.mxu0 0.0
      %2781 = vmatpush1.msra.mxu0 0.0
      %2782 = vmatprep.subr.mxu0 0.0
      %2783 = vmatpush1.msra.mxu0 0.0
      %2784 = vmatprep.subr.mxu0 0.0
      %2785 = vmatpush1.msra.mxu0 0.0
      %2786 = vmatprep.subr.mxu0 0.0
      %2787 = vmatpush1.msra.mxu0 0.0
      %2788 = vmatprep.subr.mxu0 0.0
      %2789 = vmatpush1.msra.mxu0 0.0
      %2790 = vmatprep.subr.mxu0 0.0
      %2791 = vmatpush1.msra.mxu0 0.0
      %2792 = vmatprep.subr.mxu0 0.0
      %2793 = vmatpush1.msra.mxu0 0.0
      %2794 = vmatprep.subr.mxu0 0.0
      %2795 = vmatpush1.msra.mxu0 0.0
      %2796 = vmatprep.subr.mxu0 0.0
      %2797 = vmatpush1.msra.mxu0 0.0
      %2798 = vmatprep.subr.mxu0 0.0
      %2799 = vmatpush1.msra.mxu0 0.0
      %2800 = vmatprep.subr.mxu0 0.0
      %2801 = vmatpush1.msra.mxu0 0.0
      %2802 = vmatprep.subr.mxu0 0.0
      %2803 = vmatpush1.msra.mxu0 0.0
      %2804 = vmatprep.subr.mxu0 0.0
      %2805 = vmatpush1.msra.mxu0 0.0
      %2806 = vmatprep.subr.mxu0 0.0
      %2807 = vmatpush1.msra.mxu0 0.0
      %2808 = vmatprep.subr.mxu0 0.0
      %2809 = vmatpush1.msra.mxu0 0.0
      %2810 = vmatprep.mubr.f32.mxu0 0.0
      %v2811 = vand.u32 %v280, 4294901760
      %v2812 = vsub.f32 %v280, %v2811
      %v2813 = vand.u32 %v2812, 4294901760
      %2814 = vmatmul.mubr.f32.gmra.mrb[0].mxu0 %v2813
      %v2815 = vpop.f32.mrb[0].mxu0
      %v2816 = vadd.f32 %v2714, %v2815
      %v2817 = vpop.f32.mrb[0].mxu0
      %2818 = vmatprep.mubr.f32.mxu0 0.0
      %v2819 = vand.u32 %v283, 4294901760
      %v2820 = vsub.f32 %v283, %v2819
      %v2821 = vand.u32 %v2820, 4294901760
      %2822 = vmatmul.mubr.f32.gmra.mrb[0].mxu0 %v2821
      %v2823 = vpop.f32.mrb[0].mxu0
      %v2824 = vadd.f32 %v2721, %v2823
      %v2825 = vpop.f32.mrb[0].mxu0
      %2826 = vmatprep.mubr.f32.mxu0 0.0
      %v2827 = vand.u32 %v286, 4294901760
      %v2828 = vsub.f32 %v286, %v2827
      %v2829 = vand.u32 %v2828, 4294901760
      %2830 = vmatmul.mubr.f32.gmra.mrb[0].mxu0 %v2829
      %v2831 = vpop.f32.mrb[0].mxu0
      %v2832 = vadd.f32 %v2728, %v2831
      %v2833 = vpop.f32.mrb[0].mxu0
      %2834 = vmatprep.mubr.f32.mxu0 0.0
      %v2835 = vand.u32 %v289, 4294901760
      %v2836 = vsub.f32 %v289, %v2835
      %v2837 = vand.u32 %v2836, 4294901760
      %2838 = vmatmul.mubr.f32.gmra.mrb[0].mxu0 %v2837
      %v2839 = vpop.f32.mrb[0].mxu0
      %v2840 = vadd.f32 %v2735, %v2839
      %v2841 = vpop.f32.mrb[0].mxu0
      %2842 = vdwg.mxu0
      %2843 = vmatprep.subr.mxu0 0.0
      %v2844 = vand.u32 %v2379, 4294901760
      %v2845 = vsub.f32 %v2379, %v2844
      %v2846 = vand.u32 %v2845, 4294901760
      %2847 = vmatpush1.msra.mxu0 %v2846
      %2848 = vmatprep.subr.mxu0 0.0
      %v2849 = vand.u32 %v2380, 4294901760
      %v2850 = vsub.f32 %v2380, %v2849
      %v2851 = vand.u32 %v2850, 4294901760
      %2852 = vmatpush1.msra.mxu0 %v2851
      %2853 = vmatprep.subr.mxu0 0.0
      %v2854 = vand.u32 %v2381, 4294901760
      %v2855 = vsub.f32 %v2381, %v2854
      %v2856 = vand.u32 %v2855, 4294901760
      %2857 = vmatpush1.msra.mxu0 %v2856
      %2858 = vmatprep.subr.mxu0 0.0
      %v2859 = vand.u32 %v2382, 4294901760
      %v2860 = vsub.f32 %v2382, %v2859
      %v2861 = vand.u32 %v2860, 4294901760
      %2862 = vmatpush1.msra.mxu0 %v2861
      %2863 = vmatprep.subr.mxu0 0.0
      %v2864 = vand.u32 %v2383, 4294901760
      %v2865 = vsub.f32 %v2383, %v2864
      %v2866 = vand.u32 %v2865, 4294901760
      %2867 = vmatpush1.msra.mxu0 %v2866
      %2868 = vmatprep.subr.mxu0 0.0
      %v2869 = vand.u32 %v2384, 4294901760
      %v2870 = vsub.f32 %v2384, %v2869
      %v2871 = vand.u32 %v2870, 4294901760
      %2872 = vmatpush1.msra.mxu0 %v2871
      %2873 = vmatprep.subr.mxu0 0.0
      %v2874 = vand.u32 %v2385, 4294901760
      %v2875 = vsub.f32 %v2385, %v2874
      %v2876 = vand.u32 %v2875, 4294901760
      %2877 = vmatpush1.msra.mxu0 %v2876
      %2878 = vmatprep.subr.mxu0 0.0
      %v2879 = vand.u32 %v2386, 4294901760
      %v2880 = vsub.f32 %v2386, %v2879
      %v2881 = vand.u32 %v2880, 4294901760
      %2882 = vmatpush1.msra.mxu0 %v2881
      %2883 = vmatprep.subr.mxu0 0.0
      %2884 = vmatpush1.msra.mxu0 0.0
      %2885 = vmatprep.subr.mxu0 0.0
      %2886 = vmatpush1.msra.mxu0 0.0
      %2887 = vmatprep.subr.mxu0 0.0
      %2888 = vmatpush1.msra.mxu0 0.0
      %2889 = vmatprep.subr.mxu0 0.0
      %2890 = vmatpush1.msra.mxu0 0.0
      %2891 = vmatprep.subr.mxu0 0.0
      %2892 = vmatpush1.msra.mxu0 0.0
      %2893 = vmatprep.subr.mxu0 0.0
      %2894 = vmatpush1.msra.mxu0 0.0
      %2895 = vmatprep.subr.mxu0 0.0
      %2896 = vmatpush1.msra.mxu0 0.0
      %2897 = vmatprep.subr.mxu0 0.0
      %2898 = vmatpush1.msra.mxu0 0.0
      %2899 = vmatprep.subr.mxu0 0.0
      %2900 = vmatpush1.msra.mxu0 0.0
      %2901 = vmatprep.subr.mxu0 0.0
      %2902 = vmatpush1.msra.mxu0 0.0
      %2903 = vmatprep.subr.mxu0 0.0
      %2904 = vmatpush1.msra.mxu0 0.0
      %2905 = vmatprep.subr.mxu0 0.0
      %2906 = vmatpush1.msra.mxu0 0.0
      %2907 = vmatprep.subr.mxu0 0.0
      %2908 = vmatpush1.msra.mxu0 0.0
      %2909 = vmatprep.subr.mxu0 0.0
      %2910 = vmatpush1.msra.mxu0 0.0
      %2911 = vmatprep.subr.mxu0 0.0
      %2912 = vmatpush1.msra.mxu0 0.0
      %2913 = vmatprep.subr.mxu0 0.0
      %2914 = vmatpush1.msra.mxu0 0.0
      %2915 = vmatprep.subr.mxu0 0.0
      %2916 = vmatpush1.msra.mxu0 0.0
      %2917 = vmatprep.subr.mxu0 0.0
      %2918 = vmatpush1.msra.mxu0 0.0
      %2919 = vmatprep.subr.mxu0 0.0
      %2920 = vmatpush1.msra.mxu0 0.0
      %2921 = vmatprep.subr.mxu0 0.0
      %2922 = vmatpush1.msra.mxu0 0.0
      %2923 = vmatprep.subr.mxu0 0.0
      %2924 = vmatpush1.msra.mxu0 0.0
      %2925 = vmatprep.subr.mxu0 0.0
      %2926 = vmatpush1.msra.mxu0 0.0
      %2927 = vmatprep.subr.mxu0 0.0
      %2928 = vmatpush1.msra.mxu0 0.0
      %2929 = vmatprep.subr.mxu0 0.0
      %2930 = vmatpush1.msra.mxu0 0.0
      %2931 = vmatprep.mubr.f32.mxu0 0.0
      %v2932 = vand.u32 %v280, 4294901760
      %2933 = vmatmul.mubr.f32.gmra.mrb[0].mxu0 %v2932
      %v2934 = vpop.f32.mrb[0].mxu0
      %v2935 = vadd.f32 %v2816, %v2934
      %v2936 = vpop.f32.mrb[0].mxu0
      %2937 = vmatprep.mubr.f32.mxu0 0.0
      %v2938 = vand.u32 %v283, 4294901760
      %2939 = vmatmul.mubr.f32.gmra.mrb[0].mxu0 %v2938
      %v2940 = vpop.f32.mrb[0].mxu0
      %v2941 = vadd.f32 %v2824, %v2940
      %v2942 = vpop.f32.mrb[0].mxu0
      %2943 = vmatprep.mubr.f32.mxu0 0.0
      %v2944 = vand.u32 %v286, 4294901760
      %2945 = vmatmul.mubr.f32.gmra.mrb[0].mxu0 %v2944
      %v2946 = vpop.f32.mrb[0].mxu0
      %v2947 = vadd.f32 %v2832, %v2946
      %v2948 = vpop.f32.mrb[0].mxu0
      %2949 = vmatprep.mubr.f32.mxu0 0.0
      %v2950 = vand.u32 %v289, 4294901760
      %2951 = vmatmul.mubr.f32.gmra.mrb[0].mxu0 %v2950
      %v2952 = vpop.f32.mrb[0].mxu0
      %v2953 = vadd.f32 %v2840, %v2952
      %v2954 = vpop.f32.mrb[0].mxu0
      %2955 = vdwg.mxu0
      %2956 = vmatprep.subr.mxu0 0.0
      %v2957 = vand.u32 %v2379, 4294901760
      %2958 = vmatpush1.msra.mxu0 %v2957
      %2959 = vmatprep.subr.mxu0 0.0
      %v2960 = vand.u32 %v2380, 4294901760
      %2961 = vmatpush1.msra.mxu0 %v2960
      %2962 = vmatprep.subr.mxu0 0.0
      %v2963 = vand.u32 %v2381, 4294901760
      %2964 = vmatpush1.msra.mxu0 %v2963
      %2965 = vmatprep.subr.mxu0 0.0
      %v2966 = vand.u32 %v2382, 4294901760
      %2967 = vmatpush1.msra.mxu0 %v2966
      %2968 = vmatprep.subr.mxu0 0.0
      %v2969 = vand.u32 %v2383, 4294901760
      %2970 = vmatpush1.msra.mxu0 %v2969
      %2971 = vmatprep.subr.mxu0 0.0
      %v2972 = vand.u32 %v2384, 4294901760
      %2973 = vmatpush1.msra.mxu0 %v2972
      %2974 = vmatprep.subr.mxu0 0.0
      %v2975 = vand.u32 %v2385, 4294901760
      %2976 = vmatpush1.msra.mxu0 %v2975
      %2977 = vmatprep.subr.mxu0 0.0
      %v2978 = vand.u32 %v2386, 4294901760
      %2979 = vmatpush1.msra.mxu0 %v2978
      %2980 = vmatprep.subr.mxu0 0.0
      %2981 = vmatpush1.msra.mxu0 0.0
      %2982 = vmatprep.subr.mxu0 0.0
      %2983 = vmatpush1.msra.mxu0 0.0
      %2984 = vmatprep.subr.mxu0 0.0
      %2985 = vmatpush1.msra.mxu0 0.0
      %2986 = vmatprep.subr.mxu0 0.0
      %2987 = vmatpush1.msra.mxu0 0.0
      %2988 = vmatprep.subr.mxu0 0.0
      %2989 = vmatpush1.msra.mxu0 0.0
      %2990 = vmatprep.subr.mxu0 0.0
      %2991 = vmatpush1.msra.mxu0 0.0
      %2992 = vmatprep.subr.mxu0 0.0
      %2993 = vmatpush1.msra.mxu0 0.0
      %2994 = vmatprep.subr.mxu0 0.0
      %2995 = vmatpush1.msra.mxu0 0.0
      %2996 = vmatprep.subr.mxu0 0.0
      %2997 = vmatpush1.msra.mxu0 0.0
      %2998 = vmatprep.subr.mxu0 0.0
      %2999 = vmatpush1.msra.mxu0 0.0
      %3000 = vmatprep.subr.mxu0 0.0
      %3001 = vmatpush1.msra.mxu0 0.0
      %3002 = vmatprep.subr.mxu0 0.0
      %3003 = vmatpush1.msra.mxu0 0.0
      %3004 = vmatprep.subr.mxu0 0.0
      %3005 = vmatpush1.msra.mxu0 0.0
      %3006 = vmatprep.subr.mxu0 0.0
      %3007 = vmatpush1.msra.mxu0 0.0
      %3008 = vmatprep.subr.mxu0 0.0
      %3009 = vmatpush1.msra.mxu0 0.0
      %3010 = vmatprep.subr.mxu0 0.0
      %3011 = vmatpush1.msra.mxu0 0.0
      %3012 = vmatprep.subr.mxu0 0.0
      %3013 = vmatpush1.msra.mxu0 0.0
      %3014 = vmatprep.subr.mxu0 0.0
      %3015 = vmatpush1.msra.mxu0 0.0
      %3016 = vmatprep.subr.mxu0 0.0
      %3017 = vmatpush1.msra.mxu0 0.0
      %3018 = vmatprep.subr.mxu0 0.0
      %3019 = vmatpush1.msra.mxu0 0.0
      %3020 = vmatprep.subr.mxu0 0.0
      %3021 = vmatpush1.msra.mxu0 0.0
      %3022 = vmatprep.subr.mxu0 0.0
      %3023 = vmatpush1.msra.mxu0 0.0
      %3024 = vmatprep.subr.mxu0 0.0
      %3025 = vmatpush1.msra.mxu0 0.0
      %3026 = vmatprep.subr.mxu0 0.0
      %3027 = vmatpush1.msra.mxu0 0.0
      %3028 = vmatprep.mubr.f32.mxu0 0.0
      %v3029 = vand.u32 %v280, 4294901760
      %3030 = vmatmul.mubr.f32.gmra.mrb[0].mxu0 %v3029
      %v3031 = vpop.f32.mrb[0].mxu0
      %v3032 = vadd.f32 %v2935, %v3031
      %v3033 = vpop.f32.mrb[0].mxu0
      %3034 = vmatprep.mubr.f32.mxu0 0.0
      %v3035 = vand.u32 %v283, 4294901760
      %3036 = vmatmul.mubr.f32.gmra.mrb[0].mxu0 %v3035
      %v3037 = vpop.f32.mrb[0].mxu0
      %v3038 = vadd.f32 %v2941, %v3037
      %v3039 = vpop.f32.mrb[0].mxu0
      %3040 = vmatprep.mubr.f32.mxu0 0.0
      %v3041 = vand.u32 %v286, 4294901760
      %3042 = vmatmul.mubr.f32.gmra.mrb[0].mxu0 %v3041
      %v3043 = vpop.f32.mrb[0].mxu0
      %v3044 = vadd.f32 %v2947, %v3043
      %v3045 = vpop.f32.mrb[0].mxu0
      %3046 = vmatprep.mubr.f32.mxu0 0.0
      %v3047 = vand.u32 %v289, 4294901760
      %3048 = vmatmul.mubr.f32.gmra.mrb[0].mxu0 %v3047
      %v3049 = vpop.f32.mrb[0].mxu0
      %v3050 = vadd.f32 %v2953, %v3049
      %v3051 = vpop.f32.mrb[0].mxu0
      %3052 = vdwg.mxu0
      %s3053 = scalar_lea.vmem %s176, 96
      %3054 = vst.msk [vmem:[%s3053] sm:$0xff] %vm193, %v3032
      %3055 = vst.msk [vmem:[%s3053 + $0x8] sm:$0xff] %vm193, %v3038
      %3056 = vst.msk [vmem:[%s3053 + $0x10] sm:$0xff] %vm193, %v3044
      %3057 = vst.msk [vmem:[%s3053 + $0x18] sm:$0xff] %vm193, %v3050
      %v3058 = vlaneseq
      %v3059 = vshrl.u32 %v3058, 7
      %v3060 = vsub.s32 4, %v3059
      %v3061 = vrot.slane %v182, %v3060
      %vm3062 = vcmp.eq.s32.totalorder %v3061, %v242
      %vm3063 = vcmp.eq.s32.totalorder %v3061, %v243
      %vm3064 = vcmp.eq.s32.totalorder %v3061, %v244
      %vm3065 = vcmp.eq.s32.totalorder %v3061, %v245
      %vm3066 = vcmp.eq.s32.totalorder %v3061, %v246
      %vm3067 = vcmp.eq.s32.totalorder %v3061, %v247
      %vm3068 = vcmp.eq.s32.totalorder %v3061, %v248
      %vm3069 = vcmp.eq.s32.totalorder %v3061, %v249
      %v3070 = vsel %vm3062, 1, 0
      %v3071 = vsel %vm3063, 1, 0
      %v3072 = vsel %vm3064, 1, 0
      %v3073 = vsel %vm3065, 1, 0
      %v3074 = vsel %vm3066, 1, 0
      %v3075 = vsel %vm3067, 1, 0
      %v3076 = vsel %vm3068, 1, 0
      %v3077 = vsel %vm3069, 1, 0
      %v3078 = vcvt.s32.f32 %v3070
      %v3079 = vcvt.s32.f32 %v3071
      %v3080 = vcvt.s32.f32 %v3072
      %v3081 = vcvt.s32.f32 %v3073
      %v3082 = vcvt.s32.f32 %v3074
      %v3083 = vcvt.s32.f32 %v3075
      %v3084 = vcvt.s32.f32 %v3076
      %v3085 = vcvt.s32.f32 %v3077
      %3086 = vmatprep.subr.mxu0 0.0
      %v3087 = vand.u32 %v3078, 4294901760
      %3088 = vmatpush1.msra.mxu0 %v3087
      %3089 = vmatprep.subr.mxu0 0.0
      %v3090 = vand.u32 %v3079, 4294901760
      %3091 = vmatpush1.msra.mxu0 %v3090
      %3092 = vmatprep.subr.mxu0 0.0
      %v3093 = vand.u32 %v3080, 4294901760
      %3094 = vmatpush1.msra.mxu0 %v3093
      %3095 = vmatprep.subr.mxu0 0.0
      %v3096 = vand.u32 %v3081, 4294901760
      %3097 = vmatpush1.msra.mxu0 %v3096
      %3098 = vmatprep.subr.mxu0 0.0
      %v3099 = vand.u32 %v3082, 4294901760
      %3100 = vmatpush1.msra.mxu0 %v3099
      %3101 = vmatprep.subr.mxu0 0.0
      %v3102 = vand.u32 %v3083, 4294901760
      %3103 = vmatpush1.msra.mxu0 %v3102
      %3104 = vmatprep.subr.mxu0 0.0
      %v3105 = vand.u32 %v3084, 4294901760
      %3106 = vmatpush1.msra.mxu0 %v3105
      %3107 = vmatprep.subr.mxu0 0.0
      %v3108 = vand.u32 %v3085, 4294901760
      %3109 = vmatpush1.msra.mxu0 %v3108
      %3110 = vmatprep.subr.mxu0 0.0
      %3111 = vmatpush1.msra.mxu0 0.0
      %3112 = vmatprep.subr.mxu0 0.0
      %3113 = vmatpush1.msra.mxu0 0.0
      %3114 = vmatprep.subr.mxu0 0.0
      %3115 = vmatpush1.msra.mxu0 0.0
      %3116 = vmatprep.subr.mxu0 0.0
      %3117 = vmatpush1.msra.mxu0 0.0
      %3118 = vmatprep.subr.mxu0 0.0
      %3119 = vmatpush1.msra.mxu0 0.0
      %3120 = vmatprep.subr.mxu0 0.0
      %3121 = vmatpush1.msra.mxu0 0.0
      %3122 = vmatprep.subr.mxu0 0.0
      %3123 = vmatpush1.msra.mxu0 0.0
      %3124 = vmatprep.subr.mxu0 0.0
      %3125 = vmatpush1.msra.mxu0 0.0
      %3126 = vmatprep.subr.mxu0 0.0
      %3127 = vmatpush1.msra.mxu0 0.0
      %3128 = vmatprep.subr.mxu0 0.0
      %3129 = vmatpush1.msra.mxu0 0.0
      %3130 = vmatprep.subr.mxu0 0.0
      %3131 = vmatpush1.msra.mxu0 0.0
      %3132 = vmatprep.subr.mxu0 0.0
      %3133 = vmatpush1.msra.mxu0 0.0
      %3134 = vmatprep.subr.mxu0 0.0
      %3135 = vmatpush1.msra.mxu0 0.0
      %3136 = vmatprep.subr.mxu0 0.0
      %3137 = vmatpush1.msra.mxu0 0.0
      %3138 = vmatprep.subr.mxu0 0.0
      %3139 = vmatpush1.msra.mxu0 0.0
      %3140 = vmatprep.subr.mxu0 0.0
      %3141 = vmatpush1.msra.mxu0 0.0
      %3142 = vmatprep.subr.mxu0 0.0
      %3143 = vmatpush1.msra.mxu0 0.0
      %3144 = vmatprep.subr.mxu0 0.0
      %3145 = vmatpush1.msra.mxu0 0.0
      %3146 = vmatprep.subr.mxu0 0.0
      %3147 = vmatpush1.msra.mxu0 0.0
      %3148 = vmatprep.subr.mxu0 0.0
      %3149 = vmatpush1.msra.mxu0 0.0
      %3150 = vmatprep.subr.mxu0 0.0
      %3151 = vmatpush1.msra.mxu0 0.0
      %3152 = vmatprep.subr.mxu0 0.0
      %3153 = vmatpush1.msra.mxu0 0.0
      %3154 = vmatprep.subr.mxu0 0.0
      %3155 = vmatpush1.msra.mxu0 0.0
      %3156 = vmatprep.subr.mxu0 0.0
      %3157 = vmatpush1.msra.mxu0 0.0
      %3158 = vmatprep.mubr.f32.mxu0 0.0
      %v3159 = vand.u32 %v280, 4294901760
      %v3160 = vsub.f32 %v280, %v3159
      %v3161 = vand.u32 %v3160, 4294901760
      %v3162 = vsub.f32 %v3160, %v3161
      %v3163 = vand.u32 %v3162, 4294901760
      %3164 = vmatmul.mubr.f32.gmra.mrb[0].mxu0 %v3163
      %v3165 = vpop.f32.mrb[0].mxu0
      %v3166 = vadd.f32 0.0, %v3165
      %v3167 = vpop.f32.mrb[0].mxu0
      %3168 = vmatprep.mubr.f32.mxu0 0.0
      %v3169 = vand.u32 %v283, 4294901760
      %v3170 = vsub.f32 %v283, %v3169
      %v3171 = vand.u32 %v3170, 4294901760
      %v3172 = vsub.f32 %v3170, %v3171
      %v3173 = vand.u32 %v3172, 4294901760
      %3174 = vmatmul.mubr.f32.gmra.mrb[0].mxu0 %v3173
      %v3175 = vpop.f32.mrb[0].mxu0
      %v3176 = vadd.f32 0.0, %v3175
      %v3177 = vpop.f32.mrb[0].mxu0
      %3178 = vmatprep.mubr.f32.mxu0 0.0
      %v3179 = vand.u32 %v286, 4294901760
      %v3180 = vsub.f32 %v286, %v3179
      %v3181 = vand.u32 %v3180, 4294901760
      %v3182 = vsub.f32 %v3180, %v3181
      %v3183 = vand.u32 %v3182, 4294901760
      %3184 = vmatmul.mubr.f32.gmra.mrb[0].mxu0 %v3183
      %v3185 = vpop.f32.mrb[0].mxu0
      %v3186 = vadd.f32 0.0, %v3185
      %v3187 = vpop.f32.mrb[0].mxu0
      %3188 = vmatprep.mubr.f32.mxu0 0.0
      %v3189 = vand.u32 %v289, 4294901760
      %v3190 = vsub.f32 %v289, %v3189
      %v3191 = vand.u32 %v3190, 4294901760
      %v3192 = vsub.f32 %v3190, %v3191
      %v3193 = vand.u32 %v3192, 4294901760
      %3194 = vmatmul.mubr.f32.gmra.mrb[0].mxu0 %v3193
      %v3195 = vpop.f32.mrb[0].mxu0
      %v3196 = vadd.f32 0.0, %v3195
      %v3197 = vpop.f32.mrb[0].mxu0
      %3198 = vdwg.mxu0
      %3199 = vmatprep.subr.mxu0 0.0
      %v3200 = vand.u32 %v3078, 4294901760
      %v3201 = vsub.f32 %v3078, %v3200
      %v3202 = vand.u32 %v3201, 4294901760
      %v3203 = vsub.f32 %v3201, %v3202
      %v3204 = vand.u32 %v3203, 4294901760
      %3205 = vmatpush1.msra.mxu0 %v3204
      %3206 = vmatprep.subr.mxu0 0.0
      %v3207 = vand.u32 %v3079, 4294901760
      %v3208 = vsub.f32 %v3079, %v3207
      %v3209 = vand.u32 %v3208, 4294901760
      %v3210 = vsub.f32 %v3208, %v3209
      %v3211 = vand.u32 %v3210, 4294901760
      %3212 = vmatpush1.msra.mxu0 %v3211
      %3213 = vmatprep.subr.mxu0 0.0
      %v3214 = vand.u32 %v3080, 4294901760
      %v3215 = vsub.f32 %v3080, %v3214
      %v3216 = vand.u32 %v3215, 4294901760
      %v3217 = vsub.f32 %v3215, %v3216
      %v3218 = vand.u32 %v3217, 4294901760
      %3219 = vmatpush1.msra.mxu0 %v3218
      %3220 = vmatprep.subr.mxu0 0.0
      %v3221 = vand.u32 %v3081, 4294901760
      %v3222 = vsub.f32 %v3081, %v3221
      %v3223 = vand.u32 %v3222, 4294901760
      %v3224 = vsub.f32 %v3222, %v3223
      %v3225 = vand.u32 %v3224, 4294901760
      %3226 = vmatpush1.msra.mxu0 %v3225
      %3227 = vmatprep.subr.mxu0 0.0
      %v3228 = vand.u32 %v3082, 4294901760
      %v3229 = vsub.f32 %v3082, %v3228
      %v3230 = vand.u32 %v3229, 4294901760
      %v3231 = vsub.f32 %v3229, %v3230
      %v3232 = vand.u32 %v3231, 4294901760
      %3233 = vmatpush1.msra.mxu0 %v3232
      %3234 = vmatprep.subr.mxu0 0.0
      %v3235 = vand.u32 %v3083, 4294901760
      %v3236 = vsub.f32 %v3083, %v3235
      %v3237 = vand.u32 %v3236, 4294901760
      %v3238 = vsub.f32 %v3236, %v3237
      %v3239 = vand.u32 %v3238, 4294901760
      %3240 = vmatpush1.msra.mxu0 %v3239
      %3241 = vmatprep.subr.mxu0 0.0
      %v3242 = vand.u32 %v3084, 4294901760
      %v3243 = vsub.f32 %v3084, %v3242
      %v3244 = vand.u32 %v3243, 4294901760
      %v3245 = vsub.f32 %v3243, %v3244
      %v3246 = vand.u32 %v3245, 4294901760
      %3247 = vmatpush1.msra.mxu0 %v3246
      %3248 = vmatprep.subr.mxu0 0.0
      %v3249 = vand.u32 %v3085, 4294901760
      %v3250 = vsub.f32 %v3085, %v3249
      %v3251 = vand.u32 %v3250, 4294901760
      %v3252 = vsub.f32 %v3250, %v3251
      %v3253 = vand.u32 %v3252, 4294901760
      %3254 = vmatpush1.msra.mxu0 %v3253
      %3255 = vmatprep.subr.mxu0 0.0
      %3256 = vmatpush1.msra.mxu0 0.0
      %3257 = vmatprep.subr.mxu0 0.0
      %3258 = vmatpush1.msra.mxu0 0.0
      %3259 = vmatprep.subr.mxu0 0.0
      %3260 = vmatpush1.msra.mxu0 0.0
      %3261 = vmatprep.subr.mxu0 0.0
      %3262 = vmatpush1.msra.mxu0 0.0
      %3263 = vmatprep.subr.mxu0 0.0
      %3264 = vmatpush1.msra.mxu0 0.0
      %3265 = vmatprep.subr.mxu0 0.0
      %3266 = vmatpush1.msra.mxu0 0.0
      %3267 = vmatprep.subr.mxu0 0.0
      %3268 = vmatpush1.msra.mxu0 0.0
      %3269 = vmatprep.subr.mxu0 0.0
      %3270 = vmatpush1.msra.mxu0 0.0
      %3271 = vmatprep.subr.mxu0 0.0
      %3272 = vmatpush1.msra.mxu0 0.0
      %3273 = vmatprep.subr.mxu0 0.0
      %3274 = vmatpush1.msra.mxu0 0.0
      %3275 = vmatprep.subr.mxu0 0.0
      %3276 = vmatpush1.msra.mxu0 0.0
      %3277 = vmatprep.subr.mxu0 0.0
      %3278 = vmatpush1.msra.mxu0 0.0
      %3279 = vmatprep.subr.mxu0 0.0
      %3280 = vmatpush1.msra.mxu0 0.0
      %3281 = vmatprep.subr.mxu0 0.0
      %3282 = vmatpush1.msra.mxu0 0.0
      %3283 = vmatprep.subr.mxu0 0.0
      %3284 = vmatpush1.msra.mxu0 0.0
      %3285 = vmatprep.subr.mxu0 0.0
      %3286 = vmatpush1.msra.mxu0 0.0
      %3287 = vmatprep.subr.mxu0 0.0
      %3288 = vmatpush1.msra.mxu0 0.0
      %3289 = vmatprep.subr.mxu0 0.0
      %3290 = vmatpush1.msra.mxu0 0.0
      %3291 = vmatprep.subr.mxu0 0.0
      %3292 = vmatpush1.msra.mxu0 0.0
      %3293 = vmatprep.subr.mxu0 0.0
      %3294 = vmatpush1.msra.mxu0 0.0
      %3295 = vmatprep.subr.mxu0 0.0
      %3296 = vmatpush1.msra.mxu0 0.0
      %3297 = vmatprep.subr.mxu0 0.0
      %3298 = vmatpush1.msra.mxu0 0.0
      %3299 = vmatprep.subr.mxu0 0.0
      %3300 = vmatpush1.msra.mxu0 0.0
      %3301 = vmatprep.subr.mxu0 0.0
      %3302 = vmatpush1.msra.mxu0 0.0
      %3303 = vmatprep.mubr.f32.mxu0 0.0
      %v3304 = vand.u32 %v280, 4294901760
      %3305 = vmatmul.mubr.f32.gmra.mrb[0].mxu0 %v3304
      %v3306 = vpop.f32.mrb[0].mxu0
      %v3307 = vadd.f32 %v3166, %v3306
      %v3308 = vpop.f32.mrb[0].mxu0
      %3309 = vmatprep.mubr.f32.mxu0 0.0
      %v3310 = vand.u32 %v283, 4294901760
      %3311 = vmatmul.mubr.f32.gmra.mrb[0].mxu0 %v3310
      %v3312 = vpop.f32.mrb[0].mxu0
      %v3313 = vadd.f32 %v3176, %v3312
      %v3314 = vpop.f32.mrb[0].mxu0
      %3315 = vmatprep.mubr.f32.mxu0 0.0
      %v3316 = vand.u32 %v286, 4294901760
      %3317 = vmatmul.mubr.f32.gmra.mrb[0].mxu0 %v3316
      %v3318 = vpop.f32.mrb[0].mxu0
      %v3319 = vadd.f32 %v3186, %v3318
      %v3320 = vpop.f32.mrb[0].mxu0
      %3321 = vmatprep.mubr.f32.mxu0 0.0
      %v3322 = vand.u32 %v289, 4294901760
      %3323 = vmatmul.mubr.f32.gmra.mrb[0].mxu0 %v3322
      %v3324 = vpop.f32.mrb[0].mxu0
      %v3325 = vadd.f32 %v3196, %v3324
      %v3326 = vpop.f32.mrb[0].mxu0
      %3327 = vdwg.mxu0
      %3328 = vmatprep.subr.mxu0 0.0
      %v3329 = vand.u32 %v3078, 4294901760
      %v3330 = vsub.f32 %v3078, %v3329
      %3331 = vmatpush1.msra.mxu0 %v3330
      %3332 = vmatprep.subr.mxu0 0.0
      %v3333 = vand.u32 %v3079, 4294901760
      %v3334 = vsub.f32 %v3079, %v3333
      %3335 = vmatpush1.msra.mxu0 %v3334
      %3336 = vmatprep.subr.mxu0 0.0
      %v3337 = vand.u32 %v3080, 4294901760
      %v3338 = vsub.f32 %v3080, %v3337
      %3339 = vmatpush1.msra.mxu0 %v3338
      %3340 = vmatprep.subr.mxu0 0.0
      %v3341 = vand.u32 %v3081, 4294901760
      %v3342 = vsub.f32 %v3081, %v3341
      %3343 = vmatpush1.msra.mxu0 %v3342
      %3344 = vmatprep.subr.mxu0 0.0
      %v3345 = vand.u32 %v3082, 4294901760
      %v3346 = vsub.f32 %v3082, %v3345
      %3347 = vmatpush1.msra.mxu0 %v3346
      %3348 = vmatprep.subr.mxu0 0.0
      %v3349 = vand.u32 %v3083, 4294901760
      %v3350 = vsub.f32 %v3083, %v3349
      %3351 = vmatpush1.msra.mxu0 %v3350
      %3352 = vmatprep.subr.mxu0 0.0
      %v3353 = vand.u32 %v3084, 4294901760
      %v3354 = vsub.f32 %v3084, %v3353
      %3355 = vmatpush1.msra.mxu0 %v3354
      %3356 = vmatprep.subr.mxu0 0.0
      %v3357 = vand.u32 %v3085, 4294901760
      %v3358 = vsub.f32 %v3085, %v3357
      %3359 = vmatpush1.msra.mxu0 %v3358
      %3360 = vmatprep.subr.mxu0 0.0
      %3361 = vmatpush1.msra.mxu0 0.0
      %3362 = vmatprep.subr.mxu0 0.0
      %3363 = vmatpush1.msra.mxu0 0.0
      %3364 = vmatprep.subr.mxu0 0.0
      %3365 = vmatpush1.msra.mxu0 0.0
      %3366 = vmatprep.subr.mxu0 0.0
      %3367 = vmatpush1.msra.mxu0 0.0
      %3368 = vmatprep.subr.mxu0 0.0
      %3369 = vmatpush1.msra.mxu0 0.0
      %3370 = vmatprep.subr.mxu0 0.0
      %3371 = vmatpush1.msra.mxu0 0.0
      %3372 = vmatprep.subr.mxu0 0.0
      %3373 = vmatpush1.msra.mxu0 0.0
      %3374 = vmatprep.subr.mxu0 0.0
      %3375 = vmatpush1.msra.mxu0 0.0
      %3376 = vmatprep.subr.mxu0 0.0
      %3377 = vmatpush1.msra.mxu0 0.0
      %3378 = vmatprep.subr.mxu0 0.0
      %3379 = vmatpush1.msra.mxu0 0.0
      %3380 = vmatprep.subr.mxu0 0.0
      %3381 = vmatpush1.msra.mxu0 0.0
      %3382 = vmatprep.subr.mxu0 0.0
      %3383 = vmatpush1.msra.mxu0 0.0
      %3384 = vmatprep.subr.mxu0 0.0
      %3385 = vmatpush1.msra.mxu0 0.0
      %3386 = vmatprep.subr.mxu0 0.0
      %3387 = vmatpush1.msra.mxu0 0.0
      %3388 = vmatprep.subr.mxu0 0.0
      %3389 = vmatpush1.msra.mxu0 0.0
      %3390 = vmatprep.subr.mxu0 0.0
      %3391 = vmatpush1.msra.mxu0 0.0
      %3392 = vmatprep.subr.mxu0 0.0
      %3393 = vmatpush1.msra.mxu0 0.0
      %3394 = vmatprep.subr.mxu0 0.0
      %3395 = vmatpush1.msra.mxu0 0.0
      %3396 = vmatprep.subr.mxu0 0.0
      %3397 = vmatpush1.msra.mxu0 0.0
      %3398 = vmatprep.subr.mxu0 0.0
      %3399 = vmatpush1.msra.mxu0 0.0
      %3400 = vmatprep.subr.mxu0 0.0
      %3401 = vmatpush1.msra.mxu0 0.0
      %3402 = vmatprep.subr.mxu0 0.0
      %3403 = vmatpush1.msra.mxu0 0.0
      %3404 = vmatprep.subr.mxu0 0.0
      %3405 = vmatpush1.msra.mxu0 0.0
      %3406 = vmatprep.subr.mxu0 0.0
      %3407 = vmatpush1.msra.mxu0 0.0
      %3408 = vmatprep.mubr.f32.mxu0 0.0
      %v3409 = vand.u32 %v280, 4294901760
      %v3410 = vsub.f32 %v280, %v3409
      %3411 = vmatmul.mubr.f32.gmra.mrb[0].mxu0 %v3410
      %v3412 = vpop.f32.mrb[0].mxu0
      %v3413 = vadd.f32 %v3307, %v3412
      %v3414 = vpop.f32.mrb[0].mxu0
      %3415 = vmatprep.mubr.f32.mxu0 0.0
      %v3416 = vand.u32 %v283, 4294901760
      %v3417 = vsub.f32 %v283, %v3416
      %3418 = vmatmul.mubr.f32.gmra.mrb[0].mxu0 %v3417
      %v3419 = vpop.f32.mrb[0].mxu0
      %v3420 = vadd.f32 %v3313, %v3419
      %v3421 = vpop.f32.mrb[0].mxu0
      %3422 = vmatprep.mubr.f32.mxu0 0.0
      %v3423 = vand.u32 %v286, 4294901760
      %v3424 = vsub.f32 %v286, %v3423
      %3425 = vmatmul.mubr.f32.gmra.mrb[0].mxu0 %v3424
      %v3426 = vpop.f32.mrb[0].mxu0
      %v3427 = vadd.f32 %v3319, %v3426
      %v3428 = vpop.f32.mrb[0].mxu0
      %3429 = vmatprep.mubr.f32.mxu0 0.0
      %v3430 = vand.u32 %v289, 4294901760
      %v3431 = vsub.f32 %v289, %v3430
      %3432 = vmatmul.mubr.f32.gmra.mrb[0].mxu0 %v3431
      %v3433 = vpop.f32.mrb[0].mxu0
      %v3434 = vadd.f32 %v3325, %v3433
      %v3435 = vpop.f32.mrb[0].mxu0
      %3436 = vdwg.mxu0
      %3437 = vmatprep.subr.mxu0 0.0
      %v3438 = vand.u32 %v3078, 4294901760
      %3439 = vmatpush1.msra.mxu0 %v3438
      %3440 = vmatprep.subr.mxu0 0.0
      %v3441 = vand.u32 %v3079, 4294901760
      %3442 = vmatpush1.msra.mxu0 %v3441
      %3443 = vmatprep.subr.mxu0 0.0
      %v3444 = vand.u32 %v3080, 4294901760
      %3445 = vmatpush1.msra.mxu0 %v3444
      %3446 = vmatprep.subr.mxu0 0.0
      %v3447 = vand.u32 %v3081, 4294901760
      %3448 = vmatpush1.msra.mxu0 %v3447
      %3449 = vmatprep.subr.mxu0 0.0
      %v3450 = vand.u32 %v3082, 4294901760
      %3451 = vmatpush1.msra.mxu0 %v3450
      %3452 = vmatprep.subr.mxu0 0.0
      %v3453 = vand.u32 %v3083, 4294901760
      %3454 = vmatpush1.msra.mxu0 %v3453
      %3455 = vmatprep.subr.mxu0 0.0
      %v3456 = vand.u32 %v3084, 4294901760
      %3457 = vmatpush1.msra.mxu0 %v3456
      %3458 = vmatprep.subr.mxu0 0.0
      %v3459 = vand.u32 %v3085, 4294901760
      %3460 = vmatpush1.msra.mxu0 %v3459
      %3461 = vmatprep.subr.mxu0 0.0
      %3462 = vmatpush1.msra.mxu0 0.0
      %3463 = vmatprep.subr.mxu0 0.0
      %3464 = vmatpush1.msra.mxu0 0.0
      %3465 = vmatprep.subr.mxu0 0.0
      %3466 = vmatpush1.msra.mxu0 0.0
      %3467 = vmatprep.subr.mxu0 0.0
      %3468 = vmatpush1.msra.mxu0 0.0
      %3469 = vmatprep.subr.mxu0 0.0
      %3470 = vmatpush1.msra.mxu0 0.0
      %3471 = vmatprep.subr.mxu0 0.0
      %3472 = vmatpush1.msra.mxu0 0.0
      %3473 = vmatprep.subr.mxu0 0.0
      %3474 = vmatpush1.msra.mxu0 0.0
      %3475 = vmatprep.subr.mxu0 0.0
      %3476 = vmatpush1.msra.mxu0 0.0
      %3477 = vmatprep.subr.mxu0 0.0
      %3478 = vmatpush1.msra.mxu0 0.0
      %3479 = vmatprep.subr.mxu0 0.0
      %3480 = vmatpush1.msra.mxu0 0.0
      %3481 = vmatprep.subr.mxu0 0.0
      %3482 = vmatpush1.msra.mxu0 0.0
      %3483 = vmatprep.subr.mxu0 0.0
      %3484 = vmatpush1.msra.mxu0 0.0
      %3485 = vmatprep.subr.mxu0 0.0
      %3486 = vmatpush1.msra.mxu0 0.0
      %3487 = vmatprep.subr.mxu0 0.0
      %3488 = vmatpush1.msra.mxu0 0.0
      %3489 = vmatprep.subr.mxu0 0.0
      %3490 = vmatpush1.msra.mxu0 0.0
      %3491 = vmatprep.subr.mxu0 0.0
      %3492 = vmatpush1.msra.mxu0 0.0
      %3493 = vmatprep.subr.mxu0 0.0
      %3494 = vmatpush1.msra.mxu0 0.0
      %3495 = vmatprep.subr.mxu0 0.0
      %3496 = vmatpush1.msra.mxu0 0.0
      %3497 = vmatprep.subr.mxu0 0.0
      %3498 = vmatpush1.msra.mxu0 0.0
      %3499 = vmatprep.subr.mxu0 0.0
      %3500 = vmatpush1.msra.mxu0 0.0
      %3501 = vmatprep.subr.mxu0 0.0
      %3502 = vmatpush1.msra.mxu0 0.0
      %3503 = vmatprep.subr.mxu0 0.0
      %3504 = vmatpush1.msra.mxu0 0.0
      %3505 = vmatprep.subr.mxu0 0.0
      %3506 = vmatpush1.msra.mxu0 0.0
      %3507 = vmatprep.subr.mxu0 0.0
      %3508 = vmatpush1.msra.mxu0 0.0
      %3509 = vmatprep.mubr.f32.mxu0 0.0
      %v3510 = vand.u32 %v280, 4294901760
      %v3511 = vsub.f32 %v280, %v3510
      %v3512 = vand.u32 %v3511, 4294901760
      %3513 = vmatmul.mubr.f32.gmra.mrb[0].mxu0 %v3512
      %v3514 = vpop.f32.mrb[0].mxu0
      %v3515 = vadd.f32 %v3413, %v3514
      %v3516 = vpop.f32.mrb[0].mxu0
      %3517 = vmatprep.mubr.f32.mxu0 0.0
      %v3518 = vand.u32 %v283, 4294901760
      %v3519 = vsub.f32 %v283, %v3518
      %v3520 = vand.u32 %v3519, 4294901760
      %3521 = vmatmul.mubr.f32.gmra.mrb[0].mxu0 %v3520
      %v3522 = vpop.f32.mrb[0].mxu0
      %v3523 = vadd.f32 %v3420, %v3522
      %v3524 = vpop.f32.mrb[0].mxu0
      %3525 = vmatprep.mubr.f32.mxu0 0.0
      %v3526 = vand.u32 %v286, 4294901760
      %v3527 = vsub.f32 %v286, %v3526
      %v3528 = vand.u32 %v3527, 4294901760
      %3529 = vmatmul.mubr.f32.gmra.mrb[0].mxu0 %v3528
      %v3530 = vpop.f32.mrb[0].mxu0
      %v3531 = vadd.f32 %v3427, %v3530
      %v3532 = vpop.f32.mrb[0].mxu0
      %3533 = vmatprep.mubr.f32.mxu0 0.0
      %v3534 = vand.u32 %v289, 4294901760
      %v3535 = vsub.f32 %v289, %v3534
      %v3536 = vand.u32 %v3535, 4294901760
      %3537 = vmatmul.mubr.f32.gmra.mrb[0].mxu0 %v3536
      %v3538 = vpop.f32.mrb[0].mxu0
      %v3539 = vadd.f32 %v3434, %v3538
      %v3540 = vpop.f32.mrb[0].mxu0
      %3541 = vdwg.mxu0
      %3542 = vmatprep.subr.mxu0 0.0
      %v3543 = vand.u32 %v3078, 4294901760
      %v3544 = vsub.f32 %v3078, %v3543
      %v3545 = vand.u32 %v3544, 4294901760
      %3546 = vmatpush1.msra.mxu0 %v3545
      %3547 = vmatprep.subr.mxu0 0.0
      %v3548 = vand.u32 %v3079, 4294901760
      %v3549 = vsub.f32 %v3079, %v3548
      %v3550 = vand.u32 %v3549, 4294901760
      %3551 = vmatpush1.msra.mxu0 %v3550
      %3552 = vmatprep.subr.mxu0 0.0
      %v3553 = vand.u32 %v3080, 4294901760
      %v3554 = vsub.f32 %v3080, %v3553
      %v3555 = vand.u32 %v3554, 4294901760
      %3556 = vmatpush1.msra.mxu0 %v3555
      %3557 = vmatprep.subr.mxu0 0.0
      %v3558 = vand.u32 %v3081, 4294901760
      %v3559 = vsub.f32 %v3081, %v3558
      %v3560 = vand.u32 %v3559, 4294901760
      %3561 = vmatpush1.msra.mxu0 %v3560
      %3562 = vmatprep.subr.mxu0 0.0
      %v3563 = vand.u32 %v3082, 4294901760
      %v3564 = vsub.f32 %v3082, %v3563
      %v3565 = vand.u32 %v3564, 4294901760
      %3566 = vmatpush1.msra.mxu0 %v3565
      %3567 = vmatprep.subr.mxu0 0.0
      %v3568 = vand.u32 %v3083, 4294901760
      %v3569 = vsub.f32 %v3083, %v3568
      %v3570 = vand.u32 %v3569, 4294901760
      %3571 = vmatpush1.msra.mxu0 %v3570
      %3572 = vmatprep.subr.mxu0 0.0
      %v3573 = vand.u32 %v3084, 4294901760
      %v3574 = vsub.f32 %v3084, %v3573
      %v3575 = vand.u32 %v3574, 4294901760
      %3576 = vmatpush1.msra.mxu0 %v3575
      %3577 = vmatprep.subr.mxu0 0.0
      %v3578 = vand.u32 %v3085, 4294901760
      %v3579 = vsub.f32 %v3085, %v3578
      %v3580 = vand.u32 %v3579, 4294901760
      %3581 = vmatpush1.msra.mxu0 %v3580
      %3582 = vmatprep.subr.mxu0 0.0
      %3583 = vmatpush1.msra.mxu0 0.0
      %3584 = vmatprep.subr.mxu0 0.0
      %3585 = vmatpush1.msra.mxu0 0.0
      %3586 = vmatprep.subr.mxu0 0.0
      %3587 = vmatpush1.msra.mxu0 0.0
      %3588 = vmatprep.subr.mxu0 0.0
      %3589 = vmatpush1.msra.mxu0 0.0
      %3590 = vmatprep.subr.mxu0 0.0
      %3591 = vmatpush1.msra.mxu0 0.0
      %3592 = vmatprep.subr.mxu0 0.0
      %3593 = vmatpush1.msra.mxu0 0.0
      %3594 = vmatprep.subr.mxu0 0.0
      %3595 = vmatpush1.msra.mxu0 0.0
      %3596 = vmatprep.subr.mxu0 0.0
      %3597 = vmatpush1.msra.mxu0 0.0
      %3598 = vmatprep.subr.mxu0 0.0
      %3599 = vmatpush1.msra.mxu0 0.0
      %3600 = vmatprep.subr.mxu0 0.0
      %3601 = vmatpush1.msra.mxu0 0.0
      %3602 = vmatprep.subr.mxu0 0.0
      %3603 = vmatpush1.msra.mxu0 0.0
      %3604 = vmatprep.subr.mxu0 0.0
      %3605 = vmatpush1.msra.mxu0 0.0
      %3606 = vmatprep.subr.mxu0 0.0
      %3607 = vmatpush1.msra.mxu0 0.0
      %3608 = vmatprep.subr.mxu0 0.0
      %3609 = vmatpush1.msra.mxu0 0.0
      %3610 = vmatprep.subr.mxu0 0.0
      %3611 = vmatpush1.msra.mxu0 0.0
      %3612 = vmatprep.subr.mxu0 0.0
      %3613 = vmatpush1.msra.mxu0 0.0
      %3614 = vmatprep.subr.mxu0 0.0
      %3615 = vmatpush1.msra.mxu0 0.0
      %3616 = vmatprep.subr.mxu0 0.0
      %3617 = vmatpush1.msra.mxu0 0.0
      %3618 = vmatprep.subr.mxu0 0.0
      %3619 = vmatpush1.msra.mxu0 0.0
      %3620 = vmatprep.subr.mxu0 0.0
      %3621 = vmatpush1.msra.mxu0 0.0
      %3622 = vmatprep.subr.mxu0 0.0
      %3623 = vmatpush1.msra.mxu0 0.0
      %3624 = vmatprep.subr.mxu0 0.0
      %3625 = vmatpush1.msra.mxu0 0.0
      %3626 = vmatprep.subr.mxu0 0.0
      %3627 = vmatpush1.msra.mxu0 0.0
      %3628 = vmatprep.subr.mxu0 0.0
      %3629 = vmatpush1.msra.mxu0 0.0
      %3630 = vmatprep.mubr.f32.mxu0 0.0
      %v3631 = vand.u32 %v280, 4294901760
      %3632 = vmatmul.mubr.f32.gmra.mrb[0].mxu0 %v3631
      %v3633 = vpop.f32.mrb[0].mxu0
      %v3634 = vadd.f32 %v3515, %v3633
      %v3635 = vpop.f32.mrb[0].mxu0
      %3636 = vmatprep.mubr.f32.mxu0 0.0
      %v3637 = vand.u32 %v283, 4294901760
      %3638 = vmatmul.mubr.f32.gmra.mrb[0].mxu0 %v3637
      %v3639 = vpop.f32.mrb[0].mxu0
      %v3640 = vadd.f32 %v3523, %v3639
      %v3641 = vpop.f32.mrb[0].mxu0
      %3642 = vmatprep.mubr.f32.mxu0 0.0
      %v3643 = vand.u32 %v286, 4294901760
      %3644 = vmatmul.mubr.f32.gmra.mrb[0].mxu0 %v3643
      %v3645 = vpop.f32.mrb[0].mxu0
      %v3646 = vadd.f32 %v3531, %v3645
      %v3647 = vpop.f32.mrb[0].mxu0
      %3648 = vmatprep.mubr.f32.mxu0 0.0
      %v3649 = vand.u32 %v289, 4294901760
      %3650 = vmatmul.mubr.f32.gmra.mrb[0].mxu0 %v3649
      %v3651 = vpop.f32.mrb[0].mxu0
      %v3652 = vadd.f32 %v3539, %v3651
      %v3653 = vpop.f32.mrb[0].mxu0
      %3654 = vdwg.mxu0
      %3655 = vmatprep.subr.mxu0 0.0
      %v3656 = vand.u32 %v3078, 4294901760
      %3657 = vmatpush1.msra.mxu0 %v3656
      %3658 = vmatprep.subr.mxu0 0.0
      %v3659 = vand.u32 %v3079, 4294901760
      %3660 = vmatpush1.msra.mxu0 %v3659
      %3661 = vmatprep.subr.mxu0 0.0
      %v3662 = vand.u32 %v3080, 4294901760
      %3663 = vmatpush1.msra.mxu0 %v3662
      %3664 = vmatprep.subr.mxu0 0.0
      %v3665 = vand.u32 %v3081, 4294901760
      %3666 = vmatpush1.msra.mxu0 %v3665
      %3667 = vmatprep.subr.mxu0 0.0
      %v3668 = vand.u32 %v3082, 4294901760
      %3669 = vmatpush1.msra.mxu0 %v3668
      %3670 = vmatprep.subr.mxu0 0.0
      %v3671 = vand.u32 %v3083, 4294901760
      %3672 = vmatpush1.msra.mxu0 %v3671
      %3673 = vmatprep.subr.mxu0 0.0
      %v3674 = vand.u32 %v3084, 4294901760
      %3675 = vmatpush1.msra.mxu0 %v3674
      %3676 = vmatprep.subr.mxu0 0.0
      %v3677 = vand.u32 %v3085, 4294901760
      %3678 = vmatpush1.msra.mxu0 %v3677
      %3679 = vmatprep.subr.mxu0 0.0
      %3680 = vmatpush1.msra.mxu0 0.0
      %3681 = vmatprep.subr.mxu0 0.0
      %3682 = vmatpush1.msra.mxu0 0.0
      %3683 = vmatprep.subr.mxu0 0.0
      %3684 = vmatpush1.msra.mxu0 0.0
      %3685 = vmatprep.subr.mxu0 0.0
      %3686 = vmatpush1.msra.mxu0 0.0
      %3687 = vmatprep.subr.mxu0 0.0
      %3688 = vmatpush1.msra.mxu0 0.0
      %3689 = vmatprep.subr.mxu0 0.0
      %3690 = vmatpush1.msra.mxu0 0.0
      %3691 = vmatprep.subr.mxu0 0.0
      %3692 = vmatpush1.msra.mxu0 0.0
      %3693 = vmatprep.subr.mxu0 0.0
      %3694 = vmatpush1.msra.mxu0 0.0
      %3695 = vmatprep.subr.mxu0 0.0
      %3696 = vmatpush1.msra.mxu0 0.0
      %3697 = vmatprep.subr.mxu0 0.0
      %3698 = vmatpush1.msra.mxu0 0.0
      %3699 = vmatprep.subr.mxu0 0.0
      %3700 = vmatpush1.msra.mxu0 0.0
      %3701 = vmatprep.subr.mxu0 0.0
      %3702 = vmatpush1.msra.mxu0 0.0
      %3703 = vmatprep.subr.mxu0 0.0
      %3704 = vmatpush1.msra.mxu0 0.0
      %3705 = vmatprep.subr.mxu0 0.0
      %3706 = vmatpush1.msra.mxu0 0.0
      %3707 = vmatprep.subr.mxu0 0.0
      %3708 = vmatpush1.msra.mxu0 0.0
      %3709 = vmatprep.subr.mxu0 0.0
      %3710 = vmatpush1.msra.mxu0 0.0
      %3711 = vmatprep.subr.mxu0 0.0
      %3712 = vmatpush1.msra.mxu0 0.0
      %3713 = vmatprep.subr.mxu0 0.0
      %3714 = vmatpush1.msra.mxu0 0.0
      %3715 = vmatprep.subr.mxu0 0.0
      %3716 = vmatpush1.msra.mxu0 0.0
      %3717 = vmatprep.subr.mxu0 0.0
      %3718 = vmatpush1.msra.mxu0 0.0
      %3719 = vmatprep.subr.mxu0 0.0
      %3720 = vmatpush1.msra.mxu0 0.0
      %3721 = vmatprep.subr.mxu0 0.0
      %3722 = vmatpush1.msra.mxu0 0.0
      %3723 = vmatprep.subr.mxu0 0.0
      %3724 = vmatpush1.msra.mxu0 0.0
      %3725 = vmatprep.subr.mxu0 0.0
      %3726 = vmatpush1.msra.mxu0 0.0
      %3727 = vmatprep.mubr.f32.mxu0 0.0
      %v3728 = vand.u32 %v280, 4294901760
      %3729 = vmatmul.mubr.f32.gmra.mrb[0].mxu0 %v3728
      %v3730 = vpop.f32.mrb[0].mxu0
      %v3731 = vadd.f32 %v3634, %v3730
      %v3732 = vpop.f32.mrb[0].mxu0
      %3733 = vmatprep.mubr.f32.mxu0 0.0
      %v3734 = vand.u32 %v283, 4294901760
      %3735 = vmatmul.mubr.f32.gmra.mrb[0].mxu0 %v3734
      %v3736 = vpop.f32.mrb[0].mxu0
      %v3737 = vadd.f32 %v3640, %v3736
      %v3738 = vpop.f32.mrb[0].mxu0
      %3739 = vmatprep.mubr.f32.mxu0 0.0
      %v3740 = vand.u32 %v286, 4294901760
      %3741 = vmatmul.mubr.f32.gmra.mrb[0].mxu0 %v3740
      %v3742 = vpop.f32.mrb[0].mxu0
      %v3743 = vadd.f32 %v3646, %v3742
      %v3744 = vpop.f32.mrb[0].mxu0
      %3745 = vmatprep.mubr.f32.mxu0 0.0
      %v3746 = vand.u32 %v289, 4294901760
      %3747 = vmatmul.mubr.f32.gmra.mrb[0].mxu0 %v3746
      %v3748 = vpop.f32.mrb[0].mxu0
      %v3749 = vadd.f32 %v3652, %v3748
      %v3750 = vpop.f32.mrb[0].mxu0
      %3751 = vdwg.mxu0
      %s3752 = scalar_lea.vmem %s176, 128
      %3753 = vst.msk [vmem:[%s3752] sm:$0xff] %vm193, %v3731
      %3754 = vst.msk [vmem:[%s3752 + $0x8] sm:$0xff] %vm193, %v3737
      %3755 = vst.msk [vmem:[%s3752 + $0x10] sm:$0xff] %vm193, %v3743
      %3756 = vst.msk [vmem:[%s3752 + $0x18] sm:$0xff] %vm193, %v3749
      %v3757 = vlaneseq
      %v3758 = vshrl.u32 %v3757, 7
      %v3759 = vsub.s32 5, %v3758
      %v3760 = vrot.slane %v182, %v3759
      %vm3761 = vcmp.eq.s32.totalorder %v3760, %v242
      %vm3762 = vcmp.eq.s32.totalorder %v3760, %v243
      %vm3763 = vcmp.eq.s32.totalorder %v3760, %v244
      %vm3764 = vcmp.eq.s32.totalorder %v3760, %v245
      %vm3765 = vcmp.eq.s32.totalorder %v3760, %v246
      %vm3766 = vcmp.eq.s32.totalorder %v3760, %v247
      %vm3767 = vcmp.eq.s32.totalorder %v3760, %v248
      %vm3768 = vcmp.eq.s32.totalorder %v3760, %v249
      %v3769 = vsel %vm3761, 1, 0
      %v3770 = vsel %vm3762, 1, 0
      %v3771 = vsel %vm3763, 1, 0
      %v3772 = vsel %vm3764, 1, 0
      %v3773 = vsel %vm3765, 1, 0
      %v3774 = vsel %vm3766, 1, 0
      %v3775 = vsel %vm3767, 1, 0
      %v3776 = vsel %vm3768, 1, 0
      %v3777 = vcvt.s32.f32 %v3769
      %v3778 = vcvt.s32.f32 %v3770
      %v3779 = vcvt.s32.f32 %v3771
      %v3780 = vcvt.s32.f32 %v3772
      %v3781 = vcvt.s32.f32 %v3773
      %v3782 = vcvt.s32.f32 %v3774
      %v3783 = vcvt.s32.f32 %v3775
      %v3784 = vcvt.s32.f32 %v3776
      %3785 = vmatprep.subr.mxu0 0.0
      %v3786 = vand.u32 %v3777, 4294901760
      %3787 = vmatpush1.msra.mxu0 %v3786
      %3788 = vmatprep.subr.mxu0 0.0
      %v3789 = vand.u32 %v3778, 4294901760
      %3790 = vmatpush1.msra.mxu0 %v3789
      %3791 = vmatprep.subr.mxu0 0.0
      %v3792 = vand.u32 %v3779, 4294901760
      %3793 = vmatpush1.msra.mxu0 %v3792
      %3794 = vmatprep.subr.mxu0 0.0
      %v3795 = vand.u32 %v3780, 4294901760
      %3796 = vmatpush1.msra.mxu0 %v3795
      %3797 = vmatprep.subr.mxu0 0.0
      %v3798 = vand.u32 %v3781, 4294901760
      %3799 = vmatpush1.msra.mxu0 %v3798
      %3800 = vmatprep.subr.mxu0 0.0
      %v3801 = vand.u32 %v3782, 4294901760
      %3802 = vmatpush1.msra.mxu0 %v3801
      %3803 = vmatprep.subr.mxu0 0.0
      %v3804 = vand.u32 %v3783, 4294901760
      %3805 = vmatpush1.msra.mxu0 %v3804
      %3806 = vmatprep.subr.mxu0 0.0
      %v3807 = vand.u32 %v3784, 4294901760
      %3808 = vmatpush1.msra.mxu0 %v3807
      %3809 = vmatprep.subr.mxu0 0.0
      %3810 = vmatpush1.msra.mxu0 0.0
      %3811 = vmatprep.subr.mxu0 0.0
      %3812 = vmatpush1.msra.mxu0 0.0
      %3813 = vmatprep.subr.mxu0 0.0
      %3814 = vmatpush1.msra.mxu0 0.0
      %3815 = vmatprep.subr.mxu0 0.0
      %3816 = vmatpush1.msra.mxu0 0.0
      %3817 = vmatprep.subr.mxu0 0.0
      %3818 = vmatpush1.msra.mxu0 0.0
      %3819 = vmatprep.subr.mxu0 0.0
      %3820 = vmatpush1.msra.mxu0 0.0
      %3821 = vmatprep.subr.mxu0 0.0
      %3822 = vmatpush1.msra.mxu0 0.0
      %3823 = vmatprep.subr.mxu0 0.0
      %3824 = vmatpush1.msra.mxu0 0.0
      %3825 = vmatprep.subr.mxu0 0.0
      %3826 = vmatpush1.msra.mxu0 0.0
      %3827 = vmatprep.subr.mxu0 0.0
      %3828 = vmatpush1.msra.mxu0 0.0
      %3829 = vmatprep.subr.mxu0 0.0
      %3830 = vmatpush1.msra.mxu0 0.0
      %3831 = vmatprep.subr.mxu0 0.0
      %3832 = vmatpush1.msra.mxu0 0.0
      %3833 = vmatprep.subr.mxu0 0.0
      %3834 = vmatpush1.msra.mxu0 0.0
      %3835 = vmatprep.subr.mxu0 0.0
      %3836 = vmatpush1.msra.mxu0 0.0
      %3837 = vmatprep.subr.mxu0 0.0
      %3838 = vmatpush1.msra.mxu0 0.0
      %3839 = vmatprep.subr.mxu0 0.0
      %3840 = vmatpush1.msra.mxu0 0.0
      %3841 = vmatprep.subr.mxu0 0.0
      %3842 = vmatpush1.msra.mxu0 0.0
      %3843 = vmatprep.subr.mxu0 0.0
      %3844 = vmatpush1.msra.mxu0 0.0
      %3845 = vmatprep.subr.mxu0 0.0
      %3846 = vmatpush1.msra.mxu0 0.0
      %3847 = vmatprep.subr.mxu0 0.0
      %3848 = vmatpush1.msra.mxu0 0.0
      %3849 = vmatprep.subr.mxu0 0.0
      %3850 = vmatpush1.msra.mxu0 0.0
      %3851 = vmatprep.subr.mxu0 0.0
      %3852 = vmatpush1.msra.mxu0 0.0
      %3853 = vmatprep.subr.mxu0 0.0
      %3854 = vmatpush1.msra.mxu0 0.0
      %3855 = vmatprep.subr.mxu0 0.0
      %3856 = vmatpush1.msra.mxu0 0.0
      %3857 = vmatprep.mubr.f32.mxu0 0.0
      %v3858 = vand.u32 %v280, 4294901760
      %v3859 = vsub.f32 %v280, %v3858
      %v3860 = vand.u32 %v3859, 4294901760
      %v3861 = vsub.f32 %v3859, %v3860
      %v3862 = vand.u32 %v3861, 4294901760
      %3863 = vmatmul.mubr.f32.gmra.mrb[0].mxu0 %v3862
      %v3864 = vpop.f32.mrb[0].mxu0
      %v3865 = vadd.f32 0.0, %v3864
      %v3866 = vpop.f32.mrb[0].mxu0
      %3867 = vmatprep.mubr.f32.mxu0 0.0
      %v3868 = vand.u32 %v283, 4294901760
      %v3869 = vsub.f32 %v283, %v3868
      %v3870 = vand.u32 %v3869, 4294901760
      %v3871 = vsub.f32 %v3869, %v3870
      %v3872 = vand.u32 %v3871, 4294901760
      %3873 = vmatmul.mubr.f32.gmra.mrb[0].mxu0 %v3872
      %v3874 = vpop.f32.mrb[0].mxu0
      %v3875 = vadd.f32 0.0, %v3874
      %v3876 = vpop.f32.mrb[0].mxu0
      %3877 = vmatprep.mubr.f32.mxu0 0.0
      %v3878 = vand.u32 %v286, 4294901760
      %v3879 = vsub.f32 %v286, %v3878
      %v3880 = vand.u32 %v3879, 4294901760
      %v3881 = vsub.f32 %v3879, %v3880
      %v3882 = vand.u32 %v3881, 4294901760
      %3883 = vmatmul.mubr.f32.gmra.mrb[0].mxu0 %v3882
      %v3884 = vpop.f32.mrb[0].mxu0
      %v3885 = vadd.f32 0.0, %v3884
      %v3886 = vpop.f32.mrb[0].mxu0
      %3887 = vmatprep.mubr.f32.mxu0 0.0
      %v3888 = vand.u32 %v289, 4294901760
      %v3889 = vsub.f32 %v289, %v3888
      %v3890 = vand.u32 %v3889, 4294901760
      %v3891 = vsub.f32 %v3889, %v3890
      %v3892 = vand.u32 %v3891, 4294901760
      %3893 = vmatmul.mubr.f32.gmra.mrb[0].mxu0 %v3892
      %v3894 = vpop.f32.mrb[0].mxu0
      %v3895 = vadd.f32 0.0, %v3894
      %v3896 = vpop.f32.mrb[0].mxu0
      %3897 = vdwg.mxu0
      %3898 = vmatprep.subr.mxu0 0.0
      %v3899 = vand.u32 %v3777, 4294901760
      %v3900 = vsub.f32 %v3777, %v3899
      %v3901 = vand.u32 %v3900, 4294901760
      %v3902 = vsub.f32 %v3900, %v3901
      %v3903 = vand.u32 %v3902, 4294901760
      %3904 = vmatpush1.msra.mxu0 %v3903
      %3905 = vmatprep.subr.mxu0 0.0
      %v3906 = vand.u32 %v3778, 4294901760
      %v3907 = vsub.f32 %v3778, %v3906
      %v3908 = vand.u32 %v3907, 4294901760
      %v3909 = vsub.f32 %v3907, %v3908
      %v3910 = vand.u32 %v3909, 4294901760
      %3911 = vmatpush1.msra.mxu0 %v3910
      %3912 = vmatprep.subr.mxu0 0.0
      %v3913 = vand.u32 %v3779, 4294901760
      %v3914 = vsub.f32 %v3779, %v3913
      %v3915 = vand.u32 %v3914, 4294901760
      %v3916 = vsub.f32 %v3914, %v3915
      %v3917 = vand.u32 %v3916, 4294901760
      %3918 = vmatpush1.msra.mxu0 %v3917
      %3919 = vmatprep.subr.mxu0 0.0
      %v3920 = vand.u32 %v3780, 4294901760
      %v3921 = vsub.f32 %v3780, %v3920
      %v3922 = vand.u32 %v3921, 4294901760
      %v3923 = vsub.f32 %v3921, %v3922
      %v3924 = vand.u32 %v3923, 4294901760
      %3925 = vmatpush1.msra.mxu0 %v3924
      %3926 = vmatprep.subr.mxu0 0.0
      %v3927 = vand.u32 %v3781, 4294901760
      %v3928 = vsub.f32 %v3781, %v3927
      %v3929 = vand.u32 %v3928, 4294901760
      %v3930 = vsub.f32 %v3928, %v3929
      %v3931 = vand.u32 %v3930, 4294901760
      %3932 = vmatpush1.msra.mxu0 %v3931
      %3933 = vmatprep.subr.mxu0 0.0
      %v3934 = vand.u32 %v3782, 4294901760
      %v3935 = vsub.f32 %v3782, %v3934
      %v3936 = vand.u32 %v3935, 4294901760
      %v3937 = vsub.f32 %v3935, %v3936
      %v3938 = vand.u32 %v3937, 4294901760
      %3939 = vmatpush1.msra.mxu0 %v3938
      %3940 = vmatprep.subr.mxu0 0.0
      %v3941 = vand.u32 %v3783, 4294901760
      %v3942 = vsub.f32 %v3783, %v3941
      %v3943 = vand.u32 %v3942, 4294901760
      %v3944 = vsub.f32 %v3942, %v3943
      %v3945 = vand.u32 %v3944, 4294901760
      %3946 = vmatpush1.msra.mxu0 %v3945
      %3947 = vmatprep.subr.mxu0 0.0
      %v3948 = vand.u32 %v3784, 4294901760
      %v3949 = vsub.f32 %v3784, %v3948
      %v3950 = vand.u32 %v3949, 4294901760
      %v3951 = vsub.f32 %v3949, %v3950
      %v3952 = vand.u32 %v3951, 4294901760
      %3953 = vmatpush1.msra.mxu0 %v3952
      %3954 = vmatprep.subr.mxu0 0.0
      %3955 = vmatpush1.msra.mxu0 0.0
      %3956 = vmatprep.subr.mxu0 0.0
      %3957 = vmatpush1.msra.mxu0 0.0
      %3958 = vmatprep.subr.mxu0 0.0
      %3959 = vmatpush1.msra.mxu0 0.0
      %3960 = vmatprep.subr.mxu0 0.0
      %3961 = vmatpush1.msra.mxu0 0.0
      %3962 = vmatprep.subr.mxu0 0.0
      %3963 = vmatpush1.msra.mxu0 0.0
      %3964 = vmatprep.subr.mxu0 0.0
      %3965 = vmatpush1.msra.mxu0 0.0
      %3966 = vmatprep.subr.mxu0 0.0
      %3967 = vmatpush1.msra.mxu0 0.0
      %3968 = vmatprep.subr.mxu0 0.0
      %3969 = vmatpush1.msra.mxu0 0.0
      %3970 = vmatprep.subr.mxu0 0.0
      %3971 = vmatpush1.msra.mxu0 0.0
      %3972 = vmatprep.subr.mxu0 0.0
      %3973 = vmatpush1.msra.mxu0 0.0
      %3974 = vmatprep.subr.mxu0 0.0
      %3975 = vmatpush1.msra.mxu0 0.0
      %3976 = vmatprep.subr.mxu0 0.0
      %3977 = vmatpush1.msra.mxu0 0.0
      %3978 = vmatprep.subr.mxu0 0.0
      %3979 = vmatpush1.msra.mxu0 0.0
      %3980 = vmatprep.subr.mxu0 0.0
      %3981 = vmatpush1.msra.mxu0 0.0
      %3982 = vmatprep.subr.mxu0 0.0
      %3983 = vmatpush1.msra.mxu0 0.0
      %3984 = vmatprep.subr.mxu0 0.0
      %3985 = vmatpush1.msra.mxu0 0.0
      %3986 = vmatprep.subr.mxu0 0.0
      %3987 = vmatpush1.msra.mxu0 0.0
      %3988 = vmatprep.subr.mxu0 0.0
      %3989 = vmatpush1.msra.mxu0 0.0
      %3990 = vmatprep.subr.mxu0 0.0
      %3991 = vmatpush1.msra.mxu0 0.0
      %3992 = vmatprep.subr.mxu0 0.0
      %3993 = vmatpush1.msra.mxu0 0.0
      %3994 = vmatprep.subr.mxu0 0.0
      %3995 = vmatpush1.msra.mxu0 0.0
      %3996 = vmatprep.subr.mxu0 0.0
      %3997 = vmatpush1.msra.mxu0 0.0
      %3998 = vmatprep.subr.mxu0 0.0
      %3999 = vmatpush1.msra.mxu0 0.0
      %4000 = vmatprep.subr.mxu0 0.0
      %4001 = vmatpush1.msra.mxu0 0.0
      %4002 = vmatprep.mubr.f32.mxu0 0.0
      %v4003 = vand.u32 %v280, 4294901760
      %4004 = vmatmul.mubr.f32.gmra.mrb[0].mxu0 %v4003
      %v4005 = vpop.f32.mrb[0].mxu0
      %v4006 = vadd.f32 %v3865, %v4005
      %v4007 = vpop.f32.mrb[0].mxu0
      %4008 = vmatprep.mubr.f32.mxu0 0.0
      %v4009 = vand.u32 %v283, 4294901760
      %4010 = vmatmul.mubr.f32.gmra.mrb[0].mxu0 %v4009
      %v4011 = vpop.f32.mrb[0].mxu0
      %v4012 = vadd.f32 %v3875, %v4011
      %v4013 = vpop.f32.mrb[0].mxu0
      %4014 = vmatprep.mubr.f32.mxu0 0.0
      %v4015 = vand.u32 %v286, 4294901760
      %4016 = vmatmul.mubr.f32.gmra.mrb[0].mxu0 %v4015
      %v4017 = vpop.f32.mrb[0].mxu0
      %v4018 = vadd.f32 %v3885, %v4017
      %v4019 = vpop.f32.mrb[0].mxu0
      %4020 = vmatprep.mubr.f32.mxu0 0.0
      %v4021 = vand.u32 %v289, 4294901760
      %4022 = vmatmul.mubr.f32.gmra.mrb[0].mxu0 %v4021
      %v4023 = vpop.f32.mrb[0].mxu0
      %v4024 = vadd.f32 %v3895, %v4023
      %v4025 = vpop.f32.mrb[0].mxu0
      %4026 = vdwg.mxu0
      %4027 = vmatprep.subr.mxu0 0.0
      %v4028 = vand.u32 %v3777, 4294901760
      %v4029 = vsub.f32 %v3777, %v4028
      %4030 = vmatpush1.msra.mxu0 %v4029
      %4031 = vmatprep.subr.mxu0 0.0
      %v4032 = vand.u32 %v3778, 4294901760
      %v4033 = vsub.f32 %v3778, %v4032
      %4034 = vmatpush1.msra.mxu0 %v4033
      %4035 = vmatprep.subr.mxu0 0.0
      %v4036 = vand.u32 %v3779, 4294901760
      %v4037 = vsub.f32 %v3779, %v4036
      %4038 = vmatpush1.msra.mxu0 %v4037
      %4039 = vmatprep.subr.mxu0 0.0
      %v4040 = vand.u32 %v3780, 4294901760
      %v4041 = vsub.f32 %v3780, %v4040
      %4042 = vmatpush1.msra.mxu0 %v4041
      %4043 = vmatprep.subr.mxu0 0.0
      %v4044 = vand.u32 %v3781, 4294901760
      %v4045 = vsub.f32 %v3781, %v4044
      %4046 = vmatpush1.msra.mxu0 %v4045
      %4047 = vmatprep.subr.mxu0 0.0
      %v4048 = vand.u32 %v3782, 4294901760
      %v4049 = vsub.f32 %v3782, %v4048
      %4050 = vmatpush1.msra.mxu0 %v4049
      %4051 = vmatprep.subr.mxu0 0.0
      %v4052 = vand.u32 %v3783, 4294901760
      %v4053 = vsub.f32 %v3783, %v4052
      %4054 = vmatpush1.msra.mxu0 %v4053
      %4055 = vmatprep.subr.mxu0 0.0
      %v4056 = vand.u32 %v3784, 4294901760
      %v4057 = vsub.f32 %v3784, %v4056
      %4058 = vmatpush1.msra.mxu0 %v4057
      %4059 = vmatprep.subr.mxu0 0.0
      %4060 = vmatpush1.msra.mxu0 0.0
      %4061 = vmatprep.subr.mxu0 0.0
      %4062 = vmatpush1.msra.mxu0 0.0
      %4063 = vmatprep.subr.mxu0 0.0
      %4064 = vmatpush1.msra.mxu0 0.0
      %4065 = vmatprep.subr.mxu0 0.0
      %4066 = vmatpush1.msra.mxu0 0.0
      %4067 = vmatprep.subr.mxu0 0.0
      %4068 = vmatpush1.msra.mxu0 0.0
      %4069 = vmatprep.subr.mxu0 0.0
      %4070 = vmatpush1.msra.mxu0 0.0
      %4071 = vmatprep.subr.mxu0 0.0
      %4072 = vmatpush1.msra.mxu0 0.0
      %4073 = vmatprep.subr.mxu0 0.0
      %4074 = vmatpush1.msra.mxu0 0.0
      %4075 = vmatprep.subr.mxu0 0.0
      %4076 = vmatpush1.msra.mxu0 0.0
      %4077 = vmatprep.subr.mxu0 0.0
      %4078 = vmatpush1.msra.mxu0 0.0
      %4079 = vmatprep.subr.mxu0 0.0
      %4080 = vmatpush1.msra.mxu0 0.0
      %4081 = vmatprep.subr.mxu0 0.0
      %4082 = vmatpush1.msra.mxu0 0.0
      %4083 = vmatprep.subr.mxu0 0.0
      %4084 = vmatpush1.msra.mxu0 0.0
      %4085 = vmatprep.subr.mxu0 0.0
      %4086 = vmatpush1.msra.mxu0 0.0
      %4087 = vmatprep.subr.mxu0 0.0
      %4088 = vmatpush1.msra.mxu0 0.0
      %4089 = vmatprep.subr.mxu0 0.0
      %4090 = vmatpush1.msra.mxu0 0.0
      %4091 = vmatprep.subr.mxu0 0.0
      %4092 = vmatpush1.msra.mxu0 0.0
      %4093 = vmatprep.subr.mxu0 0.0
      %4094 = vmatpush1.msra.mxu0 0.0
      %4095 = vmatprep.subr.mxu0 0.0
      %4096 = vmatpush1.msra.mxu0 0.0
      %4097 = vmatprep.subr.mxu0 0.0
      %4098 = vmatpush1.msra.mxu0 0.0
      %4099 = vmatprep.subr.mxu0 0.0
      %4100 = vmatpush1.msra.mxu0 0.0
      %4101 = vmatprep.subr.mxu0 0.0
      %4102 = vmatpush1.msra.mxu0 0.0
      %4103 = vmatprep.subr.mxu0 0.0
      %4104 = vmatpush1.msra.mxu0 0.0
      %4105 = vmatprep.subr.mxu0 0.0
      %4106 = vmatpush1.msra.mxu0 0.0
      %4107 = vmatprep.mubr.f32.mxu0 0.0
      %v4108 = vand.u32 %v280, 4294901760
      %v4109 = vsub.f32 %v280, %v4108
      %4110 = vmatmul.mubr.f32.gmra.mrb[0].mxu0 %v4109
      %v4111 = vpop.f32.mrb[0].mxu0
      %v4112 = vadd.f32 %v4006, %v4111
      %v4113 = vpop.f32.mrb[0].mxu0
      %4114 = vmatprep.mubr.f32.mxu0 0.0
      %v4115 = vand.u32 %v283, 4294901760
      %v4116 = vsub.f32 %v283, %v4115
      %4117 = vmatmul.mubr.f32.gmra.mrb[0].mxu0 %v4116
      %v4118 = vpop.f32.mrb[0].mxu0
      %v4119 = vadd.f32 %v4012, %v4118
      %v4120 = vpop.f32.mrb[0].mxu0
      %4121 = vmatprep.mubr.f32.mxu0 0.0
      %v4122 = vand.u32 %v286, 4294901760
      %v4123 = vsub.f32 %v286, %v4122
      %4124 = vmatmul.mubr.f32.gmra.mrb[0].mxu0 %v4123
      %v4125 = vpop.f32.mrb[0].mxu0
      %v4126 = vadd.f32 %v4018, %v4125
      %v4127 = vpop.f32.mrb[0].mxu0
      %4128 = vmatprep.mubr.f32.mxu0 0.0
      %v4129 = vand.u32 %v289, 4294901760
      %v4130 = vsub.f32 %v289, %v4129
      %4131 = vmatmul.mubr.f32.gmra.mrb[0].mxu0 %v4130
      %v4132 = vpop.f32.mrb[0].mxu0
      %v4133 = vadd.f32 %v4024, %v4132
      %v4134 = vpop.f32.mrb[0].mxu0
      %4135 = vdwg.mxu0
      %4136 = vmatprep.subr.mxu0 0.0
      %v4137 = vand.u32 %v3777, 4294901760
      %4138 = vmatpush1.msra.mxu0 %v4137
      %4139 = vmatprep.subr.mxu0 0.0
      %v4140 = vand.u32 %v3778, 4294901760
      %4141 = vmatpush1.msra.mxu0 %v4140
      %4142 = vmatprep.subr.mxu0 0.0
      %v4143 = vand.u32 %v3779, 4294901760
      %4144 = vmatpush1.msra.mxu0 %v4143
      %4145 = vmatprep.subr.mxu0 0.0
      %v4146 = vand.u32 %v3780, 4294901760
      %4147 = vmatpush1.msra.mxu0 %v4146
      %4148 = vmatprep.subr.mxu0 0.0
      %v4149 = vand.u32 %v3781, 4294901760
      %4150 = vmatpush1.msra.mxu0 %v4149
      %4151 = vmatprep.subr.mxu0 0.0
      %v4152 = vand.u32 %v3782, 4294901760
      %4153 = vmatpush1.msra.mxu0 %v4152
      %4154 = vmatprep.subr.mxu0 0.0
      %v4155 = vand.u32 %v3783, 4294901760
      %4156 = vmatpush1.msra.mxu0 %v4155
      %4157 = vmatprep.subr.mxu0 0.0
      %v4158 = vand.u32 %v3784, 4294901760
      %4159 = vmatpush1.msra.mxu0 %v4158
      %4160 = vmatprep.subr.mxu0 0.0
      %4161 = vmatpush1.msra.mxu0 0.0
      %4162 = vmatprep.subr.mxu0 0.0
      %4163 = vmatpush1.msra.mxu0 0.0
      %4164 = vmatprep.subr.mxu0 0.0
      %4165 = vmatpush1.msra.mxu0 0.0
      %4166 = vmatprep.subr.mxu0 0.0
      %4167 = vmatpush1.msra.mxu0 0.0
      %4168 = vmatprep.subr.mxu0 0.0
      %4169 = vmatpush1.msra.mxu0 0.0
      %4170 = vmatprep.subr.mxu0 0.0
      %4171 = vmatpush1.msra.mxu0 0.0
      %4172 = vmatprep.subr.mxu0 0.0
      %4173 = vmatpush1.msra.mxu0 0.0
      %4174 = vmatprep.subr.mxu0 0.0
      %4175 = vmatpush1.msra.mxu0 0.0
      %4176 = vmatprep.subr.mxu0 0.0
      %4177 = vmatpush1.msra.mxu0 0.0
      %4178 = vmatprep.subr.mxu0 0.0
      %4179 = vmatpush1.msra.mxu0 0.0
      %4180 = vmatprep.subr.mxu0 0.0
      %4181 = vmatpush1.msra.mxu0 0.0
      %4182 = vmatprep.subr.mxu0 0.0
      %4183 = vmatpush1.msra.mxu0 0.0
      %4184 = vmatprep.subr.mxu0 0.0
      %4185 = vmatpush1.msra.mxu0 0.0
      %4186 = vmatprep.subr.mxu0 0.0
      %4187 = vmatpush1.msra.mxu0 0.0
      %4188 = vmatprep.subr.mxu0 0.0
      %4189 = vmatpush1.msra.mxu0 0.0
      %4190 = vmatprep.subr.mxu0 0.0
      %4191 = vmatpush1.msra.mxu0 0.0
      %4192 = vmatprep.subr.mxu0 0.0
      %4193 = vmatpush1.msra.mxu0 0.0
      %4194 = vmatprep.subr.mxu0 0.0
      %4195 = vmatpush1.msra.mxu0 0.0
      %4196 = vmatprep.subr.mxu0 0.0
      %4197 = vmatpush1.msra.mxu0 0.0
      %4198 = vmatprep.subr.mxu0 0.0
      %4199 = vmatpush1.msra.mxu0 0.0
      %4200 = vmatprep.subr.mxu0 0.0
      %4201 = vmatpush1.msra.mxu0 0.0
      %4202 = vmatprep.subr.mxu0 0.0
      %4203 = vmatpush1.msra.mxu0 0.0
      %4204 = vmatprep.subr.mxu0 0.0
      %4205 = vmatpush1.msra.mxu0 0.0
      %4206 = vmatprep.subr.mxu0 0.0
      %4207 = vmatpush1.msra.mxu0 0.0
      %4208 = vmatprep.mubr.f32.mxu0 0.0
      %v4209 = vand.u32 %v280, 4294901760
      %v4210 = vsub.f32 %v280, %v4209
      %v4211 = vand.u32 %v4210, 4294901760
      %4212 = vmatmul.mubr.f32.gmra.mrb[0].mxu0 %v4211
      %v4213 = vpop.f32.mrb[0].mxu0
      %v4214 = vadd.f32 %v4112, %v4213
      %v4215 = vpop.f32.mrb[0].mxu0
      %4216 = vmatprep.mubr.f32.mxu0 0.0
      %v4217 = vand.u32 %v283, 4294901760
      %v4218 = vsub.f32 %v283, %v4217
      %v4219 = vand.u32 %v4218, 4294901760
      %4220 = vmatmul.mubr.f32.gmra.mrb[0].mxu0 %v4219
      %v4221 = vpop.f32.mrb[0].mxu0
      %v4222 = vadd.f32 %v4119, %v4221
      %v4223 = vpop.f32.mrb[0].mxu0
      %4224 = vmatprep.mubr.f32.mxu0 0.0
      %v4225 = vand.u32 %v286, 4294901760
      %v4226 = vsub.f32 %v286, %v4225
      %v4227 = vand.u32 %v4226, 4294901760
      %4228 = vmatmul.mubr.f32.gmra.mrb[0].mxu0 %v4227
      %v4229 = vpop.f32.mrb[0].mxu0
      %v4230 = vadd.f32 %v4126, %v4229
      %v4231 = vpop.f32.mrb[0].mxu0
      %4232 = vmatprep.mubr.f32.mxu0 0.0
      %v4233 = vand.u32 %v289, 4294901760
      %v4234 = vsub.f32 %v289, %v4233
      %v4235 = vand.u32 %v4234, 4294901760
      %4236 = vmatmul.mubr.f32.gmra.mrb[0].mxu0 %v4235
      %v4237 = vpop.f32.mrb[0].mxu0
      %v4238 = vadd.f32 %v4133, %v4237
      %v4239 = vpop.f32.mrb[0].mxu0
      %4240 = vdwg.mxu0
      %4241 = vmatprep.subr.mxu0 0.0
      %v4242 = vand.u32 %v3777, 4294901760
      %v4243 = vsub.f32 %v3777, %v4242
      %v4244 = vand.u32 %v4243, 4294901760
      %4245 = vmatpush1.msra.mxu0 %v4244
      %4246 = vmatprep.subr.mxu0 0.0
      %v4247 = vand.u32 %v3778, 4294901760
      %v4248 = vsub.f32 %v3778, %v4247
      %v4249 = vand.u32 %v4248, 4294901760
      %4250 = vmatpush1.msra.mxu0 %v4249
      %4251 = vmatprep.subr.mxu0 0.0
      %v4252 = vand.u32 %v3779, 4294901760
      %v4253 = vsub.f32 %v3779, %v4252
      %v4254 = vand.u32 %v4253, 4294901760
      %4255 = vmatpush1.msra.mxu0 %v4254
      %4256 = vmatprep.subr.mxu0 0.0
      %v4257 = vand.u32 %v3780, 4294901760
      %v4258 = vsub.f32 %v3780, %v4257
      %v4259 = vand.u32 %v4258, 4294901760
      %4260 = vmatpush1.msra.mxu0 %v4259
      %4261 = vmatprep.subr.mxu0 0.0
      %v4262 = vand.u32 %v3781, 4294901760
      %v4263 = vsub.f32 %v3781, %v4262
      %v4264 = vand.u32 %v4263, 4294901760
      %4265 = vmatpush1.msra.mxu0 %v4264
      %4266 = vmatprep.subr.mxu0 0.0
      %v4267 = vand.u32 %v3782, 4294901760
      %v4268 = vsub.f32 %v3782, %v4267
      %v4269 = vand.u32 %v4268, 4294901760
      %4270 = vmatpush1.msra.mxu0 %v4269
      %4271 = vmatprep.subr.mxu0 0.0
      %v4272 = vand.u32 %v3783, 4294901760
      %v4273 = vsub.f32 %v3783, %v4272
      %v4274 = vand.u32 %v4273, 4294901760
      %4275 = vmatpush1.msra.mxu0 %v4274
      %4276 = vmatprep.subr.mxu0 0.0
      %v4277 = vand.u32 %v3784, 4294901760
      %v4278 = vsub.f32 %v3784, %v4277
      %v4279 = vand.u32 %v4278, 4294901760
      %4280 = vmatpush1.msra.mxu0 %v4279
      %4281 = vmatprep.subr.mxu0 0.0
      %4282 = vmatpush1.msra.mxu0 0.0
      %4283 = vmatprep.subr.mxu0 0.0
      %4284 = vmatpush1.msra.mxu0 0.0
      %4285 = vmatprep.subr.mxu0 0.0
      %4286 = vmatpush1.msra.mxu0 0.0
      %4287 = vmatprep.subr.mxu0 0.0
      %4288 = vmatpush1.msra.mxu0 0.0
      %4289 = vmatprep.subr.mxu0 0.0
      %4290 = vmatpush1.msra.mxu0 0.0
      %4291 = vmatprep.subr.mxu0 0.0
      %4292 = vmatpush1.msra.mxu0 0.0
      %4293 = vmatprep.subr.mxu0 0.0
      %4294 = vmatpush1.msra.mxu0 0.0
      %4295 = vmatprep.subr.mxu0 0.0
      %4296 = vmatpush1.msra.mxu0 0.0
      %4297 = vmatprep.subr.mxu0 0.0
      %4298 = vmatpush1.msra.mxu0 0.0
      %4299 = vmatprep.subr.mxu0 0.0
      %4300 = vmatpush1.msra.mxu0 0.0
      %4301 = vmatprep.subr.mxu0 0.0
      %4302 = vmatpush1.msra.mxu0 0.0
      %4303 = vmatprep.subr.mxu0 0.0
      %4304 = vmatpush1.msra.mxu0 0.0
      %4305 = vmatprep.subr.mxu0 0.0
      %4306 = vmatpush1.msra.mxu0 0.0
      %4307 = vmatprep.subr.mxu0 0.0
      %4308 = vmatpush1.msra.mxu0 0.0
      %4309 = vmatprep.subr.mxu0 0.0
      %4310 = vmatpush1.msra.mxu0 0.0
      %4311 = vmatprep.subr.mxu0 0.0
      %4312 = vmatpush1.msra.mxu0 0.0
      %4313 = vmatprep.subr.mxu0 0.0
      %4314 = vmatpush1.msra.mxu0 0.0
      %4315 = vmatprep.subr.mxu0 0.0
      %4316 = vmatpush1.msra.mxu0 0.0
      %4317 = vmatprep.subr.mxu0 0.0
      %4318 = vmatpush1.msra.mxu0 0.0
      %4319 = vmatprep.subr.mxu0 0.0
      %4320 = vmatpush1.msra.mxu0 0.0
      %4321 = vmatprep.subr.mxu0 0.0
      %4322 = vmatpush1.msra.mxu0 0.0
      %4323 = vmatprep.subr.mxu0 0.0
      %4324 = vmatpush1.msra.mxu0 0.0
      %4325 = vmatprep.subr.mxu0 0.0
      %4326 = vmatpush1.msra.mxu0 0.0
      %4327 = vmatprep.subr.mxu0 0.0
      %4328 = vmatpush1.msra.mxu0 0.0
      %4329 = vmatprep.mubr.f32.mxu0 0.0
      %v4330 = vand.u32 %v280, 4294901760
      %4331 = vmatmul.mubr.f32.gmra.mrb[0].mxu0 %v4330
      %v4332 = vpop.f32.mrb[0].mxu0
      %v4333 = vadd.f32 %v4214, %v4332
      %v4334 = vpop.f32.mrb[0].mxu0
      %4335 = vmatprep.mubr.f32.mxu0 0.0
      %v4336 = vand.u32 %v283, 4294901760
      %4337 = vmatmul.mubr.f32.gmra.mrb[0].mxu0 %v4336
      %v4338 = vpop.f32.mrb[0].mxu0
      %v4339 = vadd.f32 %v4222, %v4338
      %v4340 = vpop.f32.mrb[0].mxu0
      %4341 = vmatprep.mubr.f32.mxu0 0.0
      %v4342 = vand.u32 %v286, 4294901760
      %4343 = vmatmul.mubr.f32.gmra.mrb[0].mxu0 %v4342
      %v4344 = vpop.f32.mrb[0].mxu0
      %v4345 = vadd.f32 %v4230, %v4344
      %v4346 = vpop.f32.mrb[0].mxu0
      %4347 = vmatprep.mubr.f32.mxu0 0.0
      %v4348 = vand.u32 %v289, 4294901760
      %4349 = vmatmul.mubr.f32.gmra.mrb[0].mxu0 %v4348
      %v4350 = vpop.f32.mrb[0].mxu0
      %v4351 = vadd.f32 %v4238, %v4350
      %v4352 = vpop.f32.mrb[0].mxu0
      %4353 = vdwg.mxu0
      %4354 = vmatprep.subr.mxu0 0.0
      %v4355 = vand.u32 %v3777, 4294901760
      %4356 = vmatpush1.msra.mxu0 %v4355
      %4357 = vmatprep.subr.mxu0 0.0
      %v4358 = vand.u32 %v3778, 4294901760
      %4359 = vmatpush1.msra.mxu0 %v4358
      %4360 = vmatprep.subr.mxu0 0.0
      %v4361 = vand.u32 %v3779, 4294901760
      %4362 = vmatpush1.msra.mxu0 %v4361
      %4363 = vmatprep.subr.mxu0 0.0
      %v4364 = vand.u32 %v3780, 4294901760
      %4365 = vmatpush1.msra.mxu0 %v4364
      %4366 = vmatprep.subr.mxu0 0.0
      %v4367 = vand.u32 %v3781, 4294901760
      %4368 = vmatpush1.msra.mxu0 %v4367
      %4369 = vmatprep.subr.mxu0 0.0
      %v4370 = vand.u32 %v3782, 4294901760
      %4371 = vmatpush1.msra.mxu0 %v4370
      %4372 = vmatprep.subr.mxu0 0.0
      %v4373 = vand.u32 %v3783, 4294901760
      %4374 = vmatpush1.msra.mxu0 %v4373
      %4375 = vmatprep.subr.mxu0 0.0
      %v4376 = vand.u32 %v3784, 4294901760
      %4377 = vmatpush1.msra.mxu0 %v4376
      %4378 = vmatprep.subr.mxu0 0.0
      %4379 = vmatpush1.msra.mxu0 0.0
      %4380 = vmatprep.subr.mxu0 0.0
      %4381 = vmatpush1.msra.mxu0 0.0
      %4382 = vmatprep.subr.mxu0 0.0
      %4383 = vmatpush1.msra.mxu0 0.0
      %4384 = vmatprep.subr.mxu0 0.0
      %4385 = vmatpush1.msra.mxu0 0.0
      %4386 = vmatprep.subr.mxu0 0.0
      %4387 = vmatpush1.msra.mxu0 0.0
      %4388 = vmatprep.subr.mxu0 0.0
      %4389 = vmatpush1.msra.mxu0 0.0
      %4390 = vmatprep.subr.mxu0 0.0
      %4391 = vmatpush1.msra.mxu0 0.0
      %4392 = vmatprep.subr.mxu0 0.0
      %4393 = vmatpush1.msra.mxu0 0.0
      %4394 = vmatprep.subr.mxu0 0.0
      %4395 = vmatpush1.msra.mxu0 0.0
      %4396 = vmatprep.subr.mxu0 0.0
      %4397 = vmatpush1.msra.mxu0 0.0
      %4398 = vmatprep.subr.mxu0 0.0
      %4399 = vmatpush1.msra.mxu0 0.0
      %4400 = vmatprep.subr.mxu0 0.0
      %4401 = vmatpush1.msra.mxu0 0.0
      %4402 = vmatprep.subr.mxu0 0.0
      %4403 = vmatpush1.msra.mxu0 0.0
      %4404 = vmatprep.subr.mxu0 0.0
      %4405 = vmatpush1.msra.mxu0 0.0
      %4406 = vmatprep.subr.mxu0 0.0
      %4407 = vmatpush1.msra.mxu0 0.0
      %4408 = vmatprep.subr.mxu0 0.0
      %4409 = vmatpush1.msra.mxu0 0.0
      %4410 = vmatprep.subr.mxu0 0.0
      %4411 = vmatpush1.msra.mxu0 0.0
      %4412 = vmatprep.subr.mxu0 0.0
      %4413 = vmatpush1.msra.mxu0 0.0
      %4414 = vmatprep.subr.mxu0 0.0
      %4415 = vmatpush1.msra.mxu0 0.0
      %4416 = vmatprep.subr.mxu0 0.0
      %4417 = vmatpush1.msra.mxu0 0.0
      %4418 = vmatprep.subr.mxu0 0.0
      %4419 = vmatpush1.msra.mxu0 0.0
      %4420 = vmatprep.subr.mxu0 0.0
      %4421 = vmatpush1.msra.mxu0 0.0
      %4422 = vmatprep.subr.mxu0 0.0
      %4423 = vmatpush1.msra.mxu0 0.0
      %4424 = vmatprep.subr.mxu0 0.0
      %4425 = vmatpush1.msra.mxu0 0.0
      %4426 = vmatprep.mubr.f32.mxu0 0.0
      %v4427 = vand.u32 %v280, 4294901760
      %4428 = vmatmul.mubr.f32.gmra.mrb[0].mxu0 %v4427
      %v4429 = vpop.f32.mrb[0].mxu0
      %v4430 = vadd.f32 %v4333, %v4429
      %v4431 = vpop.f32.mrb[0].mxu0
      %4432 = vmatprep.mubr.f32.mxu0 0.0
      %v4433 = vand.u32 %v283, 4294901760
      %4434 = vmatmul.mubr.f32.gmra.mrb[0].mxu0 %v4433
      %v4435 = vpop.f32.mrb[0].mxu0
      %v4436 = vadd.f32 %v4339, %v4435
      %v4437 = vpop.f32.mrb[0].mxu0
      %4438 = vmatprep.mubr.f32.mxu0 0.0
      %v4439 = vand.u32 %v286, 4294901760
      %4440 = vmatmul.mubr.f32.gmra.mrb[0].mxu0 %v4439
      %v4441 = vpop.f32.mrb[0].mxu0
      %v4442 = vadd.f32 %v4345, %v4441
      %v4443 = vpop.f32.mrb[0].mxu0
      %4444 = vmatprep.mubr.f32.mxu0 0.0
      %v4445 = vand.u32 %v289, 4294901760
      %4446 = vmatmul.mubr.f32.gmra.mrb[0].mxu0 %v4445
      %v4447 = vpop.f32.mrb[0].mxu0
      %v4448 = vadd.f32 %v4351, %v4447
      %v4449 = vpop.f32.mrb[0].mxu0
      %4450 = vdwg.mxu0
      %s4451 = scalar_lea.vmem %s176, 160
      %4452 = vst.msk [vmem:[%s4451] sm:$0xff] %vm193, %v4430
      %4453 = vst.msk [vmem:[%s4451 + $0x8] sm:$0xff] %vm193, %v4436
      %4454 = vst.msk [vmem:[%s4451 + $0x10] sm:$0xff] %vm193, %v4442
      %4455 = vst.msk [vmem:[%s4451 + $0x18] sm:$0xff] %vm193, %v4448
      %v4456 = vlaneseq
      %v4457 = vshrl.u32 %v4456, 7
      %v4458 = vsub.s32 6, %v4457
      %v4459 = vrot.slane %v182, %v4458
      %vm4460 = vcmp.eq.s32.totalorder %v4459, %v242
      %vm4461 = vcmp.eq.s32.totalorder %v4459, %v243
      %vm4462 = vcmp.eq.s32.totalorder %v4459, %v244
      %vm4463 = vcmp.eq.s32.totalorder %v4459, %v245
      %vm4464 = vcmp.eq.s32.totalorder %v4459, %v246
      %vm4465 = vcmp.eq.s32.totalorder %v4459, %v247
      %vm4466 = vcmp.eq.s32.totalorder %v4459, %v248
      %vm4467 = vcmp.eq.s32.totalorder %v4459, %v249
      %v4468 = vsel %vm4460, 1, 0
      %v4469 = vsel %vm4461, 1, 0
      %v4470 = vsel %vm4462, 1, 0
      %v4471 = vsel %vm4463, 1, 0
      %v4472 = vsel %vm4464, 1, 0
      %v4473 = vsel %vm4465, 1, 0
      %v4474 = vsel %vm4466, 1, 0
      %v4475 = vsel %vm4467, 1, 0
      %v4476 = vcvt.s32.f32 %v4468
      %v4477 = vcvt.s32.f32 %v4469
      %v4478 = vcvt.s32.f32 %v4470
      %v4479 = vcvt.s32.f32 %v4471
      %v4480 = vcvt.s32.f32 %v4472
      %v4481 = vcvt.s32.f32 %v4473
      %v4482 = vcvt.s32.f32 %v4474
      %v4483 = vcvt.s32.f32 %v4475
      %4484 = vmatprep.subr.mxu0 0.0
      %v4485 = vand.u32 %v4476, 4294901760
      %4486 = vmatpush1.msra.mxu0 %v4485
      %4487 = vmatprep.subr.mxu0 0.0
      %v4488 = vand.u32 %v4477, 4294901760
      %4489 = vmatpush1.msra.mxu0 %v4488
      %4490 = vmatprep.subr.mxu0 0.0
      %v4491 = vand.u32 %v4478, 4294901760
      %4492 = vmatpush1.msra.mxu0 %v4491
      %4493 = vmatprep.subr.mxu0 0.0
      %v4494 = vand.u32 %v4479, 4294901760
      %4495 = vmatpush1.msra.mxu0 %v4494
      %4496 = vmatprep.subr.mxu0 0.0
      %v4497 = vand.u32 %v4480, 4294901760
      %4498 = vmatpush1.msra.mxu0 %v4497
      %4499 = vmatprep.subr.mxu0 0.0
      %v4500 = vand.u32 %v4481, 4294901760
      %4501 = vmatpush1.msra.mxu0 %v4500
      %4502 = vmatprep.subr.mxu0 0.0
      %v4503 = vand.u32 %v4482, 4294901760
      %4504 = vmatpush1.msra.mxu0 %v4503
      %4505 = vmatprep.subr.mxu0 0.0
      %v4506 = vand.u32 %v4483, 4294901760
      %4507 = vmatpush1.msra.mxu0 %v4506
      %4508 = vmatprep.subr.mxu0 0.0
      %4509 = vmatpush1.msra.mxu0 0.0
      %4510 = vmatprep.subr.mxu0 0.0
      %4511 = vmatpush1.msra.mxu0 0.0
      %4512 = vmatprep.subr.mxu0 0.0
      %4513 = vmatpush1.msra.mxu0 0.0
      %4514 = vmatprep.subr.mxu0 0.0
      %4515 = vmatpush1.msra.mxu0 0.0
      %4516 = vmatprep.subr.mxu0 0.0
      %4517 = vmatpush1.msra.mxu0 0.0
      %4518 = vmatprep.subr.mxu0 0.0
      %4519 = vmatpush1.msra.mxu0 0.0
      %4520 = vmatprep.subr.mxu0 0.0
      %4521 = vmatpush1.msra.mxu0 0.0
      %4522 = vmatprep.subr.mxu0 0.0
      %4523 = vmatpush1.msra.mxu0 0.0
      %4524 = vmatprep.subr.mxu0 0.0
      %4525 = vmatpush1.msra.mxu0 0.0
      %4526 = vmatprep.subr.mxu0 0.0
      %4527 = vmatpush1.msra.mxu0 0.0
      %4528 = vmatprep.subr.mxu0 0.0
      %4529 = vmatpush1.msra.mxu0 0.0
      %4530 = vmatprep.subr.mxu0 0.0
      %4531 = vmatpush1.msra.mxu0 0.0
      %4532 = vmatprep.subr.mxu0 0.0
      %4533 = vmatpush1.msra.mxu0 0.0
      %4534 = vmatprep.subr.mxu0 0.0
      %4535 = vmatpush1.msra.mxu0 0.0
      %4536 = vmatprep.subr.mxu0 0.0
      %4537 = vmatpush1.msra.mxu0 0.0
      %4538 = vmatprep.subr.mxu0 0.0
      %4539 = vmatpush1.msra.mxu0 0.0
      %4540 = vmatprep.subr.mxu0 0.0
      %4541 = vmatpush1.msra.mxu0 0.0
      %4542 = vmatprep.subr.mxu0 0.0
      %4543 = vmatpush1.msra.mxu0 0.0
      %4544 = vmatprep.subr.mxu0 0.0
      %4545 = vmatpush1.msra.mxu0 0.0
      %4546 = vmatprep.subr.mxu0 0.0
      %4547 = vmatpush1.msra.mxu0 0.0
      %4548 = vmatprep.subr.mxu0 0.0
      %4549 = vmatpush1.msra.mxu0 0.0
      %4550 = vmatprep.subr.mxu0 0.0
      %4551 = vmatpush1.msra.mxu0 0.0
      %4552 = vmatprep.subr.mxu0 0.0
      %4553 = vmatpush1.msra.mxu0 0.0
      %4554 = vmatprep.subr.mxu0 0.0
      %4555 = vmatpush1.msra.mxu0 0.0
      %4556 = vmatprep.mubr.f32.mxu0 0.0
      %v4557 = vand.u32 %v280, 4294901760
      %v4558 = vsub.f32 %v280, %v4557
      %v4559 = vand.u32 %v4558, 4294901760
      %v4560 = vsub.f32 %v4558, %v4559
      %v4561 = vand.u32 %v4560, 4294901760
      %4562 = vmatmul.mubr.f32.gmra.mrb[0].mxu0 %v4561
      %v4563 = vpop.f32.mrb[0].mxu0
      %v4564 = vadd.f32 0.0, %v4563
      %v4565 = vpop.f32.mrb[0].mxu0
      %4566 = vmatprep.mubr.f32.mxu0 0.0
      %v4567 = vand.u32 %v283, 4294901760
      %v4568 = vsub.f32 %v283, %v4567
      %v4569 = vand.u32 %v4568, 4294901760
      %v4570 = vsub.f32 %v4568, %v4569
      %v4571 = vand.u32 %v4570, 4294901760
      %4572 = vmatmul.mubr.f32.gmra.mrb[0].mxu0 %v4571
      %v4573 = vpop.f32.mrb[0].mxu0
      %v4574 = vadd.f32 0.0, %v4573
      %v4575 = vpop.f32.mrb[0].mxu0
      %4576 = vmatprep.mubr.f32.mxu0 0.0
      %v4577 = vand.u32 %v286, 4294901760
      %v4578 = vsub.f32 %v286, %v4577
      %v4579 = vand.u32 %v4578, 4294901760
      %v4580 = vsub.f32 %v4578, %v4579
      %v4581 = vand.u32 %v4580, 4294901760
      %4582 = vmatmul.mubr.f32.gmra.mrb[0].mxu0 %v4581
      %v4583 = vpop.f32.mrb[0].mxu0
      %v4584 = vadd.f32 0.0, %v4583
      %v4585 = vpop.f32.mrb[0].mxu0
      %4586 = vmatprep.mubr.f32.mxu0 0.0
      %v4587 = vand.u32 %v289, 4294901760
      %v4588 = vsub.f32 %v289, %v4587
      %v4589 = vand.u32 %v4588, 4294901760
      %v4590 = vsub.f32 %v4588, %v4589
      %v4591 = vand.u32 %v4590, 4294901760
      %4592 = vmatmul.mubr.f32.gmra.mrb[0].mxu0 %v4591
      %v4593 = vpop.f32.mrb[0].mxu0
      %v4594 = vadd.f32 0.0, %v4593
      %v4595 = vpop.f32.mrb[0].mxu0
      %4596 = vdwg.mxu0
      %4597 = vmatprep.subr.mxu0 0.0
      %v4598 = vand.u32 %v4476, 4294901760
      %v4599 = vsub.f32 %v4476, %v4598
      %v4600 = vand.u32 %v4599, 4294901760
      %v4601 = vsub.f32 %v4599, %v4600
      %v4602 = vand.u32 %v4601, 4294901760
      %4603 = vmatpush1.msra.mxu0 %v4602
      %4604 = vmatprep.subr.mxu0 0.0
      %v4605 = vand.u32 %v4477, 4294901760
      %v4606 = vsub.f32 %v4477, %v4605
      %v4607 = vand.u32 %v4606, 4294901760
      %v4608 = vsub.f32 %v4606, %v4607
      %v4609 = vand.u32 %v4608, 4294901760
      %4610 = vmatpush1.msra.mxu0 %v4609
      %4611 = vmatprep.subr.mxu0 0.0
      %v4612 = vand.u32 %v4478, 4294901760
      %v4613 = vsub.f32 %v4478, %v4612
      %v4614 = vand.u32 %v4613, 4294901760
      %v4615 = vsub.f32 %v4613, %v4614
      %v4616 = vand.u32 %v4615, 4294901760
      %4617 = vmatpush1.msra.mxu0 %v4616
      %4618 = vmatprep.subr.mxu0 0.0
      %v4619 = vand.u32 %v4479, 4294901760
      %v4620 = vsub.f32 %v4479, %v4619
      %v4621 = vand.u32 %v4620, 4294901760
      %v4622 = vsub.f32 %v4620, %v4621
      %v4623 = vand.u32 %v4622, 4294901760
      %4624 = vmatpush1.msra.mxu0 %v4623
      %4625 = vmatprep.subr.mxu0 0.0
      %v4626 = vand.u32 %v4480, 4294901760
      %v4627 = vsub.f32 %v4480, %v4626
      %v4628 = vand.u32 %v4627, 4294901760
      %v4629 = vsub.f32 %v4627, %v4628
      %v4630 = vand.u32 %v4629, 4294901760
      %4631 = vmatpush1.msra.mxu0 %v4630
      %4632 = vmatprep.subr.mxu0 0.0
      %v4633 = vand.u32 %v4481, 4294901760
      %v4634 = vsub.f32 %v4481, %v4633
      %v4635 = vand.u32 %v4634, 4294901760
      %v4636 = vsub.f32 %v4634, %v4635
      %v4637 = vand.u32 %v4636, 4294901760
      %4638 = vmatpush1.msra.mxu0 %v4637
      %4639 = vmatprep.subr.mxu0 0.0
      %v4640 = vand.u32 %v4482, 4294901760
      %v4641 = vsub.f32 %v4482, %v4640
      %v4642 = vand.u32 %v4641, 4294901760
      %v4643 = vsub.f32 %v4641, %v4642
      %v4644 = vand.u32 %v4643, 4294901760
      %4645 = vmatpush1.msra.mxu0 %v4644
      %4646 = vmatprep.subr.mxu0 0.0
      %v4647 = vand.u32 %v4483, 4294901760
      %v4648 = vsub.f32 %v4483, %v4647
      %v4649 = vand.u32 %v4648, 4294901760
      %v4650 = vsub.f32 %v4648, %v4649
      %v4651 = vand.u32 %v4650, 4294901760
      %4652 = vmatpush1.msra.mxu0 %v4651
      %4653 = vmatprep.subr.mxu0 0.0
      %4654 = vmatpush1.msra.mxu0 0.0
      %4655 = vmatprep.subr.mxu0 0.0
      %4656 = vmatpush1.msra.mxu0 0.0
      %4657 = vmatprep.subr.mxu0 0.0
      %4658 = vmatpush1.msra.mxu0 0.0
      %4659 = vmatprep.subr.mxu0 0.0
      %4660 = vmatpush1.msra.mxu0 0.0
      %4661 = vmatprep.subr.mxu0 0.0
      %4662 = vmatpush1.msra.mxu0 0.0
      %4663 = vmatprep.subr.mxu0 0.0
      %4664 = vmatpush1.msra.mxu0 0.0
      %4665 = vmatprep.subr.mxu0 0.0
      %4666 = vmatpush1.msra.mxu0 0.0
      %4667 = vmatprep.subr.mxu0 0.0
      %4668 = vmatpush1.msra.mxu0 0.0
      %4669 = vmatprep.subr.mxu0 0.0
      %4670 = vmatpush1.msra.mxu0 0.0
      %4671 = vmatprep.subr.mxu0 0.0
      %4672 = vmatpush1.msra.mxu0 0.0
      %4673 = vmatprep.subr.mxu0 0.0
      %4674 = vmatpush1.msra.mxu0 0.0
      %4675 = vmatprep.subr.mxu0 0.0
      %4676 = vmatpush1.msra.mxu0 0.0
      %4677 = vmatprep.subr.mxu0 0.0
      %4678 = vmatpush1.msra.mxu0 0.0
      %4679 = vmatprep.subr.mxu0 0.0
      %4680 = vmatpush1.msra.mxu0 0.0
      %4681 = vmatprep.subr.mxu0 0.0
      %4682 = vmatpush1.msra.mxu0 0.0
      %4683 = vmatprep.subr.mxu0 0.0
      %4684 = vmatpush1.msra.mxu0 0.0
      %4685 = vmatprep.subr.mxu0 0.0
      %4686 = vmatpush1.msra.mxu0 0.0
      %4687 = vmatprep.subr.mxu0 0.0
      %4688 = vmatpush1.msra.mxu0 0.0
      %4689 = vmatprep.subr.mxu0 0.0
      %4690 = vmatpush1.msra.mxu0 0.0
      %4691 = vmatprep.subr.mxu0 0.0
      %4692 = vmatpush1.msra.mxu0 0.0
      %4693 = vmatprep.subr.mxu0 0.0
      %4694 = vmatpush1.msra.mxu0 0.0
      %4695 = vmatprep.subr.mxu0 0.0
      %4696 = vmatpush1.msra.mxu0 0.0
      %4697 = vmatprep.subr.mxu0 0.0
      %4698 = vmatpush1.msra.mxu0 0.0
      %4699 = vmatprep.subr.mxu0 0.0
      %4700 = vmatpush1.msra.mxu0 0.0
      %4701 = vmatprep.mubr.f32.mxu0 0.0
      %v4702 = vand.u32 %v280, 4294901760
      %4703 = vmatmul.mubr.f32.gmra.mrb[0].mxu0 %v4702
      %v4704 = vpop.f32.mrb[0].mxu0
      %v4705 = vadd.f32 %v4564, %v4704
      %v4706 = vpop.f32.mrb[0].mxu0
      %4707 = vmatprep.mubr.f32.mxu0 0.0
      %v4708 = vand.u32 %v283, 4294901760
      %4709 = vmatmul.mubr.f32.gmra.mrb[0].mxu0 %v4708
      %v4710 = vpop.f32.mrb[0].mxu0
      %v4711 = vadd.f32 %v4574, %v4710
      %v4712 = vpop.f32.mrb[0].mxu0
      %4713 = vmatprep.mubr.f32.mxu0 0.0
      %v4714 = vand.u32 %v286, 4294901760
      %4715 = vmatmul.mubr.f32.gmra.mrb[0].mxu0 %v4714
      %v4716 = vpop.f32.mrb[0].mxu0
      %v4717 = vadd.f32 %v4584, %v4716
      %v4718 = vpop.f32.mrb[0].mxu0
      %4719 = vmatprep.mubr.f32.mxu0 0.0
      %v4720 = vand.u32 %v289, 4294901760
      %4721 = vmatmul.mubr.f32.gmra.mrb[0].mxu0 %v4720
      %v4722 = vpop.f32.mrb[0].mxu0
      %v4723 = vadd.f32 %v4594, %v4722
      %v4724 = vpop.f32.mrb[0].mxu0
      %4725 = vdwg.mxu0
      %4726 = vmatprep.subr.mxu0 0.0
      %v4727 = vand.u32 %v4476, 4294901760
      %v4728 = vsub.f32 %v4476, %v4727
      %4729 = vmatpush1.msra.mxu0 %v4728
      %4730 = vmatprep.subr.mxu0 0.0
      %v4731 = vand.u32 %v4477, 4294901760
      %v4732 = vsub.f32 %v4477, %v4731
      %4733 = vmatpush1.msra.mxu0 %v4732
      %4734 = vmatprep.subr.mxu0 0.0
      %v4735 = vand.u32 %v4478, 4294901760
      %v4736 = vsub.f32 %v4478, %v4735
      %4737 = vmatpush1.msra.mxu0 %v4736
      %4738 = vmatprep.subr.mxu0 0.0
      %v4739 = vand.u32 %v4479, 4294901760
      %v4740 = vsub.f32 %v4479, %v4739
      %4741 = vmatpush1.msra.mxu0 %v4740
      %4742 = vmatprep.subr.mxu0 0.0
      %v4743 = vand.u32 %v4480, 4294901760
      %v4744 = vsub.f32 %v4480, %v4743
      %4745 = vmatpush1.msra.mxu0 %v4744
      %4746 = vmatprep.subr.mxu0 0.0
      %v4747 = vand.u32 %v4481, 4294901760
      %v4748 = vsub.f32 %v4481, %v4747
      %4749 = vmatpush1.msra.mxu0 %v4748
      %4750 = vmatprep.subr.mxu0 0.0
      %v4751 = vand.u32 %v4482, 4294901760
      %v4752 = vsub.f32 %v4482, %v4751
      %4753 = vmatpush1.msra.mxu0 %v4752
      %4754 = vmatprep.subr.mxu0 0.0
      %v4755 = vand.u32 %v4483, 4294901760
      %v4756 = vsub.f32 %v4483, %v4755
      %4757 = vmatpush1.msra.mxu0 %v4756
      %4758 = vmatprep.subr.mxu0 0.0
      %4759 = vmatpush1.msra.mxu0 0.0
      %4760 = vmatprep.subr.mxu0 0.0
      %4761 = vmatpush1.msra.mxu0 0.0
      %4762 = vmatprep.subr.mxu0 0.0
      %4763 = vmatpush1.msra.mxu0 0.0
      %4764 = vmatprep.subr.mxu0 0.0
      %4765 = vmatpush1.msra.mxu0 0.0
      %4766 = vmatprep.subr.mxu0 0.0
      %4767 = vmatpush1.msra.mxu0 0.0
      %4768 = vmatprep.subr.mxu0 0.0
      %4769 = vmatpush1.msra.mxu0 0.0
      %4770 = vmatprep.subr.mxu0 0.0
      %4771 = vmatpush1.msra.mxu0 0.0
      %4772 = vmatprep.subr.mxu0 0.0
      %4773 = vmatpush1.msra.mxu0 0.0
      %4774 = vmatprep.subr.mxu0 0.0
      %4775 = vmatpush1.msra.mxu0 0.0
      %4776 = vmatprep.subr.mxu0 0.0
      %4777 = vmatpush1.msra.mxu0 0.0
      %4778 = vmatprep.subr.mxu0 0.0
      %4779 = vmatpush1.msra.mxu0 0.0
      %4780 = vmatprep.subr.mxu0 0.0
      %4781 = vmatpush1.msra.mxu0 0.0
      %4782 = vmatprep.subr.mxu0 0.0
      %4783 = vmatpush1.msra.mxu0 0.0
      %4784 = vmatprep.subr.mxu0 0.0
      %4785 = vmatpush1.msra.mxu0 0.0
      %4786 = vmatprep.subr.mxu0 0.0
      %4787 = vmatpush1.msra.mxu0 0.0
      %4788 = vmatprep.subr.mxu0 0.0
      %4789 = vmatpush1.msra.mxu0 0.0
      %4790 = vmatprep.subr.mxu0 0.0
      %4791 = vmatpush1.msra.mxu0 0.0
      %4792 = vmatprep.subr.mxu0 0.0
      %4793 = vmatpush1.msra.mxu0 0.0
      %4794 = vmatprep.subr.mxu0 0.0
      %4795 = vmatpush1.msra.mxu0 0.0
      %4796 = vmatprep.subr.mxu0 0.0
      %4797 = vmatpush1.msra.mxu0 0.0
      %4798 = vmatprep.subr.mxu0 0.0
      %4799 = vmatpush1.msra.mxu0 0.0
      %4800 = vmatprep.subr.mxu0 0.0
      %4801 = vmatpush1.msra.mxu0 0.0
      %4802 = vmatprep.subr.mxu0 0.0
      %4803 = vmatpush1.msra.mxu0 0.0
      %4804 = vmatprep.subr.mxu0 0.0
      %4805 = vmatpush1.msra.mxu0 0.0
      %4806 = vmatprep.mubr.f32.mxu0 0.0
      %v4807 = vand.u32 %v280, 4294901760
      %v4808 = vsub.f32 %v280, %v4807
      %4809 = vmatmul.mubr.f32.gmra.mrb[0].mxu0 %v4808
      %v4810 = vpop.f32.mrb[0].mxu0
      %v4811 = vadd.f32 %v4705, %v4810
      %v4812 = vpop.f32.mrb[0].mxu0
      %4813 = vmatprep.mubr.f32.mxu0 0.0
      %v4814 = vand.u32 %v283, 4294901760
      %v4815 = vsub.f32 %v283, %v4814
      %4816 = vmatmul.mubr.f32.gmra.mrb[0].mxu0 %v4815
      %v4817 = vpop.f32.mrb[0].mxu0
      %v4818 = vadd.f32 %v4711, %v4817
      %v4819 = vpop.f32.mrb[0].mxu0
      %4820 = vmatprep.mubr.f32.mxu0 0.0
      %v4821 = vand.u32 %v286, 4294901760
      %v4822 = vsub.f32 %v286, %v4821
      %4823 = vmatmul.mubr.f32.gmra.mrb[0].mxu0 %v4822
      %v4824 = vpop.f32.mrb[0].mxu0
      %v4825 = vadd.f32 %v4717, %v4824
      %v4826 = vpop.f32.mrb[0].mxu0
      %4827 = vmatprep.mubr.f32.mxu0 0.0
      %v4828 = vand.u32 %v289, 4294901760
      %v4829 = vsub.f32 %v289, %v4828
      %4830 = vmatmul.mubr.f32.gmra.mrb[0].mxu0 %v4829
      %v4831 = vpop.f32.mrb[0].mxu0
      %v4832 = vadd.f32 %v4723, %v4831
      %v4833 = vpop.f32.mrb[0].mxu0
      %4834 = vdwg.mxu0
      %4835 = vmatprep.subr.mxu0 0.0
      %v4836 = vand.u32 %v4476, 4294901760
      %4837 = vmatpush1.msra.mxu0 %v4836
      %4838 = vmatprep.subr.mxu0 0.0
      %v4839 = vand.u32 %v4477, 4294901760
      %4840 = vmatpush1.msra.mxu0 %v4839
      %4841 = vmatprep.subr.mxu0 0.0
      %v4842 = vand.u32 %v4478, 4294901760
      %4843 = vmatpush1.msra.mxu0 %v4842
      %4844 = vmatprep.subr.mxu0 0.0
      %v4845 = vand.u32 %v4479, 4294901760
      %4846 = vmatpush1.msra.mxu0 %v4845
      %4847 = vmatprep.subr.mxu0 0.0
      %v4848 = vand.u32 %v4480, 4294901760
      %4849 = vmatpush1.msra.mxu0 %v4848
      %4850 = vmatprep.subr.mxu0 0.0
      %v4851 = vand.u32 %v4481, 4294901760
      %4852 = vmatpush1.msra.mxu0 %v4851
      %4853 = vmatprep.subr.mxu0 0.0
      %v4854 = vand.u32 %v4482, 4294901760
      %4855 = vmatpush1.msra.mxu0 %v4854
      %4856 = vmatprep.subr.mxu0 0.0
      %v4857 = vand.u32 %v4483, 4294901760
      %4858 = vmatpush1.msra.mxu0 %v4857
      %4859 = vmatprep.subr.mxu0 0.0
      %4860 = vmatpush1.msra.mxu0 0.0
      %4861 = vmatprep.subr.mxu0 0.0
      %4862 = vmatpush1.msra.mxu0 0.0
      %4863 = vmatprep.subr.mxu0 0.0
      %4864 = vmatpush1.msra.mxu0 0.0
      %4865 = vmatprep.subr.mxu0 0.0
      %4866 = vmatpush1.msra.mxu0 0.0
      %4867 = vmatprep.subr.mxu0 0.0
      %4868 = vmatpush1.msra.mxu0 0.0
      %4869 = vmatprep.subr.mxu0 0.0
      %4870 = vmatpush1.msra.mxu0 0.0
      %4871 = vmatprep.subr.mxu0 0.0
      %4872 = vmatpush1.msra.mxu0 0.0
      %4873 = vmatprep.subr.mxu0 0.0
      %4874 = vmatpush1.msra.mxu0 0.0
      %4875 = vmatprep.subr.mxu0 0.0
      %4876 = vmatpush1.msra.mxu0 0.0
      %4877 = vmatprep.subr.mxu0 0.0
      %4878 = vmatpush1.msra.mxu0 0.0
      %4879 = vmatprep.subr.mxu0 0.0
      %4880 = vmatpush1.msra.mxu0 0.0
      %4881 = vmatprep.subr.mxu0 0.0
      %4882 = vmatpush1.msra.mxu0 0.0
      %4883 = vmatprep.subr.mxu0 0.0
      %4884 = vmatpush1.msra.mxu0 0.0
      %4885 = vmatprep.subr.mxu0 0.0
      %4886 = vmatpush1.msra.mxu0 0.0
      %4887 = vmatprep.subr.mxu0 0.0
      %4888 = vmatpush1.msra.mxu0 0.0
      %4889 = vmatprep.subr.mxu0 0.0
      %4890 = vmatpush1.msra.mxu0 0.0
      %4891 = vmatprep.subr.mxu0 0.0
      %4892 = vmatpush1.msra.mxu0 0.0
      %4893 = vmatprep.subr.mxu0 0.0
      %4894 = vmatpush1.msra.mxu0 0.0
      %4895 = vmatprep.subr.mxu0 0.0
      %4896 = vmatpush1.msra.mxu0 0.0
      %4897 = vmatprep.subr.mxu0 0.0
      %4898 = vmatpush1.msra.mxu0 0.0
      %4899 = vmatprep.subr.mxu0 0.0
      %4900 = vmatpush1.msra.mxu0 0.0
      %4901 = vmatprep.subr.mxu0 0.0
      %4902 = vmatpush1.msra.mxu0 0.0
      %4903 = vmatprep.subr.mxu0 0.0
      %4904 = vmatpush1.msra.mxu0 0.0
      %4905 = vmatprep.subr.mxu0 0.0
      %4906 = vmatpush1.msra.mxu0 0.0
      %4907 = vmatprep.mubr.f32.mxu0 0.0
      %v4908 = vand.u32 %v280, 4294901760
      %v4909 = vsub.f32 %v280, %v4908
      %v4910 = vand.u32 %v4909, 4294901760
      %4911 = vmatmul.mubr.f32.gmra.mrb[0].mxu0 %v4910
      %v4912 = vpop.f32.mrb[0].mxu0
      %v4913 = vadd.f32 %v4811, %v4912
      %v4914 = vpop.f32.mrb[0].mxu0
      %4915 = vmatprep.mubr.f32.mxu0 0.0
      %v4916 = vand.u32 %v283, 4294901760
      %v4917 = vsub.f32 %v283, %v4916
      %v4918 = vand.u32 %v4917, 4294901760
      %4919 = vmatmul.mubr.f32.gmra.mrb[0].mxu0 %v4918
      %v4920 = vpop.f32.mrb[0].mxu0
      %v4921 = vadd.f32 %v4818, %v4920
      %v4922 = vpop.f32.mrb[0].mxu0
      %4923 = vmatprep.mubr.f32.mxu0 0.0
      %v4924 = vand.u32 %v286, 4294901760
      %v4925 = vsub.f32 %v286, %v4924
      %v4926 = vand.u32 %v4925, 4294901760
      %4927 = vmatmul.mubr.f32.gmra.mrb[0].mxu0 %v4926
      %v4928 = vpop.f32.mrb[0].mxu0
      %v4929 = vadd.f32 %v4825, %v4928
      %v4930 = vpop.f32.mrb[0].mxu0
      %4931 = vmatprep.mubr.f32.mxu0 0.0
      %v4932 = vand.u32 %v289, 4294901760
      %v4933 = vsub.f32 %v289, %v4932
      %v4934 = vand.u32 %v4933, 4294901760
      %4935 = vmatmul.mubr.f32.gmra.mrb[0].mxu0 %v4934
      %v4936 = vpop.f32.mrb[0].mxu0
      %v4937 = vadd.f32 %v4832, %v4936
      %v4938 = vpop.f32.mrb[0].mxu0
      %4939 = vdwg.mxu0
      %4940 = vmatprep.subr.mxu0 0.0
      %v4941 = vand.u32 %v4476, 4294901760
      %v4942 = vsub.f32 %v4476, %v4941
      %v4943 = vand.u32 %v4942, 4294901760
      %4944 = vmatpush1.msra.mxu0 %v4943
      %4945 = vmatprep.subr.mxu0 0.0
      %v4946 = vand.u32 %v4477, 4294901760
      %v4947 = vsub.f32 %v4477, %v4946
      %v4948 = vand.u32 %v4947, 4294901760
      %4949 = vmatpush1.msra.mxu0 %v4948
      %4950 = vmatprep.subr.mxu0 0.0
      %v4951 = vand.u32 %v4478, 4294901760
      %v4952 = vsub.f32 %v4478, %v4951
      %v4953 = vand.u32 %v4952, 4294901760
      %4954 = vmatpush1.msra.mxu0 %v4953
      %4955 = vmatprep.subr.mxu0 0.0
      %v4956 = vand.u32 %v4479, 4294901760
      %v4957 = vsub.f32 %v4479, %v4956
      %v4958 = vand.u32 %v4957, 4294901760
      %4959 = vmatpush1.msra.mxu0 %v4958
      %4960 = vmatprep.subr.mxu0 0.0
      %v4961 = vand.u32 %v4480, 4294901760
      %v4962 = vsub.f32 %v4480, %v4961
      %v4963 = vand.u32 %v4962, 4294901760
      %4964 = vmatpush1.msra.mxu0 %v4963
      %4965 = vmatprep.subr.mxu0 0.0
      %v4966 = vand.u32 %v4481, 4294901760
      %v4967 = vsub.f32 %v4481, %v4966
      %v4968 = vand.u32 %v4967, 4294901760
      %4969 = vmatpush1.msra.mxu0 %v4968
      %4970 = vmatprep.subr.mxu0 0.0
      %v4971 = vand.u32 %v4482, 4294901760
      %v4972 = vsub.f32 %v4482, %v4971
      %v4973 = vand.u32 %v4972, 4294901760
      %4974 = vmatpush1.msra.mxu0 %v4973
      %4975 = vmatprep.subr.mxu0 0.0
      %v4976 = vand.u32 %v4483, 4294901760
      %v4977 = vsub.f32 %v4483, %v4976
      %v4978 = vand.u32 %v4977, 4294901760
      %4979 = vmatpush1.msra.mxu0 %v4978
      %4980 = vmatprep.subr.mxu0 0.0
      %4981 = vmatpush1.msra.mxu0 0.0
      %4982 = vmatprep.subr.mxu0 0.0
      %4983 = vmatpush1.msra.mxu0 0.0
      %4984 = vmatprep.subr.mxu0 0.0
      %4985 = vmatpush1.msra.mxu0 0.0
      %4986 = vmatprep.subr.mxu0 0.0
      %4987 = vmatpush1.msra.mxu0 0.0
      %4988 = vmatprep.subr.mxu0 0.0
      %4989 = vmatpush1.msra.mxu0 0.0
      %4990 = vmatprep.subr.mxu0 0.0
      %4991 = vmatpush1.msra.mxu0 0.0
      %4992 = vmatprep.subr.mxu0 0.0
      %4993 = vmatpush1.msra.mxu0 0.0
      %4994 = vmatprep.subr.mxu0 0.0
      %4995 = vmatpush1.msra.mxu0 0.0
      %4996 = vmatprep.subr.mxu0 0.0
      %4997 = vmatpush1.msra.mxu0 0.0
      %4998 = vmatprep.subr.mxu0 0.0
      %4999 = vmatpush1.msra.mxu0 0.0
      %5000 = vmatprep.subr.mxu0 0.0
      %5001 = vmatpush1.msra.mxu0 0.0
      %5002 = vmatprep.subr.mxu0 0.0
      %5003 = vmatpush1.msra.mxu0 0.0
      %5004 = vmatprep.subr.mxu0 0.0
      %5005 = vmatpush1.msra.mxu0 0.0
      %5006 = vmatprep.subr.mxu0 0.0
      %5007 = vmatpush1.msra.mxu0 0.0
      %5008 = vmatprep.subr.mxu0 0.0
      %5009 = vmatpush1.msra.mxu0 0.0
      %5010 = vmatprep.subr.mxu0 0.0
      %5011 = vmatpush1.msra.mxu0 0.0
      %5012 = vmatprep.subr.mxu0 0.0
      %5013 = vmatpush1.msra.mxu0 0.0
      %5014 = vmatprep.subr.mxu0 0.0
      %5015 = vmatpush1.msra.mxu0 0.0
      %5016 = vmatprep.subr.mxu0 0.0
      %5017 = vmatpush1.msra.mxu0 0.0
      %5018 = vmatprep.subr.mxu0 0.0
      %5019 = vmatpush1.msra.mxu0 0.0
      %5020 = vmatprep.subr.mxu0 0.0
      %5021 = vmatpush1.msra.mxu0 0.0
      %5022 = vmatprep.subr.mxu0 0.0
      %5023 = vmatpush1.msra.mxu0 0.0
      %5024 = vmatprep.subr.mxu0 0.0
      %5025 = vmatpush1.msra.mxu0 0.0
      %5026 = vmatprep.subr.mxu0 0.0
      %5027 = vmatpush1.msra.mxu0 0.0
      %5028 = vmatprep.mubr.f32.mxu0 0.0
      %v5029 = vand.u32 %v280, 4294901760
      %5030 = vmatmul.mubr.f32.gmra.mrb[0].mxu0 %v5029
      %v5031 = vpop.f32.mrb[0].mxu0
      %v5032 = vadd.f32 %v4913, %v5031
      %v5033 = vpop.f32.mrb[0].mxu0
      %5034 = vmatprep.mubr.f32.mxu0 0.0
      %v5035 = vand.u32 %v283, 4294901760
      %5036 = vmatmul.mubr.f32.gmra.mrb[0].mxu0 %v5035
      %v5037 = vpop.f32.mrb[0].mxu0
      %v5038 = vadd.f32 %v4921, %v5037
      %v5039 = vpop.f32.mrb[0].mxu0
      %5040 = vmatprep.mubr.f32.mxu0 0.0
      %v5041 = vand.u32 %v286, 4294901760
      %5042 = vmatmul.mubr.f32.gmra.mrb[0].mxu0 %v5041
      %v5043 = vpop.f32.mrb[0].mxu0
      %v5044 = vadd.f32 %v4929, %v5043
      %v5045 = vpop.f32.mrb[0].mxu0
      %5046 = vmatprep.mubr.f32.mxu0 0.0
      %v5047 = vand.u32 %v289, 4294901760
      %5048 = vmatmul.mubr.f32.gmra.mrb[0].mxu0 %v5047
      %v5049 = vpop.f32.mrb[0].mxu0
      %v5050 = vadd.f32 %v4937, %v5049
      %v5051 = vpop.f32.mrb[0].mxu0
      %5052 = vdwg.mxu0
      %5053 = vmatprep.subr.mxu0 0.0
      %v5054 = vand.u32 %v4476, 4294901760
      %5055 = vmatpush1.msra.mxu0 %v5054
      %5056 = vmatprep.subr.mxu0 0.0
      %v5057 = vand.u32 %v4477, 4294901760
      %5058 = vmatpush1.msra.mxu0 %v5057
      %5059 = vmatprep.subr.mxu0 0.0
      %v5060 = vand.u32 %v4478, 4294901760
      %5061 = vmatpush1.msra.mxu0 %v5060
      %5062 = vmatprep.subr.mxu0 0.0
      %v5063 = vand.u32 %v4479, 4294901760
      %5064 = vmatpush1.msra.mxu0 %v5063
      %5065 = vmatprep.subr.mxu0 0.0
      %v5066 = vand.u32 %v4480, 4294901760
      %5067 = vmatpush1.msra.mxu0 %v5066
      %5068 = vmatprep.subr.mxu0 0.0
      %v5069 = vand.u32 %v4481, 4294901760
      %5070 = vmatpush1.msra.mxu0 %v5069
      %5071 = vmatprep.subr.mxu0 0.0
      %v5072 = vand.u32 %v4482, 4294901760
      %5073 = vmatpush1.msra.mxu0 %v5072
      %5074 = vmatprep.subr.mxu0 0.0
      %v5075 = vand.u32 %v4483, 4294901760
      %5076 = vmatpush1.msra.mxu0 %v5075
      %5077 = vmatprep.subr.mxu0 0.0
      %5078 = vmatpush1.msra.mxu0 0.0
      %5079 = vmatprep.subr.mxu0 0.0
      %5080 = vmatpush1.msra.mxu0 0.0
      %5081 = vmatprep.subr.mxu0 0.0
      %5082 = vmatpush1.msra.mxu0 0.0
      %5083 = vmatprep.subr.mxu0 0.0
      %5084 = vmatpush1.msra.mxu0 0.0
      %5085 = vmatprep.subr.mxu0 0.0
      %5086 = vmatpush1.msra.mxu0 0.0
      %5087 = vmatprep.subr.mxu0 0.0
      %5088 = vmatpush1.msra.mxu0 0.0
      %5089 = vmatprep.subr.mxu0 0.0
      %5090 = vmatpush1.msra.mxu0 0.0
      %5091 = vmatprep.subr.mxu0 0.0
      %5092 = vmatpush1.msra.mxu0 0.0
      %5093 = vmatprep.subr.mxu0 0.0
      %5094 = vmatpush1.msra.mxu0 0.0
      %5095 = vmatprep.subr.mxu0 0.0
      %5096 = vmatpush1.msra.mxu0 0.0
      %5097 = vmatprep.subr.mxu0 0.0
      %5098 = vmatpush1.msra.mxu0 0.0
      %5099 = vmatprep.subr.mxu0 0.0
      %5100 = vmatpush1.msra.mxu0 0.0
      %5101 = vmatprep.subr.mxu0 0.0
      %5102 = vmatpush1.msra.mxu0 0.0
      %5103 = vmatprep.subr.mxu0 0.0
      %5104 = vmatpush1.msra.mxu0 0.0
      %5105 = vmatprep.subr.mxu0 0.0
      %5106 = vmatpush1.msra.mxu0 0.0
      %5107 = vmatprep.subr.mxu0 0.0
      %5108 = vmatpush1.msra.mxu0 0.0
      %5109 = vmatprep.subr.mxu0 0.0
      %5110 = vmatpush1.msra.mxu0 0.0
      %5111 = vmatprep.subr.mxu0 0.0
      %5112 = vmatpush1.msra.mxu0 0.0
      %5113 = vmatprep.subr.mxu0 0.0
      %5114 = vmatpush1.msra.mxu0 0.0
      %5115 = vmatprep.subr.mxu0 0.0
      %5116 = vmatpush1.msra.mxu0 0.0
      %5117 = vmatprep.subr.mxu0 0.0
      %5118 = vmatpush1.msra.mxu0 0.0
      %5119 = vmatprep.subr.mxu0 0.0
      %5120 = vmatpush1.msra.mxu0 0.0
      %5121 = vmatprep.subr.mxu0 0.0
      %5122 = vmatpush1.msra.mxu0 0.0
      %5123 = vmatprep.subr.mxu0 0.0
      %5124 = vmatpush1.msra.mxu0 0.0
      %5125 = vmatprep.mubr.f32.mxu0 0.0
      %v5126 = vand.u32 %v280, 4294901760
      %5127 = vmatmul.mubr.f32.gmra.mrb[0].mxu0 %v5126
      %v5128 = vpop.f32.mrb[0].mxu0
      %v5129 = vadd.f32 %v5032, %v5128
      %v5130 = vpop.f32.mrb[0].mxu0
      %5131 = vmatprep.mubr.f32.mxu0 0.0
      %v5132 = vand.u32 %v283, 4294901760
      %5133 = vmatmul.mubr.f32.gmra.mrb[0].mxu0 %v5132
      %v5134 = vpop.f32.mrb[0].mxu0
      %v5135 = vadd.f32 %v5038, %v5134
      %v5136 = vpop.f32.mrb[0].mxu0
      %5137 = vmatprep.mubr.f32.mxu0 0.0
      %v5138 = vand.u32 %v286, 4294901760
      %5139 = vmatmul.mubr.f32.gmra.mrb[0].mxu0 %v5138
      %v5140 = vpop.f32.mrb[0].mxu0
      %v5141 = vadd.f32 %v5044, %v5140
      %v5142 = vpop.f32.mrb[0].mxu0
      %5143 = vmatprep.mubr.f32.mxu0 0.0
      %v5144 = vand.u32 %v289, 4294901760
      %5145 = vmatmul.mubr.f32.gmra.mrb[0].mxu0 %v5144
      %v5146 = vpop.f32.mrb[0].mxu0
      %v5147 = vadd.f32 %v5050, %v5146
      %v5148 = vpop.f32.mrb[0].mxu0
      %5149 = vdwg.mxu0
      %s5150 = scalar_lea.vmem %s176, 192
      %5151 = vst.msk [vmem:[%s5150] sm:$0xff] %vm193, %v5129
      %5152 = vst.msk [vmem:[%s5150 + $0x8] sm:$0xff] %vm193, %v5135
      %5153 = vst.msk [vmem:[%s5150 + $0x10] sm:$0xff] %vm193, %v5141
      %5154 = vst.msk [vmem:[%s5150 + $0x18] sm:$0xff] %vm193, %v5147
      %v5155 = vlaneseq
      %v5156 = vshrl.u32 %v5155, 7
      %v5157 = vsub.s32 7, %v5156
      %v5158 = vrot.slane %v182, %v5157
      %vm5159 = vcmp.eq.s32.totalorder %v5158, %v242
      %vm5160 = vcmp.eq.s32.totalorder %v5158, %v243
      %vm5161 = vcmp.eq.s32.totalorder %v5158, %v244
      %vm5162 = vcmp.eq.s32.totalorder %v5158, %v245
      %vm5163 = vcmp.eq.s32.totalorder %v5158, %v246
      %vm5164 = vcmp.eq.s32.totalorder %v5158, %v247
      %vm5165 = vcmp.eq.s32.totalorder %v5158, %v248
      %vm5166 = vcmp.eq.s32.totalorder %v5158, %v249
      %v5167 = vsel %vm5159, 1, 0
      %v5168 = vsel %vm5160, 1, 0
      %v5169 = vsel %vm5161, 1, 0
      %v5170 = vsel %vm5162, 1, 0
      %v5171 = vsel %vm5163, 1, 0
      %v5172 = vsel %vm5164, 1, 0
      %v5173 = vsel %vm5165, 1, 0
      %v5174 = vsel %vm5166, 1, 0
      %v5175 = vcvt.s32.f32 %v5167
      %v5176 = vcvt.s32.f32 %v5168
      %v5177 = vcvt.s32.f32 %v5169
      %v5178 = vcvt.s32.f32 %v5170
      %v5179 = vcvt.s32.f32 %v5171
      %v5180 = vcvt.s32.f32 %v5172
      %v5181 = vcvt.s32.f32 %v5173
      %v5182 = vcvt.s32.f32 %v5174
      %5183 = vmatprep.subr.mxu0 0.0
      %v5184 = vand.u32 %v5175, 4294901760
      %5185 = vmatpush1.msra.mxu0 %v5184
      %5186 = vmatprep.subr.mxu0 0.0
      %v5187 = vand.u32 %v5176, 4294901760
      %5188 = vmatpush1.msra.mxu0 %v5187
      %5189 = vmatprep.subr.mxu0 0.0
      %v5190 = vand.u32 %v5177, 4294901760
      %5191 = vmatpush1.msra.mxu0 %v5190
      %5192 = vmatprep.subr.mxu0 0.0
      %v5193 = vand.u32 %v5178, 4294901760
      %5194 = vmatpush1.msra.mxu0 %v5193
      %5195 = vmatprep.subr.mxu0 0.0
      %v5196 = vand.u32 %v5179, 4294901760
      %5197 = vmatpush1.msra.mxu0 %v5196
      %5198 = vmatprep.subr.mxu0 0.0
      %v5199 = vand.u32 %v5180, 4294901760
      %5200 = vmatpush1.msra.mxu0 %v5199
      %5201 = vmatprep.subr.mxu0 0.0
      %v5202 = vand.u32 %v5181, 4294901760
      %5203 = vmatpush1.msra.mxu0 %v5202
      %5204 = vmatprep.subr.mxu0 0.0
      %v5205 = vand.u32 %v5182, 4294901760
      %5206 = vmatpush1.msra.mxu0 %v5205
      %5207 = vmatprep.subr.mxu0 0.0
      %5208 = vmatpush1.msra.mxu0 0.0
      %5209 = vmatprep.subr.mxu0 0.0
      %5210 = vmatpush1.msra.mxu0 0.0
      %5211 = vmatprep.subr.mxu0 0.0
      %5212 = vmatpush1.msra.mxu0 0.0
      %5213 = vmatprep.subr.mxu0 0.0
      %5214 = vmatpush1.msra.mxu0 0.0
      %5215 = vmatprep.subr.mxu0 0.0
      %5216 = vmatpush1.msra.mxu0 0.0
      %5217 = vmatprep.subr.mxu0 0.0
      %5218 = vmatpush1.msra.mxu0 0.0
      %5219 = vmatprep.subr.mxu0 0.0
      %5220 = vmatpush1.msra.mxu0 0.0
      %5221 = vmatprep.subr.mxu0 0.0
      %5222 = vmatpush1.msra.mxu0 0.0
      %5223 = vmatprep.subr.mxu0 0.0
      %5224 = vmatpush1.msra.mxu0 0.0
      %5225 = vmatprep.subr.mxu0 0.0
      %5226 = vmatpush1.msra.mxu0 0.0
      %5227 = vmatprep.subr.mxu0 0.0
      %5228 = vmatpush1.msra.mxu0 0.0
      %5229 = vmatprep.subr.mxu0 0.0
      %5230 = vmatpush1.msra.mxu0 0.0
      %5231 = vmatprep.subr.mxu0 0.0
      %5232 = vmatpush1.msra.mxu0 0.0
      %5233 = vmatprep.subr.mxu0 0.0
      %5234 = vmatpush1.msra.mxu0 0.0
      %5235 = vmatprep.subr.mxu0 0.0
      %5236 = vmatpush1.msra.mxu0 0.0
      %5237 = vmatprep.subr.mxu0 0.0
      %5238 = vmatpush1.msra.mxu0 0.0
      %5239 = vmatprep.subr.mxu0 0.0
      %5240 = vmatpush1.msra.mxu0 0.0
      %5241 = vmatprep.subr.mxu0 0.0
      %5242 = vmatpush1.msra.mxu0 0.0
      %5243 = vmatprep.subr.mxu0 0.0
      %5244 = vmatpush1.msra.mxu0 0.0
      %5245 = vmatprep.subr.mxu0 0.0
      %5246 = vmatpush1.msra.mxu0 0.0
      %5247 = vmatprep.subr.mxu0 0.0
      %5248 = vmatpush1.msra.mxu0 0.0
      %5249 = vmatprep.subr.mxu0 0.0
      %5250 = vmatpush1.msra.mxu0 0.0
      %5251 = vmatprep.subr.mxu0 0.0
      %5252 = vmatpush1.msra.mxu0 0.0
      %5253 = vmatprep.subr.mxu0 0.0
      %5254 = vmatpush1.msra.mxu0 0.0
      %5255 = vmatprep.mubr.f32.mxu0 0.0
      %v5256 = vand.u32 %v280, 4294901760
      %v5257 = vsub.f32 %v280, %v5256
      %v5258 = vand.u32 %v5257, 4294901760
      %v5259 = vsub.f32 %v5257, %v5258
      %v5260 = vand.u32 %v5259, 4294901760
      %5261 = vmatmul.mubr.f32.gmra.mrb[0].mxu0 %v5260
      %v5262 = vpop.f32.mrb[0].mxu0
      %v5263 = vadd.f32 0.0, %v5262
      %v5264 = vpop.f32.mrb[0].mxu0
      %5265 = vmatprep.mubr.f32.mxu0 0.0
      %v5266 = vand.u32 %v283, 4294901760
      %v5267 = vsub.f32 %v283, %v5266
      %v5268 = vand.u32 %v5267, 4294901760
      %v5269 = vsub.f32 %v5267, %v5268
      %v5270 = vand.u32 %v5269, 4294901760
      %5271 = vmatmul.mubr.f32.gmra.mrb[0].mxu0 %v5270
      %v5272 = vpop.f32.mrb[0].mxu0
      %v5273 = vadd.f32 0.0, %v5272
      %v5274 = vpop.f32.mrb[0].mxu0
      %5275 = vmatprep.mubr.f32.mxu0 0.0
      %v5276 = vand.u32 %v286, 4294901760
      %v5277 = vsub.f32 %v286, %v5276
      %v5278 = vand.u32 %v5277, 4294901760
      %v5279 = vsub.f32 %v5277, %v5278
      %v5280 = vand.u32 %v5279, 4294901760
      %5281 = vmatmul.mubr.f32.gmra.mrb[0].mxu0 %v5280
      %v5282 = vpop.f32.mrb[0].mxu0
      %v5283 = vadd.f32 0.0, %v5282
      %v5284 = vpop.f32.mrb[0].mxu0
      %5285 = vmatprep.mubr.f32.mxu0 0.0
      %v5286 = vand.u32 %v289, 4294901760
      %v5287 = vsub.f32 %v289, %v5286
      %v5288 = vand.u32 %v5287, 4294901760
      %v5289 = vsub.f32 %v5287, %v5288
      %v5290 = vand.u32 %v5289, 4294901760
      %5291 = vmatmul.mubr.f32.gmra.mrb[0].mxu0 %v5290
      %v5292 = vpop.f32.mrb[0].mxu0
      %v5293 = vadd.f32 0.0, %v5292
      %v5294 = vpop.f32.mrb[0].mxu0
      %5295 = vdwg.mxu0
      %5296 = vmatprep.subr.mxu0 0.0
      %v5297 = vand.u32 %v5175, 4294901760
      %v5298 = vsub.f32 %v5175, %v5297
      %v5299 = vand.u32 %v5298, 4294901760
      %v5300 = vsub.f32 %v5298, %v5299
      %v5301 = vand.u32 %v5300, 4294901760
      %5302 = vmatpush1.msra.mxu0 %v5301
      %5303 = vmatprep.subr.mxu0 0.0
      %v5304 = vand.u32 %v5176, 4294901760
      %v5305 = vsub.f32 %v5176, %v5304
      %v5306 = vand.u32 %v5305, 4294901760
      %v5307 = vsub.f32 %v5305, %v5306
      %v5308 = vand.u32 %v5307, 4294901760
      %5309 = vmatpush1.msra.mxu0 %v5308
      %5310 = vmatprep.subr.mxu0 0.0
      %v5311 = vand.u32 %v5177, 4294901760
      %v5312 = vsub.f32 %v5177, %v5311
      %v5313 = vand.u32 %v5312, 4294901760
      %v5314 = vsub.f32 %v5312, %v5313
      %v5315 = vand.u32 %v5314, 4294901760
      %5316 = vmatpush1.msra.mxu0 %v5315
      %5317 = vmatprep.subr.mxu0 0.0
      %v5318 = vand.u32 %v5178, 4294901760
      %v5319 = vsub.f32 %v5178, %v5318
      %v5320 = vand.u32 %v5319, 4294901760
      %v5321 = vsub.f32 %v5319, %v5320
      %v5322 = vand.u32 %v5321, 4294901760
      %5323 = vmatpush1.msra.mxu0 %v5322
      %5324 = vmatprep.subr.mxu0 0.0
      %v5325 = vand.u32 %v5179, 4294901760
      %v5326 = vsub.f32 %v5179, %v5325
      %v5327 = vand.u32 %v5326, 4294901760
      %v5328 = vsub.f32 %v5326, %v5327
      %v5329 = vand.u32 %v5328, 4294901760
      %5330 = vmatpush1.msra.mxu0 %v5329
      %5331 = vmatprep.subr.mxu0 0.0
      %v5332 = vand.u32 %v5180, 4294901760
      %v5333 = vsub.f32 %v5180, %v5332
      %v5334 = vand.u32 %v5333, 4294901760
      %v5335 = vsub.f32 %v5333, %v5334
      %v5336 = vand.u32 %v5335, 4294901760
      %5337 = vmatpush1.msra.mxu0 %v5336
      %5338 = vmatprep.subr.mxu0 0.0
      %v5339 = vand.u32 %v5181, 4294901760
      %v5340 = vsub.f32 %v5181, %v5339
      %v5341 = vand.u32 %v5340, 4294901760
      %v5342 = vsub.f32 %v5340, %v5341
      %v5343 = vand.u32 %v5342, 4294901760
      %5344 = vmatpush1.msra.mxu0 %v5343
      %5345 = vmatprep.subr.mxu0 0.0
      %v5346 = vand.u32 %v5182, 4294901760
      %v5347 = vsub.f32 %v5182, %v5346
      %v5348 = vand.u32 %v5347, 4294901760
      %v5349 = vsub.f32 %v5347, %v5348
      %v5350 = vand.u32 %v5349, 4294901760
      %5351 = vmatpush1.msra.mxu0 %v5350
      %5352 = vmatprep.subr.mxu0 0.0
      %5353 = vmatpush1.msra.mxu0 0.0
      %5354 = vmatprep.subr.mxu0 0.0
      %5355 = vmatpush1.msra.mxu0 0.0
      %5356 = vmatprep.subr.mxu0 0.0
      %5357 = vmatpush1.msra.mxu0 0.0
      %5358 = vmatprep.subr.mxu0 0.0
      %5359 = vmatpush1.msra.mxu0 0.0
      %5360 = vmatprep.subr.mxu0 0.0
      %5361 = vmatpush1.msra.mxu0 0.0
      %5362 = vmatprep.subr.mxu0 0.0
      %5363 = vmatpush1.msra.mxu0 0.0
      %5364 = vmatprep.subr.mxu0 0.0
      %5365 = vmatpush1.msra.mxu0 0.0
      %5366 = vmatprep.subr.mxu0 0.0
      %5367 = vmatpush1.msra.mxu0 0.0
      %5368 = vmatprep.subr.mxu0 0.0
      %5369 = vmatpush1.msra.mxu0 0.0
      %5370 = vmatprep.subr.mxu0 0.0
      %5371 = vmatpush1.msra.mxu0 0.0
      %5372 = vmatprep.subr.mxu0 0.0
      %5373 = vmatpush1.msra.mxu0 0.0
      %5374 = vmatprep.subr.mxu0 0.0
      %5375 = vmatpush1.msra.mxu0 0.0
      %5376 = vmatprep.subr.mxu0 0.0
      %5377 = vmatpush1.msra.mxu0 0.0
      %5378 = vmatprep.subr.mxu0 0.0
      %5379 = vmatpush1.msra.mxu0 0.0
      %5380 = vmatprep.subr.mxu0 0.0
      %5381 = vmatpush1.msra.mxu0 0.0
      %5382 = vmatprep.subr.mxu0 0.0
      %5383 = vmatpush1.msra.mxu0 0.0
      %5384 = vmatprep.subr.mxu0 0.0
      %5385 = vmatpush1.msra.mxu0 0.0
      %5386 = vmatprep.subr.mxu0 0.0
      %5387 = vmatpush1.msra.mxu0 0.0
      %5388 = vmatprep.subr.mxu0 0.0
      %5389 = vmatpush1.msra.mxu0 0.0
      %5390 = vmatprep.subr.mxu0 0.0
      %5391 = vmatpush1.msra.mxu0 0.0
      %5392 = vmatprep.subr.mxu0 0.0
      %5393 = vmatpush1.msra.mxu0 0.0
      %5394 = vmatprep.subr.mxu0 0.0
      %5395 = vmatpush1.msra.mxu0 0.0
      %5396 = vmatprep.subr.mxu0 0.0
      %5397 = vmatpush1.msra.mxu0 0.0
      %5398 = vmatprep.subr.mxu0 0.0
      %5399 = vmatpush1.msra.mxu0 0.0
      %5400 = vmatprep.mubr.f32.mxu0 0.0
      %v5401 = vand.u32 %v280, 4294901760
      %5402 = vmatmul.mubr.f32.gmra.mrb[0].mxu0 %v5401
      %v5403 = vpop.f32.mrb[0].mxu0
      %v5404 = vadd.f32 %v5263, %v5403
      %v5405 = vpop.f32.mrb[0].mxu0
      %5406 = vmatprep.mubr.f32.mxu0 0.0
      %v5407 = vand.u32 %v283, 4294901760
      %5408 = vmatmul.mubr.f32.gmra.mrb[0].mxu0 %v5407
      %v5409 = vpop.f32.mrb[0].mxu0
      %v5410 = vadd.f32 %v5273, %v5409
      %v5411 = vpop.f32.mrb[0].mxu0
      %5412 = vmatprep.mubr.f32.mxu0 0.0
      %v5413 = vand.u32 %v286, 4294901760
      %5414 = vmatmul.mubr.f32.gmra.mrb[0].mxu0 %v5413
      %v5415 = vpop.f32.mrb[0].mxu0
      %v5416 = vadd.f32 %v5283, %v5415
      %v5417 = vpop.f32.mrb[0].mxu0
      %5418 = vmatprep.mubr.f32.mxu0 0.0
      %v5419 = vand.u32 %v289, 4294901760
      %5420 = vmatmul.mubr.f32.gmra.mrb[0].mxu0 %v5419
      %v5421 = vpop.f32.mrb[0].mxu0
      %v5422 = vadd.f32 %v5293, %v5421
      %v5423 = vpop.f32.mrb[0].mxu0
      %5424 = vdwg.mxu0
      %5425 = vmatprep.subr.mxu0 0.0
      %v5426 = vand.u32 %v5175, 4294901760
      %v5427 = vsub.f32 %v5175, %v5426
      %5428 = vmatpush1.msra.mxu0 %v5427
      %5429 = vmatprep.subr.mxu0 0.0
      %v5430 = vand.u32 %v5176, 4294901760
      %v5431 = vsub.f32 %v5176, %v5430
      %5432 = vmatpush1.msra.mxu0 %v5431
      %5433 = vmatprep.subr.mxu0 0.0
      %v5434 = vand.u32 %v5177, 4294901760
      %v5435 = vsub.f32 %v5177, %v5434
      %5436 = vmatpush1.msra.mxu0 %v5435
      %5437 = vmatprep.subr.mxu0 0.0
      %v5438 = vand.u32 %v5178, 4294901760
      %v5439 = vsub.f32 %v5178, %v5438
      %5440 = vmatpush1.msra.mxu0 %v5439
      %5441 = vmatprep.subr.mxu0 0.0
      %v5442 = vand.u32 %v5179, 4294901760
      %v5443 = vsub.f32 %v5179, %v5442
      %5444 = vmatpush1.msra.mxu0 %v5443
      %5445 = vmatprep.subr.mxu0 0.0
      %v5446 = vand.u32 %v5180, 4294901760
      %v5447 = vsub.f32 %v5180, %v5446
      %5448 = vmatpush1.msra.mxu0 %v5447
      %5449 = vmatprep.subr.mxu0 0.0
      %v5450 = vand.u32 %v5181, 4294901760
      %v5451 = vsub.f32 %v5181, %v5450
      %5452 = vmatpush1.msra.mxu0 %v5451
      %5453 = vmatprep.subr.mxu0 0.0
      %v5454 = vand.u32 %v5182, 4294901760
      %v5455 = vsub.f32 %v5182, %v5454
      %5456 = vmatpush1.msra.mxu0 %v5455
      %5457 = vmatprep.subr.mxu0 0.0
      %5458 = vmatpush1.msra.mxu0 0.0
      %5459 = vmatprep.subr.mxu0 0.0
      %5460 = vmatpush1.msra.mxu0 0.0
      %5461 = vmatprep.subr.mxu0 0.0
      %5462 = vmatpush1.msra.mxu0 0.0
      %5463 = vmatprep.subr.mxu0 0.0
      %5464 = vmatpush1.msra.mxu0 0.0
      %5465 = vmatprep.subr.mxu0 0.0
      %5466 = vmatpush1.msra.mxu0 0.0
      %5467 = vmatprep.subr.mxu0 0.0
      %5468 = vmatpush1.msra.mxu0 0.0
      %5469 = vmatprep.subr.mxu0 0.0
      %5470 = vmatpush1.msra.mxu0 0.0
      %5471 = vmatprep.subr.mxu0 0.0
      %5472 = vmatpush1.msra.mxu0 0.0
      %5473 = vmatprep.subr.mxu0 0.0
      %5474 = vmatpush1.msra.mxu0 0.0
      %5475 = vmatprep.subr.mxu0 0.0
      %5476 = vmatpush1.msra.mxu0 0.0
      %5477 = vmatprep.subr.mxu0 0.0
      %5478 = vmatpush1.msra.mxu0 0.0
      %5479 = vmatprep.subr.mxu0 0.0
      %5480 = vmatpush1.msra.mxu0 0.0
      %5481 = vmatprep.subr.mxu0 0.0
      %5482 = vmatpush1.msra.mxu0 0.0
      %5483 = vmatprep.subr.mxu0 0.0
      %5484 = vmatpush1.msra.mxu0 0.0
      %5485 = vmatprep.subr.mxu0 0.0
      %5486 = vmatpush1.msra.mxu0 0.0
      %5487 = vmatprep.subr.mxu0 0.0
      %5488 = vmatpush1.msra.mxu0 0.0
      %5489 = vmatprep.subr.mxu0 0.0
      %5490 = vmatpush1.msra.mxu0 0.0
      %5491 = vmatprep.subr.mxu0 0.0
      %5492 = vmatpush1.msra.mxu0 0.0
      %5493 = vmatprep.subr.mxu0 0.0
      %5494 = vmatpush1.msra.mxu0 0.0
      %5495 = vmatprep.subr.mxu0 0.0
      %5496 = vmatpush1.msra.mxu0 0.0
      %5497 = vmatprep.subr.mxu0 0.0
      %5498 = vmatpush1.msra.mxu0 0.0
      %5499 = vmatprep.subr.mxu0 0.0
      %5500 = vmatpush1.msra.mxu0 0.0
      %5501 = vmatprep.subr.mxu0 0.0
      %5502 = vmatpush1.msra.mxu0 0.0
      %5503 = vmatprep.subr.mxu0 0.0
      %5504 = vmatpush1.msra.mxu0 0.0
      %5505 = vmatprep.mubr.f32.mxu0 0.0
      %v5506 = vand.u32 %v280, 4294901760
      %v5507 = vsub.f32 %v280, %v5506
      %5508 = vmatmul.mubr.f32.gmra.mrb[0].mxu0 %v5507
      %v5509 = vpop.f32.mrb[0].mxu0
      %v5510 = vadd.f32 %v5404, %v5509
      %v5511 = vpop.f32.mrb[0].mxu0
      %5512 = vmatprep.mubr.f32.mxu0 0.0
      %v5513 = vand.u32 %v283, 4294901760
      %v5514 = vsub.f32 %v283, %v5513
      %5515 = vmatmul.mubr.f32.gmra.mrb[0].mxu0 %v5514
      %v5516 = vpop.f32.mrb[0].mxu0
      %v5517 = vadd.f32 %v5410, %v5516
      %v5518 = vpop.f32.mrb[0].mxu0
      %5519 = vmatprep.mubr.f32.mxu0 0.0
      %v5520 = vand.u32 %v286, 4294901760
      %v5521 = vsub.f32 %v286, %v5520
      %5522 = vmatmul.mubr.f32.gmra.mrb[0].mxu0 %v5521
      %v5523 = vpop.f32.mrb[0].mxu0
      %v5524 = vadd.f32 %v5416, %v5523
      %v5525 = vpop.f32.mrb[0].mxu0
      %5526 = vmatprep.mubr.f32.mxu0 0.0
      %v5527 = vand.u32 %v289, 4294901760
      %v5528 = vsub.f32 %v289, %v5527
      %5529 = vmatmul.mubr.f32.gmra.mrb[0].mxu0 %v5528
      %v5530 = vpop.f32.mrb[0].mxu0
      %v5531 = vadd.f32 %v5422, %v5530
      %v5532 = vpop.f32.mrb[0].mxu0
      %5533 = vdwg.mxu0
      %5534 = vmatprep.subr.mxu0 0.0
      %v5535 = vand.u32 %v5175, 4294901760
      %5536 = vmatpush1.msra.mxu0 %v5535
      %5537 = vmatprep.subr.mxu0 0.0
      %v5538 = vand.u32 %v5176, 4294901760
      %5539 = vmatpush1.msra.mxu0 %v5538
      %5540 = vmatprep.subr.mxu0 0.0
      %v5541 = vand.u32 %v5177, 4294901760
      %5542 = vmatpush1.msra.mxu0 %v5541
      %5543 = vmatprep.subr.mxu0 0.0
      %v5544 = vand.u32 %v5178, 4294901760
      %5545 = vmatpush1.msra.mxu0 %v5544
      %5546 = vmatprep.subr.mxu0 0.0
      %v5547 = vand.u32 %v5179, 4294901760
      %5548 = vmatpush1.msra.mxu0 %v5547
      %5549 = vmatprep.subr.mxu0 0.0
      %v5550 = vand.u32 %v5180, 4294901760
      %5551 = vmatpush1.msra.mxu0 %v5550
      %5552 = vmatprep.subr.mxu0 0.0
      %v5553 = vand.u32 %v5181, 4294901760
      %5554 = vmatpush1.msra.mxu0 %v5553
      %5555 = vmatprep.subr.mxu0 0.0
      %v5556 = vand.u32 %v5182, 4294901760
      %5557 = vmatpush1.msra.mxu0 %v5556
      %5558 = vmatprep.subr.mxu0 0.0
      %5559 = vmatpush1.msra.mxu0 0.0
      %5560 = vmatprep.subr.mxu0 0.0
      %5561 = vmatpush1.msra.mxu0 0.0
      %5562 = vmatprep.subr.mxu0 0.0
      %5563 = vmatpush1.msra.mxu0 0.0
      %5564 = vmatprep.subr.mxu0 0.0
      %5565 = vmatpush1.msra.mxu0 0.0
      %5566 = vmatprep.subr.mxu0 0.0
      %5567 = vmatpush1.msra.mxu0 0.0
      %5568 = vmatprep.subr.mxu0 0.0
      %5569 = vmatpush1.msra.mxu0 0.0
      %5570 = vmatprep.subr.mxu0 0.0
      %5571 = vmatpush1.msra.mxu0 0.0
      %5572 = vmatprep.subr.mxu0 0.0
      %5573 = vmatpush1.msra.mxu0 0.0
      %5574 = vmatprep.subr.mxu0 0.0
      %5575 = vmatpush1.msra.mxu0 0.0
      %5576 = vmatprep.subr.mxu0 0.0
      %5577 = vmatpush1.msra.mxu0 0.0
      %5578 = vmatprep.subr.mxu0 0.0
      %5579 = vmatpush1.msra.mxu0 0.0
      %5580 = vmatprep.subr.mxu0 0.0
      %5581 = vmatpush1.msra.mxu0 0.0
      %5582 = vmatprep.subr.mxu0 0.0
      %5583 = vmatpush1.msra.mxu0 0.0
      %5584 = vmatprep.subr.mxu0 0.0
      %5585 = vmatpush1.msra.mxu0 0.0
      %5586 = vmatprep.subr.mxu0 0.0
      %5587 = vmatpush1.msra.mxu0 0.0
      %5588 = vmatprep.subr.mxu0 0.0
      %5589 = vmatpush1.msra.mxu0 0.0
      %5590 = vmatprep.subr.mxu0 0.0
      %5591 = vmatpush1.msra.mxu0 0.0
      %5592 = vmatprep.subr.mxu0 0.0
      %5593 = vmatpush1.msra.mxu0 0.0
      %5594 = vmatprep.subr.mxu0 0.0
      %5595 = vmatpush1.msra.mxu0 0.0
      %5596 = vmatprep.subr.mxu0 0.0
      %5597 = vmatpush1.msra.mxu0 0.0
      %5598 = vmatprep.subr.mxu0 0.0
      %5599 = vmatpush1.msra.mxu0 0.0
      %5600 = vmatprep.subr.mxu0 0.0
      %5601 = vmatpush1.msra.mxu0 0.0
      %5602 = vmatprep.subr.mxu0 0.0
      %5603 = vmatpush1.msra.mxu0 0.0
      %5604 = vmatprep.subr.mxu0 0.0
      %5605 = vmatpush1.msra.mxu0 0.0
      %5606 = vmatprep.mubr.f32.mxu0 0.0
      %v5607 = vand.u32 %v280, 4294901760
      %v5608 = vsub.f32 %v280, %v5607
      %v5609 = vand.u32 %v5608, 4294901760
      %5610 = vmatmul.mubr.f32.gmra.mrb[0].mxu0 %v5609
      %v5611 = vpop.f32.mrb[0].mxu0
      %v5612 = vadd.f32 %v5510, %v5611
      %v5613 = vpop.f32.mrb[0].mxu0
      %5614 = vmatprep.mubr.f32.mxu0 0.0
      %v5615 = vand.u32 %v283, 4294901760
      %v5616 = vsub.f32 %v283, %v5615
      %v5617 = vand.u32 %v5616, 4294901760
      %5618 = vmatmul.mubr.f32.gmra.mrb[0].mxu0 %v5617
      %v5619 = vpop.f32.mrb[0].mxu0
      %v5620 = vadd.f32 %v5517, %v5619
      %v5621 = vpop.f32.mrb[0].mxu0
      %5622 = vmatprep.mubr.f32.mxu0 0.0
      %v5623 = vand.u32 %v286, 4294901760
      %v5624 = vsub.f32 %v286, %v5623
      %v5625 = vand.u32 %v5624, 4294901760
      %5626 = vmatmul.mubr.f32.gmra.mrb[0].mxu0 %v5625
      %v5627 = vpop.f32.mrb[0].mxu0
      %v5628 = vadd.f32 %v5524, %v5627
      %v5629 = vpop.f32.mrb[0].mxu0
      %5630 = vmatprep.mubr.f32.mxu0 0.0
      %v5631 = vand.u32 %v289, 4294901760
      %v5632 = vsub.f32 %v289, %v5631
      %v5633 = vand.u32 %v5632, 4294901760
      %5634 = vmatmul.mubr.f32.gmra.mrb[0].mxu0 %v5633
      %v5635 = vpop.f32.mrb[0].mxu0
      %v5636 = vadd.f32 %v5531, %v5635
      %v5637 = vpop.f32.mrb[0].mxu0
      %5638 = vdwg.mxu0
      %5639 = vmatprep.subr.mxu0 0.0
      %v5640 = vand.u32 %v5175, 4294901760
      %v5641 = vsub.f32 %v5175, %v5640
      %v5642 = vand.u32 %v5641, 4294901760
      %5643 = vmatpush1.msra.mxu0 %v5642
      %5644 = vmatprep.subr.mxu0 0.0
      %v5645 = vand.u32 %v5176, 4294901760
      %v5646 = vsub.f32 %v5176, %v5645
      %v5647 = vand.u32 %v5646, 4294901760
      %5648 = vmatpush1.msra.mxu0 %v5647
      %5649 = vmatprep.subr.mxu0 0.0
      %v5650 = vand.u32 %v5177, 4294901760
      %v5651 = vsub.f32 %v5177, %v5650
      %v5652 = vand.u32 %v5651, 4294901760
      %5653 = vmatpush1.msra.mxu0 %v5652
      %5654 = vmatprep.subr.mxu0 0.0
      %v5655 = vand.u32 %v5178, 4294901760
      %v5656 = vsub.f32 %v5178, %v5655
      %v5657 = vand.u32 %v5656, 4294901760
      %5658 = vmatpush1.msra.mxu0 %v5657
      %5659 = vmatprep.subr.mxu0 0.0
      %v5660 = vand.u32 %v5179, 4294901760
      %v5661 = vsub.f32 %v5179, %v5660
      %v5662 = vand.u32 %v5661, 4294901760
      %5663 = vmatpush1.msra.mxu0 %v5662
      %5664 = vmatprep.subr.mxu0 0.0
      %v5665 = vand.u32 %v5180, 4294901760
      %v5666 = vsub.f32 %v5180, %v5665
      %v5667 = vand.u32 %v5666, 4294901760
      %5668 = vmatpush1.msra.mxu0 %v5667
      %5669 = vmatprep.subr.mxu0 0.0
      %v5670 = vand.u32 %v5181, 4294901760
      %v5671 = vsub.f32 %v5181, %v5670
      %v5672 = vand.u32 %v5671, 4294901760
      %5673 = vmatpush1.msra.mxu0 %v5672
      %5674 = vmatprep.subr.mxu0 0.0
      %v5675 = vand.u32 %v5182, 4294901760
      %v5676 = vsub.f32 %v5182, %v5675
      %v5677 = vand.u32 %v5676, 4294901760
      %5678 = vmatpush1.msra.mxu0 %v5677
      %5679 = vmatprep.subr.mxu0 0.0
      %5680 = vmatpush1.msra.mxu0 0.0
      %5681 = vmatprep.subr.mxu0 0.0
      %5682 = vmatpush1.msra.mxu0 0.0
      %5683 = vmatprep.subr.mxu0 0.0
      %5684 = vmatpush1.msra.mxu0 0.0
      %5685 = vmatprep.subr.mxu0 0.0
      %5686 = vmatpush1.msra.mxu0 0.0
      %5687 = vmatprep.subr.mxu0 0.0
      %5688 = vmatpush1.msra.mxu0 0.0
      %5689 = vmatprep.subr.mxu0 0.0
      %5690 = vmatpush1.msra.mxu0 0.0
      %5691 = vmatprep.subr.mxu0 0.0
      %5692 = vmatpush1.msra.mxu0 0.0
      %5693 = vmatprep.subr.mxu0 0.0
      %5694 = vmatpush1.msra.mxu0 0.0
      %5695 = vmatprep.subr.mxu0 0.0
      %5696 = vmatpush1.msra.mxu0 0.0
      %5697 = vmatprep.subr.mxu0 0.0
      %5698 = vmatpush1.msra.mxu0 0.0
      %5699 = vmatprep.subr.mxu0 0.0
      %5700 = vmatpush1.msra.mxu0 0.0
      %5701 = vmatprep.subr.mxu0 0.0
      %5702 = vmatpush1.msra.mxu0 0.0
      %5703 = vmatprep.subr.mxu0 0.0
      %5704 = vmatpush1.msra.mxu0 0.0
      %5705 = vmatprep.subr.mxu0 0.0
      %5706 = vmatpush1.msra.mxu0 0.0
      %5707 = vmatprep.subr.mxu0 0.0
      %5708 = vmatpush1.msra.mxu0 0.0
      %5709 = vmatprep.subr.mxu0 0.0
      %5710 = vmatpush1.msra.mxu0 0.0
      %5711 = vmatprep.subr.mxu0 0.0
      %5712 = vmatpush1.msra.mxu0 0.0
      %5713 = vmatprep.subr.mxu0 0.0
      %5714 = vmatpush1.msra.mxu0 0.0
      %5715 = vmatprep.subr.mxu0 0.0
      %5716 = vmatpush1.msra.mxu0 0.0
      %5717 = vmatprep.subr.mxu0 0.0
      %5718 = vmatpush1.msra.mxu0 0.0
      %5719 = vmatprep.subr.mxu0 0.0
      %5720 = vmatpush1.msra.mxu0 0.0
      %5721 = vmatprep.subr.mxu0 0.0
      %5722 = vmatpush1.msra.mxu0 0.0
      %5723 = vmatprep.subr.mxu0 0.0
      %5724 = vmatpush1.msra.mxu0 0.0
      %5725 = vmatprep.subr.mxu0 0.0
      %5726 = vmatpush1.msra.mxu0 0.0
      %5727 = vmatprep.mubr.f32.mxu0 0.0
      %v5728 = vand.u32 %v280, 4294901760
      %5729 = vmatmul.mubr.f32.gmra.mrb[0].mxu0 %v5728
      %v5730 = vpop.f32.mrb[0].mxu0
      %v5731 = vadd.f32 %v5612, %v5730
      %v5732 = vpop.f32.mrb[0].mxu0
      %5733 = vmatprep.mubr.f32.mxu0 0.0
      %v5734 = vand.u32 %v283, 4294901760
      %5735 = vmatmul.mubr.f32.gmra.mrb[0].mxu0 %v5734
      %v5736 = vpop.f32.mrb[0].mxu0
      %v5737 = vadd.f32 %v5620, %v5736
      %v5738 = vpop.f32.mrb[0].mxu0
      %5739 = vmatprep.mubr.f32.mxu0 0.0
      %v5740 = vand.u32 %v286, 4294901760
      %5741 = vmatmul.mubr.f32.gmra.mrb[0].mxu0 %v5740
      %v5742 = vpop.f32.mrb[0].mxu0
      %v5743 = vadd.f32 %v5628, %v5742
      %v5744 = vpop.f32.mrb[0].mxu0
      %5745 = vmatprep.mubr.f32.mxu0 0.0
      %v5746 = vand.u32 %v289, 4294901760
      %5747 = vmatmul.mubr.f32.gmra.mrb[0].mxu0 %v5746
      %v5748 = vpop.f32.mrb[0].mxu0
      %v5749 = vadd.f32 %v5636, %v5748
      %v5750 = vpop.f32.mrb[0].mxu0
      %5751 = vdwg.mxu0
      %5752 = vmatprep.subr.mxu0 0.0
      %v5753 = vand.u32 %v5175, 4294901760
      %5754 = vmatpush1.msra.mxu0 %v5753
      %5755 = vmatprep.subr.mxu0 0.0
      %v5756 = vand.u32 %v5176, 4294901760
      %5757 = vmatpush1.msra.mxu0 %v5756
      %5758 = vmatprep.subr.mxu0 0.0
      %v5759 = vand.u32 %v5177, 4294901760
      %5760 = vmatpush1.msra.mxu0 %v5759
      %5761 = vmatprep.subr.mxu0 0.0
      %v5762 = vand.u32 %v5178, 4294901760
      %5763 = vmatpush1.msra.mxu0 %v5762
      %5764 = vmatprep.subr.mxu0 0.0
      %v5765 = vand.u32 %v5179, 4294901760
      %5766 = vmatpush1.msra.mxu0 %v5765
      %5767 = vmatprep.subr.mxu0 0.0
      %v5768 = vand.u32 %v5180, 4294901760
      %5769 = vmatpush1.msra.mxu0 %v5768
      %5770 = vmatprep.subr.mxu0 0.0
      %v5771 = vand.u32 %v5181, 4294901760
      %5772 = vmatpush1.msra.mxu0 %v5771
      %5773 = vmatprep.subr.mxu0 0.0
      %v5774 = vand.u32 %v5182, 4294901760
      %5775 = vmatpush1.msra.mxu0 %v5774
      %5776 = vmatprep.subr.mxu0 0.0
      %5777 = vmatpush1.msra.mxu0 0.0
      %5778 = vmatprep.subr.mxu0 0.0
      %5779 = vmatpush1.msra.mxu0 0.0
      %5780 = vmatprep.subr.mxu0 0.0
      %5781 = vmatpush1.msra.mxu0 0.0
      %5782 = vmatprep.subr.mxu0 0.0
      %5783 = vmatpush1.msra.mxu0 0.0
      %5784 = vmatprep.subr.mxu0 0.0
      %5785 = vmatpush1.msra.mxu0 0.0
      %5786 = vmatprep.subr.mxu0 0.0
      %5787 = vmatpush1.msra.mxu0 0.0
      %5788 = vmatprep.subr.mxu0 0.0
      %5789 = vmatpush1.msra.mxu0 0.0
      %5790 = vmatprep.subr.mxu0 0.0
      %5791 = vmatpush1.msra.mxu0 0.0
      %5792 = vmatprep.subr.mxu0 0.0
      %5793 = vmatpush1.msra.mxu0 0.0
      %5794 = vmatprep.subr.mxu0 0.0
      %5795 = vmatpush1.msra.mxu0 0.0
      %5796 = vmatprep.subr.mxu0 0.0
      %5797 = vmatpush1.msra.mxu0 0.0
      %5798 = vmatprep.subr.mxu0 0.0
      %5799 = vmatpush1.msra.mxu0 0.0
      %5800 = vmatprep.subr.mxu0 0.0
      %5801 = vmatpush1.msra.mxu0 0.0
      %5802 = vmatprep.subr.mxu0 0.0
      %5803 = vmatpush1.msra.mxu0 0.0
      %5804 = vmatprep.subr.mxu0 0.0
      %5805 = vmatpush1.msra.mxu0 0.0
      %5806 = vmatprep.subr.mxu0 0.0
      %5807 = vmatpush1.msra.mxu0 0.0
      %5808 = vmatprep.subr.mxu0 0.0
      %5809 = vmatpush1.msra.mxu0 0.0
      %5810 = vmatprep.subr.mxu0 0.0
      %5811 = vmatpush1.msra.mxu0 0.0
      %5812 = vmatprep.subr.mxu0 0.0
      %5813 = vmatpush1.msra.mxu0 0.0
      %5814 = vmatprep.subr.mxu0 0.0
      %5815 = vmatpush1.msra.mxu0 0.0
      %5816 = vmatprep.subr.mxu0 0.0
      %5817 = vmatpush1.msra.mxu0 0.0
      %5818 = vmatprep.subr.mxu0 0.0
      %5819 = vmatpush1.msra.mxu0 0.0
      %5820 = vmatprep.subr.mxu0 0.0
      %5821 = vmatpush1.msra.mxu0 0.0
      %5822 = vmatprep.subr.mxu0 0.0
      %5823 = vmatpush1.msra.mxu0 0.0
      %5824 = vmatprep.mubr.f32.mxu0 0.0
      %v5825 = vand.u32 %v280, 4294901760
      %5826 = vmatmul.mubr.f32.gmra.mrb[0].mxu0 %v5825
      %v5827 = vpop.f32.mrb[0].mxu0
      %v5828 = vadd.f32 %v5731, %v5827
      %v5829 = vpop.f32.mrb[0].mxu0
      %5830 = vmatprep.mubr.f32.mxu0 0.0
      %v5831 = vand.u32 %v283, 4294901760
      %5832 = vmatmul.mubr.f32.gmra.mrb[0].mxu0 %v5831
      %v5833 = vpop.f32.mrb[0].mxu0
      %v5834 = vadd.f32 %v5737, %v5833
      %v5835 = vpop.f32.mrb[0].mxu0
      %5836 = vmatprep.mubr.f32.mxu0 0.0
      %v5837 = vand.u32 %v286, 4294901760
      %5838 = vmatmul.mubr.f32.gmra.mrb[0].mxu0 %v5837
      %v5839 = vpop.f32.mrb[0].mxu0
      %v5840 = vadd.f32 %v5743, %v5839
      %v5841 = vpop.f32.mrb[0].mxu0
      %5842 = vmatprep.mubr.f32.mxu0 0.0
      %v5843 = vand.u32 %v289, 4294901760
      %5844 = vmatmul.mubr.f32.gmra.mrb[0].mxu0 %v5843
      %v5845 = vpop.f32.mrb[0].mxu0
      %v5846 = vadd.f32 %v5749, %v5845
      %v5847 = vpop.f32.mrb[0].mxu0
      %5848 = vdwg.mxu0
      %s5849 = scalar_lea.vmem %s176, 224
      %5850 = vst.msk [vmem:[%s5849] sm:$0xff] %vm193, %v5828
      %5851 = vst.msk [vmem:[%s5849 + $0x8] sm:$0xff] %vm193, %v5834
      %5852 = vst.msk [vmem:[%s5849 + $0x10] sm:$0xff] %vm193, %v5840
      %5853 = vst.msk [vmem:[%s5849 + $0x18] sm:$0xff] %vm193, %v5846
      %s5854 = smul.u32 8, %s15
      %p5855 = scmp.lt.s32.totalorder %s5854, 15
      %s5856 = scalar_select %p5855, %s5854, 15
      %s5857 = smul.addr %s5856, 4
      %s5858 = smul.addr %s5857, 8
      %s5859 = scalar_lea.vmem %s2, %s5858
      %p5860 = scmp.lt.s32.totalorder %s15, 1
      %s5861 = scalar_select %p5860, %s15, 1
      %s5862 = smul.addr %s5861, 8
      %s5863 = scalar_lea.vmem %s3, %s5862
      // Predicated region
      $region29: #{tpu_custom_call.1} parent=27 // pred_check
        %p5864 = pneg %p80
      $region30: #{tpu_custom_call.1} parent=27 // pred_check_branch
        %5866 = sbr.rel (%p5864) target = $region32
      $region31: #{tpu_custom_call.1} parent=27 // pred_region
        %s5867 = smul.u32 8, %s15
      $region32: #{tpu_custom_call.1} parent=27 // pred_fallthru
        _
      // Predicated region
      $region33: #{tpu_custom_call.1} parent=27 // pred_check
        %p5868 = pneg %p106
      $region34: #{tpu_custom_call.1} parent=27 // pred_check_branch
        %5870 = sbr.rel (%p5868) target = $region36
      $region35: #{tpu_custom_call.1} parent=27 // pred_region
        _
      $region36: #{tpu_custom_call.1} parent=27 // pred_fallthru
        _
    $region28: #{tpu_custom_call.1} parent=5 // pred_fallthru
      _
    %p5871 = scmp.le.s32.totalorder 2, %s10
    // Predicated region
    $region37: #{tpu_custom_call.1} parent=5 // pred_check
      %p5872 = pneg %p5871
    $region38: #{tpu_custom_call.1} parent=5 // pred_check_branch
      %5874 = sbr.rel (%p5872) target = $region40
    $region39: #{tpu_custom_call.1} parent=5 // pred_region
      %s5875 = ssub.s32 %s10, 2
      // Predicated region
      $region41: #{tpu_custom_call.1} parent=39 // pred_check
        %p5876 = pneg %p86
      $region42: #{tpu_custom_call.1} parent=39 // pred_check_branch
        %5878 = sbr.rel (%p5876) target = $region44
      $region43: #{tpu_custom_call.1} parent=39 // pred_region
        %s5879 = smul.u32 8, %s16
        %p5880 = scmp.lt.s32.totalorder %s5879, 15
        %s5881 = scalar_select %p5880, %s5879, 15
        %s5882 = smul.addr %s5881, 4
        %s5883 = smul.addr %s5882, 8
        %s5884 = scalar_lea.vmem %s2, %s5883
      $region44: #{tpu_custom_call.1} parent=39 // pred_fallthru
        _
      // Predicated region
      $region45: #{tpu_custom_call.1} parent=39 // pred_check
        %p5885 = pneg %p112
      $region46: #{tpu_custom_call.1} parent=39 // pred_check_branch
        %5887 = sbr.rel (%p5885) target = $region48
      $region47: #{tpu_custom_call.1} parent=39 // pred_region
        %p5888 = scmp.lt.s32.totalorder %s16, 1
        %s5889 = scalar_select %p5888, %s16, 1
        %s5890 = smul.addr %s5889, 8
        %s5891 = scalar_lea.vmem %s3, %s5890
      $region48: #{tpu_custom_call.1} parent=39 // pred_fallthru
        _
    $region40: #{tpu_custom_call.1} parent=5 // pred_fallthru
      _
  $region6: #{tpu_custom_call.1} parent=0 // loop_footer
    %s14 = sadd.s32 1, %s10
  $region7: #{tpu_custom_call.1} parent=0 // loop_footer_branch
    %9 = sbr.rel target = $region3
  $region8: #{tpu_custom_call.1} parent=0 // loop_exit
    _

</llo_original>
